<compile_context>
chip_gen: v6e
topology: v6e:2x2x1
jax: 0.10.0
libtpu: 0.0.40
codegen_flags: <defaults>
</compile_context>

<pallas_src>
import functools

import jax
import jax.numpy as jnp
from jax.experimental import pallas as pl
from jax.experimental.pallas import tpu as pltpu


# --------------------------- Pallas kernel -----------------------------------

def lstm_predictor_kernel(x_ref,                      # (T*B, F) time-major rows
                          wih0_ref, whh0_ref, b0_ref,  # (F,4H), (H,4H), (1,4H)
                          w1_ref, b1_ref,              # (2H,4H), (1,4H)  fused [Wih1; Whh1]
                          w2_ref, b2_ref,              # (2H,4H), (1,4H)  fused [Wih2; Whh2]
                          wlin_ref, blin_ref,          # (H,C), (1,C)
                          out_ref,                     # (B, C)
                          *, seq_len, batch):
    T, B = seq_len, batch
    H = whh0_ref.shape[0]
    G = 4 * H

    # --- hoisted layer-0 input projection for ALL timesteps (bias folded in) ---
    # One (T*B, F) @ (F, 4H) matmul instead of T tiny matmuls on the serial chain.
    xproj = (jnp.dot(x_ref[...], wih0_ref[...], preferred_element_type=jnp.float32)
             + b0_ref[...])                                        # (T*B, 4H)

    # Load weights once; hoist bias broadcasts out of the loop (JAX does not CSE
    # broadcast_in_dim, so doing this per-step would re-emit it every iteration).
    whh0 = whh0_ref[...]                                           # (H, 4H)
    w1 = w1_ref[...]                                               # (2H, 4H)
    w2 = w2_ref[...]                                               # (2H, 4H)
    b1b = jnp.broadcast_to(b1_ref[...], (B, G))
    b2b = jnp.broadcast_to(b2_ref[...], (B, G))

    # Lane mask selecting the "g" gate (lanes [2H, 3H)) — lets us activate the
    # whole (B, 4H) gate vreg with 2 EUP passes (sigmoid + tanh) + 1 select.
    lane = jax.lax.broadcasted_iota(jnp.int32, (B, G), dimension=1)
    g_mask = (lane >= 2 * H) & (lane < 3 * H)

    def act_update(gates, c):
        # PyTorch gate order: i, f, g, o along the lane axis.
        sig = jax.nn.sigmoid(gates)
        th = jnp.tanh(gates)
        act = jnp.where(g_mask, th, sig)
        i = act[:, 0 * H:1 * H]
        f = act[:, 1 * H:2 * H]
        g = act[:, 2 * H:3 * H]
        o = act[:, 3 * H:4 * H]
        c_new = f * c + i * g
        h_new = o * jnp.tanh(c_new)
        return h_new, c_new

    zeros = jnp.zeros((B, H), jnp.float32)
    h0 = c0 = h1 = c1 = h2 = c2 = zeros

    # T is small and static: fully unrolled at trace time (same effect as
    # lax.fori_loop(..., unroll=True)); all slices below are static.
    for t in range(T):
        # layer 0: input projection precomputed above (includes b0)
        g0 = (xproj[t * B:(t + 1) * B, :]
              + jnp.dot(h0, whh0, preferred_element_type=jnp.float32))
        h0, c0 = act_update(g0, c0)
        # layer 1: fused [inp | h] @ [Wih; Whh] — one MXU round-trip per cell
        g1 = (jnp.dot(jnp.concatenate([h0, h1], axis=-1), w1,
                      preferred_element_type=jnp.float32) + b1b)
        h1, c1 = act_update(g1, c1)
        # layer 2
        g2 = (jnp.dot(jnp.concatenate([h1, h2], axis=-1), w2,
                      preferred_element_type=jnp.float32) + b2b)
        h2, c2 = act_update(g2, c2)

    # out = Linear(ReLU(hn[-1]))
    out = (jnp.dot(jax.nn.relu(h2), wlin_ref[...],
                   preferred_element_type=jnp.float32) + blin_ref[...])
    out_ref[...] = out.astype(out_ref.dtype)


# ------------------------------ wrapper ---------------------------------------

def lstm_predictor_forward(x_btf, params):
    """x_btf: (B, T, F) float32 (PyTorch batch_first layout)."""
    B, T, F = x_btf.shape
    n_classes = params["wlin"].shape[1]

    # Time-major flattening so the kernel can do one big layer-0 projection:
    # row r = t*B + b.
    x_2d = jnp.transpose(x_btf, (1, 0, 2)).reshape(T * B, F)

    # Fuse W_ih / W_hh for layers 1 and 2 (single matmul per cell in-kernel).
    w1 = jnp.concatenate([params["wih1"], params["whh1"]], axis=0)   # (2H, 4H)
    w2 = jnp.concatenate([params["wih2"], params["whh2"]], axis=0)   # (2H, 4H)

    flat_args = (
        x_2d,
        params["wih0"], params["whh0"], params["b0"],
        w1, params["b1"],
        w2, params["b2"],
        params["wlin"], params["blin"],
    )
    vmem = pl.BlockSpec(memory_space=pltpu.MemorySpace.VMEM)
    kernel = functools.partial(lstm_predictor_kernel, seq_len=T, batch=B)
    # NOTE: everything is kept resident in VMEM (~50 KB at these shapes). For
    # long sequences, give x a BlockSpec over T and carry h/c in VMEM scratch,
    # budgeting against 64 MiB on v7x / 128 MiB on v5e/v6e.
    return pl.pallas_call(
        kernel,
        out_shape=jax.ShapeDtypeStruct((B, n_classes), jnp.float32),
        in_specs=[vmem] * len(flat_args),
        out_specs=vmem,
    )(*flat_args)


# ------------------------- deterministic params -------------------------------

def init_params(key, n_features, n_hidden, n_classes):
    """Deterministic uniform(-1/sqrt(H), 1/sqrt(H)) init, PyTorch-like shapes,
    pre-transposed for the kernel; b = b_ih + b_hh folded into one vector."""
    k = 1.0 / jnp.sqrt(jnp.float32(n_hidden))
    keys = jax.random.split(key, 16)
    u = lambda kk, shape: jax.random.uniform(kk, shape, jnp.float32, -k, k)

    params = {}
    in_dims = [n_features, n_hidden, n_hidden]
    for l in range(3):
        params[f"wih{l}"] = u(keys[4 * l + 0], (in_dims[l], 4 * n_hidden))   # (D_in, 4H)
        params[f"whh{l}"] = u(keys[4 * l + 1], (n_hidden, 4 * n_hidden))     # (H, 4H)
        b_ih = u(keys[4 * l + 2], (1, 4 * n_hidden))
        b_hh = u(keys[4 * l + 3], (1, 4 * n_hidden))
        params[f"b{l}"] = b_ih + b_hh                                        # (1, 4H)
    params["wlin"] = u(keys[12], (n_hidden, n_classes))                      # (H, C)
    params["blin"] = u(keys[13], (1, n_classes))                             # (1, C)
    return params


# ----------------------------- pure-JAX reference -----------------------------

def reference_forward(x_btf, params, n_hidden):
    B, T, F = x_btf.shape
    H = n_hidden

    def cell(xt, h, c, wih, whh, b):
        gates = xt @ wih + h @ whh + b
        i = jax.nn.sigmoid(gates[:, 0 * H:1 * H])
        f = jax.nn.sigmoid(gates[:, 1 * H:2 * H])
        g = jnp.tanh(gates[:, 2 * H:3 * H])
        o = jax.nn.sigmoid(gates[:, 3 * H:4 * H])
        c = f * c + i * g
        h = o * jnp.tanh(c)
        return h, c

    h = [jnp.zeros((B, H), jnp.float32) for _ in range(3)]
    c = [jnp.zeros((B, H), jnp.float32) for _ in range(3)]
    for t in range(T):
        inp = x_btf[:, t, :]
        for l in range(3):
            h[l], c[l] = cell(inp, h[l], c[l],
                              params[f"wih{l}"], params[f"whh{l}"], params[f"b{l}"])
            inp = h[l]
    return jax.nn.relu(h[2]) @ params["wlin"] + params["blin"]


# --------------------------------- main ----------------------------------------

if __name__ == "__main__":
    # Small shapes consistent with the module: batch=2, seq=8, n_features=4,
    # n_hidden=32 (so 4H = 128 lanes), n_layers=3, n_classes=1.
    B, T, F, H, C = 2, 8, 4, 32, 1

    key = jax.random.PRNGKey(0)
    kx, kp = jax.random.split(key)
    x = jax.random.normal(kx, (B, T, F), jnp.float32)
    params = init_params(kp, F, H, C)

    out = lstm_predictor_forward(x, params)
    out = jax.block_until_ready(out)
    assert out.shape == (B, C), out.shape

    ref = reference_forward(x, params, H)
    assert jnp.allclose(out, ref, atol=1e-4, rtol=1e-4), (out, ref)

    print("KERNEL_OK")
</pallas_src>

<mosaic_0001>
module attributes {stable_mosaic.version = 11 : i64} {
  func.func @lstm_predictor_kernel(%arg0: memref<16x4xf32, #tpu.memory_space<vmem>>, %arg1: memref<4x128xf32, #tpu.memory_space<vmem>>, %arg2: memref<32x128xf32, #tpu.memory_space<vmem>>, %arg3: memref<1x128xf32, #tpu.memory_space<vmem>>, %arg4: memref<64x128xf32, #tpu.memory_space<vmem>>, %arg5: memref<1x128xf32, #tpu.memory_space<vmem>>, %arg6: memref<64x128xf32, #tpu.memory_space<vmem>>, %arg7: memref<1x128xf32, #tpu.memory_space<vmem>>, %arg8: memref<32x1xf32, #tpu.memory_space<vmem>>, %arg9: memref<1x1xf32, #tpu.memory_space<vmem>>, %arg10: memref<2x1xf32, #tpu.memory_space<vmem>>) attributes {dimension_semantics = [], scalar_prefetch = 0 : i64, scratch_operands = 0 : i64, tpu.core_type = #tpu.core_type<tc>} {
    %c0 = arith.constant 0 : index
    %c0_0 = arith.constant 0 : index
    %0 = vector.load %arg0[%c0, %c0_0] : memref<16x4xf32, #tpu.memory_space<vmem>>, vector<16x4xf32>
    %c0_1 = arith.constant 0 : index
    %c0_2 = arith.constant 0 : index
    %1 = vector.load %arg1[%c0_1, %c0_2] : memref<4x128xf32, #tpu.memory_space<vmem>>, vector<4x128xf32>
    %cst = arith.constant dense<0.000000e+00> : vector<16x128xf32>
    %2 = tpu.matmul %0, %1, %cst {dimension_numbers = #tpu.dot_dimension_numbers<[1], [0], [0], [1], [0, 0, 1, 1], [], []>} : vector<16x4xf32>, vector<4x128xf32>, vector<16x128xf32> -> vector<16x128xf32>
    %c0_3 = arith.constant 0 : index
    %c0_4 = arith.constant 0 : index
    %3 = vector.load %arg3[%c0_3, %c0_4] : memref<1x128xf32, #tpu.memory_space<vmem>>, vector<1x128xf32>
    %4 = vector.broadcast %3 : vector<1x128xf32> to vector<16x128xf32>
    %5 = arith.addf %2, %4 : vector<16x128xf32>
    %c0_5 = arith.constant 0 : index
    %c0_6 = arith.constant 0 : index
    %6 = vector.load %arg2[%c0_5, %c0_6] : memref<32x128xf32, #tpu.memory_space<vmem>>, vector<32x128xf32>
    %c0_7 = arith.constant 0 : index
    %c0_8 = arith.constant 0 : index
    %7 = vector.load %arg4[%c0_7, %c0_8] : memref<64x128xf32, #tpu.memory_space<vmem>>, vector<64x128xf32>
    %c0_9 = arith.constant 0 : index
    %c0_10 = arith.constant 0 : index
    %8 = vector.load %arg6[%c0_9, %c0_10] : memref<64x128xf32, #tpu.memory_space<vmem>>, vector<64x128xf32>
    %c0_11 = arith.constant 0 : index
    %c0_12 = arith.constant 0 : index
    %9 = vector.load %arg5[%c0_11, %c0_12] : memref<1x128xf32, #tpu.memory_space<vmem>>, vector<1x128xf32>
    %10 = vector.shape_cast %9 : vector<1x128xf32> to vector<1x128xf32>
    %11 = vector.broadcast %10 : vector<1x128xf32> to vector<2x128xf32>
    %c0_13 = arith.constant 0 : index
    %c0_14 = arith.constant 0 : index
    %12 = vector.load %arg7[%c0_13, %c0_14] : memref<1x128xf32, #tpu.memory_space<vmem>>, vector<1x128xf32>
    %13 = vector.shape_cast %12 : vector<1x128xf32> to vector<1x128xf32>
    %14 = vector.broadcast %13 : vector<1x128xf32> to vector<2x128xf32>
    %15 = tpu.iota {dimensions = array<i32: 1>} : vector<2x128xi32>
    %c64_i32 = arith.constant 64 : i32
    %16 = vector.broadcast %c64_i32 : i32 to vector<2x128xi32>
    %17 = arith.cmpi sge, %15, %16 : vector<2x128xi32>
    %c96_i32 = arith.constant 96 : i32
    %18 = vector.broadcast %c96_i32 : i32 to vector<2x128xi32>
    %19 = arith.cmpi slt, %15, %18 : vector<2x128xi32>
    %20 = arith.andi %17, %19 : vector<2x128xi1>
    %cst_15 = arith.constant 0.000000e+00 : f32
    %21 = vector.broadcast %cst_15 : f32 to vector<2x32xf32>
    %22 = vector.extract_strided_slice %5 {offsets = [0, 0], sizes = [2, 128], strides = [1, 1]} : vector<16x128xf32> to vector<2x128xf32>
    %cst_16 = arith.constant dense<0.000000e+00> : vector<2x128xf32>
    %23 = tpu.matmul %21, %6, %cst_16 {dimension_numbers = #tpu.dot_dimension_numbers<[1], [0], [0], [1], [0, 0, 1, 1], [], []>} : vector<2x32xf32>, vector<32x128xf32>, vector<2x128xf32> -> vector<2x128xf32>
    %24 = arith.addf %22, %23 : vector<2x128xf32>
    %25 = arith.negf %24 : vector<2x128xf32>
    %26 = math.exp %25 : vector<2x128xf32>
    %cst_17 = arith.constant 1.000000e+00 : f32
    %27 = vector.broadcast %cst_17 : f32 to vector<2x128xf32>
    %28 = arith.addf %27, %26 : vector<2x128xf32>
    %29 = arith.divf %27, %28 : vector<2x128xf32>
    %30 = math.tanh %24 : vector<2x128xf32>
    %31 = arith.select %20, %30, %29 : vector<2x128xi1>, vector<2x128xf32>
    %32 = vector.extract_strided_slice %31 {offsets = [0, 0], sizes = [2, 32], strides = [1, 1]} : vector<2x128xf32> to vector<2x32xf32>
    %33 = vector.extract_strided_slice %31 {offsets = [0, 32], sizes = [2, 32], strides = [1, 1]} : vector<2x128xf32> to vector<2x32xf32>
    %34 = vector.extract_strided_slice %31 {offsets = [0, 64], sizes = [2, 32], strides = [1, 1]} : vector<2x128xf32> to vector<2x32xf32>
    %35 = vector.extract_strided_slice %31 {offsets = [0, 96], sizes = [2, 32], strides = [1, 1]} : vector<2x128xf32> to vector<2x32xf32>
    %36 = arith.mulf %33, %21 : vector<2x32xf32>
    %37 = arith.mulf %32, %34 : vector<2x32xf32>
    %38 = arith.addf %36, %37 : vector<2x32xf32>
    %39 = math.tanh %38 : vector<2x32xf32>
    %40 = arith.mulf %35, %39 : vector<2x32xf32>
    %41 = tpu.concatenate %40, %21 in 1 : vector<2x32xf32>, vector<2x32xf32> -> vector<2x64xf32>
    %cst_18 = arith.constant dense<0.000000e+00> : vector<2x128xf32>
    %42 = tpu.matmul %41, %7, %cst_18 {dimension_numbers = #tpu.dot_dimension_numbers<[1], [0], [0], [1], [0, 0, 1, 1], [], []>} : vector<2x64xf32>, vector<64x128xf32>, vector<2x128xf32> -> vector<2x128xf32>
    %43 = arith.addf %42, %11 : vector<2x128xf32>
    %44 = arith.negf %43 : vector<2x128xf32>
    %45 = math.exp %44 : vector<2x128xf32>
    %cst_19 = arith.constant 1.000000e+00 : f32
    %46 = vector.broadcast %cst_19 : f32 to vector<2x128xf32>
    %47 = arith.addf %46, %45 : vector<2x128xf32>
    %48 = arith.divf %46, %47 : vector<2x128xf32>
    %49 = math.tanh %43 : vector<2x128xf32>
    %50 = arith.select %20, %49, %48 : vector<2x128xi1>, vector<2x128xf32>
    %51 = vector.extract_strided_slice %50 {offsets = [0, 0], sizes = [2, 32], strides = [1, 1]} : vector<2x128xf32> to vector<2x32xf32>
    %52 = vector.extract_strided_slice %50 {offsets = [0, 32], sizes = [2, 32], strides = [1, 1]} : vector<2x128xf32> to vector<2x32xf32>
    %53 = vector.extract_strided_slice %50 {offsets = [0, 64], sizes = [2, 32], strides = [1, 1]} : vector<2x128xf32> to vector<2x32xf32>
    %54 = vector.extract_strided_slice %50 {offsets = [0, 96], sizes = [2, 32], strides = [1, 1]} : vector<2x128xf32> to vector<2x32xf32>
    %55 = arith.mulf %52, %21 : vector<2x32xf32>
    %56 = arith.mulf %51, %53 : vector<2x32xf32>
    %57 = arith.addf %55, %56 : vector<2x32xf32>
    %58 = math.tanh %57 : vector<2x32xf32>
    %59 = arith.mulf %54, %58 : vector<2x32xf32>
    %60 = tpu.concatenate %59, %21 in 1 : vector<2x32xf32>, vector<2x32xf32> -> vector<2x64xf32>
    %cst_20 = arith.constant dense<0.000000e+00> : vector<2x128xf32>
    %61 = tpu.matmul %60, %8, %cst_20 {dimension_numbers = #tpu.dot_dimension_numbers<[1], [0], [0], [1], [0, 0, 1, 1], [], []>} : vector<2x64xf32>, vector<64x128xf32>, vector<2x128xf32> -> vector<2x128xf32>
    %62 = arith.addf %61, %14 : vector<2x128xf32>
    %63 = arith.negf %62 : vector<2x128xf32>
    %64 = math.exp %63 : vector<2x128xf32>
    %cst_21 = arith.constant 1.000000e+00 : f32
    %65 = vector.broadcast %cst_21 : f32 to vector<2x128xf32>
    %66 = arith.addf %65, %64 : vector<2x128xf32>
    %67 = arith.divf %65, %66 : vector<2x128xf32>
    %68 = math.tanh %62 : vector<2x128xf32>
    %69 = arith.select %20, %68, %67 : vector<2x128xi1>, vector<2x128xf32>
    %70 = vector.extract_strided_slice %69 {offsets = [0, 0], sizes = [2, 32], strides = [1, 1]} : vector<2x128xf32> to vector<2x32xf32>
    %71 = vector.extract_strided_slice %69 {offsets = [0, 32], sizes = [2, 32], strides = [1, 1]} : vector<2x128xf32> to vector<2x32xf32>
    %72 = vector.extract_strided_slice %69 {offsets = [0, 64], sizes = [2, 32], strides = [1, 1]} : vector<2x128xf32> to vector<2x32xf32>
    %73 = vector.extract_strided_slice %69 {offsets = [0, 96], sizes = [2, 32], strides = [1, 1]} : vector<2x128xf32> to vector<2x32xf32>
    %74 = arith.mulf %71, %21 : vector<2x32xf32>
    %75 = arith.mulf %70, %72 : vector<2x32xf32>
    %76 = arith.addf %74, %75 : vector<2x32xf32>
    %77 = math.tanh %76 : vector<2x32xf32>
    %78 = arith.mulf %73, %77 : vector<2x32xf32>
    %79 = vector.extract_strided_slice %5 {offsets = [2, 0], sizes = [2, 128], strides = [1, 1]} : vector<16x128xf32> to vector<2x128xf32>
    %cst_22 = arith.constant dense<0.000000e+00> : vector<2x128xf32>
    %80 = tpu.matmul %40, %6, %cst_22 {dimension_numbers = #tpu.dot_dimension_numbers<[1], [0], [0], [1], [0, 0, 1, 1], [], []>} : vector<2x32xf32>, vector<32x128xf32>, vector<2x128xf32> -> vector<2x128xf32>
    %81 = arith.addf %79, %80 : vector<2x128xf32>
    %82 = arith.negf %81 : vector<2x128xf32>
    %83 = math.exp %82 : vector<2x128xf32>
    %cst_23 = arith.constant 1.000000e+00 : f32
    %84 = vector.broadcast %cst_23 : f32 to vector<2x128xf32>
    %85 = arith.addf %84, %83 : vector<2x128xf32>
    %86 = arith.divf %84, %85 : vector<2x128xf32>
    %87 = math.tanh %81 : vector<2x128xf32>
    %88 = arith.select %20, %87, %86 : vector<2x128xi1>, vector<2x128xf32>
    %89 = vector.extract_strided_slice %88 {offsets = [0, 0], sizes = [2, 32], strides = [1, 1]} : vector<2x128xf32> to vector<2x32xf32>
    %90 = vector.extract_strided_slice %88 {offsets = [0, 32], sizes = [2, 32], strides = [1, 1]} : vector<2x128xf32> to vector<2x32xf32>
    %91 = vector.extract_strided_slice %88 {offsets = [0, 64], sizes = [2, 32], strides = [1, 1]} : vector<2x128xf32> to vector<2x32xf32>
    %92 = vector.extract_strided_slice %88 {offsets = [0, 96], sizes = [2, 32], strides = [1, 1]} : vector<2x128xf32> to vector<2x32xf32>
    %93 = arith.mulf %90, %38 : vector<2x32xf32>
    %94 = arith.mulf %89, %91 : vector<2x32xf32>
    %95 = arith.addf %93, %94 : vector<2x32xf32>
    %96 = math.tanh %95 : vector<2x32xf32>
    %97 = arith.mulf %92, %96 : vector<2x32xf32>
    %98 = tpu.concatenate %97, %59 in 1 : vector<2x32xf32>, vector<2x32xf32> -> vector<2x64xf32>
    %cst_24 = arith.constant dense<0.000000e+00> : vector<2x128xf32>
    %99 = tpu.matmul %98, %7, %cst_24 {dimension_numbers = #tpu.dot_dimension_numbers<[1], [0], [0], [1], [0, 0, 1, 1], [], []>} : vector<2x64xf32>, vector<64x128xf32>, vector<2x128xf32> -> vector<2x128xf32>
    %100 = arith.addf %99, %11 : vector<2x128xf32>
    %101 = arith.negf %100 : vector<2x128xf32>
    %102 = math.exp %101 : vector<2x128xf32>
    %cst_25 = arith.constant 1.000000e+00 : f32
    %103 = vector.broadcast %cst_25 : f32 to vector<2x128xf32>
    %104 = arith.addf %103, %102 : vector<2x128xf32>
    %105 = arith.divf %103, %104 : vector<2x128xf32>
    %106 = math.tanh %100 : vector<2x128xf32>
    %107 = arith.select %20, %106, %105 : vector<2x128xi1>, vector<2x128xf32>
    %108 = vector.extract_strided_slice %107 {offsets = [0, 0], sizes = [2, 32], strides = [1, 1]} : vector<2x128xf32> to vector<2x32xf32>
    %109 = vector.extract_strided_slice %107 {offsets = [0, 32], sizes = [2, 32], strides = [1, 1]} : vector<2x128xf32> to vector<2x32xf32>
    %110 = vector.extract_strided_slice %107 {offsets = [0, 64], sizes = [2, 32], strides = [1, 1]} : vector<2x128xf32> to vector<2x32xf32>
    %111 = vector.extract_strided_slice %107 {offsets = [0, 96], sizes = [2, 32], strides = [1, 1]} : vector<2x128xf32> to vector<2x32xf32>
    %112 = arith.mulf %109, %57 : vector<2x32xf32>
    %113 = arith.mulf %108, %110 : vector<2x32xf32>
    %114 = arith.addf %112, %113 : vector<2x32xf32>
    %115 = math.tanh %114 : vector<2x32xf32>
    %116 = arith.mulf %111, %115 : vector<2x32xf32>
    %117 = tpu.concatenate %116, %78 in 1 : vector<2x32xf32>, vector<2x32xf32> -> vector<2x64xf32>
    %cst_26 = arith.constant dense<0.000000e+00> : vector<2x128xf32>
    %118 = tpu.matmul %117, %8, %cst_26 {dimension_numbers = #tpu.dot_dimension_numbers<[1], [0], [0], [1], [0, 0, 1, 1], [], []>} : vector<2x64xf32>, vector<64x128xf32>, vector<2x128xf32> -> vector<2x128xf32>
    %119 = arith.addf %118, %14 : vector<2x128xf32>
    %120 = arith.negf %119 : vector<2x128xf32>
    %121 = math.exp %120 : vector<2x128xf32>
    %cst_27 = arith.constant 1.000000e+00 : f32
    %122 = vector.broadcast %cst_27 : f32 to vector<2x128xf32>
    %123 = arith.addf %122, %121 : vector<2x128xf32>
    %124 = arith.divf %122, %123 : vector<2x128xf32>
    %125 = math.tanh %119 : vector<2x128xf32>
    %126 = arith.select %20, %125, %124 : vector<2x128xi1>, vector<2x128xf32>
    %127 = vector.extract_strided_slice %126 {offsets = [0, 0], sizes = [2, 32], strides = [1, 1]} : vector<2x128xf32> to vector<2x32xf32>
    %128 = vector.extract_strided_slice %126 {offsets = [0, 32], sizes = [2, 32], strides = [1, 1]} : vector<2x128xf32> to vector<2x32xf32>
    %129 = vector.extract_strided_slice %126 {offsets = [0, 64], sizes = [2, 32], strides = [1, 1]} : vector<2x128xf32> to vector<2x32xf32>
    %130 = vector.extract_strided_slice %126 {offsets = [0, 96], sizes = [2, 32], strides = [1, 1]} : vector<2x128xf32> to vector<2x32xf32>
    %131 = arith.mulf %128, %76 : vector<2x32xf32>
    %132 = arith.mulf %127, %129 : vector<2x32xf32>
    %133 = arith.addf %131, %132 : vector<2x32xf32>
    %134 = math.tanh %133 : vector<2x32xf32>
    %135 = arith.mulf %130, %134 : vector<2x32xf32>
    %136 = vector.extract_strided_slice %5 {offsets = [4, 0], sizes = [2, 128], strides = [1, 1]} : vector<16x128xf32> to vector<2x128xf32>
    %cst_28 = arith.constant dense<0.000000e+00> : vector<2x128xf32>
    %137 = tpu.matmul %97, %6, %cst_28 {dimension_numbers = #tpu.dot_dimension_numbers<[1], [0], [0], [1], [0, 0, 1, 1], [], []>} : vector<2x32xf32>, vector<32x128xf32>, vector<2x128xf32> -> vector<2x128xf32>
    %138 = arith.addf %136, %137 : vector<2x128xf32>
    %139 = arith.negf %138 : vector<2x128xf32>
    %140 = math.exp %139 : vector<2x128xf32>
    %cst_29 = arith.constant 1.000000e+00 : f32
    %141 = vector.broadcast %cst_29 : f32 to vector<2x128xf32>
    %142 = arith.addf %141, %140 : vector<2x128xf32>
    %143 = arith.divf %141, %142 : vector<2x128xf32>
    %144 = math.tanh %138 : vector<2x128xf32>
    %145 = arith.select %20, %144, %143 : vector<2x128xi1>, vector<2x128xf32>
    %146 = vector.extract_strided_slice %145 {offsets = [0, 0], sizes = [2, 32], strides = [1, 1]} : vector<2x128xf32> to vector<2x32xf32>
    %147 = vector.extract_strided_slice %145 {offsets = [0, 32], sizes = [2, 32], strides = [1, 1]} : vector<2x128xf32> to vector<2x32xf32>
    %148 = vector.extract_strided_slice %145 {offsets = [0, 64], sizes = [2, 32], strides = [1, 1]} : vector<2x128xf32> to vector<2x32xf32>
    %149 = vector.extract_strided_slice %145 {offsets = [0, 96], sizes = [2, 32], strides = [1, 1]} : vector<2x128xf32> to vector<2x32xf32>
    %150 = arith.mulf %147, %95 : vector<2x32xf32>
    %151 = arith.mulf %146, %148 : vector<2x32xf32>
    %152 = arith.addf %150, %151 : vector<2x32xf32>
    %153 = math.tanh %152 : vector<2x32xf32>
    %154 = arith.mulf %149, %153 : vector<2x32xf32>
    %155 = tpu.concatenate %154, %116 in 1 : vector<2x32xf32>, vector<2x32xf32> -> vector<2x64xf32>
    %cst_30 = arith.constant dense<0.000000e+00> : vector<2x128xf32>
    %156 = tpu.matmul %155, %7, %cst_30 {dimension_numbers = #tpu.dot_dimension_numbers<[1], [0], [0], [1], [0, 0, 1, 1], [], []>} : vector<2x64xf32>, vector<64x128xf32>, vector<2x128xf32> -> vector<2x128xf32>
    %157 = arith.addf %156, %11 : vector<2x128xf32>
    %158 = arith.negf %157 : vector<2x128xf32>
    %159 = math.exp %158 : vector<2x128xf32>
    %cst_31 = arith.constant 1.000000e+00 : f32
    %160 = vector.broadcast %cst_31 : f32 to vector<2x128xf32>
    %161 = arith.addf %160, %159 : vector<2x128xf32>
    %162 = arith.divf %160, %161 : vector<2x128xf32>
    %163 = math.tanh %157 : vector<2x128xf32>
    %164 = arith.select %20, %163, %162 : vector<2x128xi1>, vector<2x128xf32>
    %165 = vector.extract_strided_slice %164 {offsets = [0, 0], sizes = [2, 32], strides = [1, 1]} : vector<2x128xf32> to vector<2x32xf32>
    %166 = vector.extract_strided_slice %164 {offsets = [0, 32], sizes = [2, 32], strides = [1, 1]} : vector<2x128xf32> to vector<2x32xf32>
    %167 = vector.extract_strided_slice %164 {offsets = [0, 64], sizes = [2, 32], strides = [1, 1]} : vector<2x128xf32> to vector<2x32xf32>
    %168 = vector.extract_strided_slice %164 {offsets = [0, 96], sizes = [2, 32], strides = [1, 1]} : vector<2x128xf32> to vector<2x32xf32>
    %169 = arith.mulf %166, %114 : vector<2x32xf32>
    %170 = arith.mulf %165, %167 : vector<2x32xf32>
    %171 = arith.addf %169, %170 : vector<2x32xf32>
    %172 = math.tanh %171 : vector<2x32xf32>
    %173 = arith.mulf %168, %172 : vector<2x32xf32>
    %174 = tpu.concatenate %173, %135 in 1 : vector<2x32xf32>, vector<2x32xf32> -> vector<2x64xf32>
    %cst_32 = arith.constant dense<0.000000e+00> : vector<2x128xf32>
    %175 = tpu.matmul %174, %8, %cst_32 {dimension_numbers = #tpu.dot_dimension_numbers<[1], [0], [0], [1], [0, 0, 1, 1], [], []>} : vector<2x64xf32>, vector<64x128xf32>, vector<2x128xf32> -> vector<2x128xf32>
    %176 = arith.addf %175, %14 : vector<2x128xf32>
    %177 = arith.negf %176 : vector<2x128xf32>
    %178 = math.exp %177 : vector<2x128xf32>
    %cst_33 = arith.constant 1.000000e+00 : f32
    %179 = vector.broadcast %cst_33 : f32 to vector<2x128xf32>
    %180 = arith.addf %179, %178 : vector<2x128xf32>
    %181 = arith.divf %179, %180 : vector<2x128xf32>
    %182 = math.tanh %176 : vector<2x128xf32>
    %183 = arith.select %20, %182, %181 : vector<2x128xi1>, vector<2x128xf32>
    %184 = vector.extract_strided_slice %183 {offsets = [0, 0], sizes = [2, 32], strides = [1, 1]} : vector<2x128xf32> to vector<2x32xf32>
    %185 = vector.extract_strided_slice %183 {offsets = [0, 32], sizes = [2, 32], strides = [1, 1]} : vector<2x128xf32> to vector<2x32xf32>
    %186 = vector.extract_strided_slice %183 {offsets = [0, 64], sizes = [2, 32], strides = [1, 1]} : vector<2x128xf32> to vector<2x32xf32>
    %187 = vector.extract_strided_slice %183 {offsets = [0, 96], sizes = [2, 32], strides = [1, 1]} : vector<2x128xf32> to vector<2x32xf32>
    %188 = arith.mulf %185, %133 : vector<2x32xf32>
    %189 = arith.mulf %184, %186 : vector<2x32xf32>
    %190 = arith.addf %188, %189 : vector<2x32xf32>
    %191 = math.tanh %190 : vector<2x32xf32>
    %192 = arith.mulf %187, %191 : vector<2x32xf32>
    %193 = vector.extract_strided_slice %5 {offsets = [6, 0], sizes = [2, 128], strides = [1, 1]} : vector<16x128xf32> to vector<2x128xf32>
    %cst_34 = arith.constant dense<0.000000e+00> : vector<2x128xf32>
    %194 = tpu.matmul %154, %6, %cst_34 {dimension_numbers = #tpu.dot_dimension_numbers<[1], [0], [0], [1], [0, 0, 1, 1], [], []>} : vector<2x32xf32>, vector<32x128xf32>, vector<2x128xf32> -> vector<2x128xf32>
    %195 = arith.addf %193, %194 : vector<2x128xf32>
    %196 = arith.negf %195 : vector<2x128xf32>
    %197 = math.exp %196 : vector<2x128xf32>
    %cst_35 = arith.constant 1.000000e+00 : f32
    %198 = vector.broadcast %cst_35 : f32 to vector<2x128xf32>
    %199 = arith.addf %198, %197 : vector<2x128xf32>
    %200 = arith.divf %198, %199 : vector<2x128xf32>
    %201 = math.tanh %195 : vector<2x128xf32>
    %202 = arith.select %20, %201, %200 : vector<2x128xi1>, vector<2x128xf32>
    %203 = vector.extract_strided_slice %202 {offsets = [0, 0], sizes = [2, 32], strides = [1, 1]} : vector<2x128xf32> to vector<2x32xf32>
    %204 = vector.extract_strided_slice %202 {offsets = [0, 32], sizes = [2, 32], strides = [1, 1]} : vector<2x128xf32> to vector<2x32xf32>
    %205 = vector.extract_strided_slice %202 {offsets = [0, 64], sizes = [2, 32], strides = [1, 1]} : vector<2x128xf32> to vector<2x32xf32>
    %206 = vector.extract_strided_slice %202 {offsets = [0, 96], sizes = [2, 32], strides = [1, 1]} : vector<2x128xf32> to vector<2x32xf32>
    %207 = arith.mulf %204, %152 : vector<2x32xf32>
    %208 = arith.mulf %203, %205 : vector<2x32xf32>
    %209 = arith.addf %207, %208 : vector<2x32xf32>
    %210 = math.tanh %209 : vector<2x32xf32>
    %211 = arith.mulf %206, %210 : vector<2x32xf32>
    %212 = tpu.concatenate %211, %173 in 1 : vector<2x32xf32>, vector<2x32xf32> -> vector<2x64xf32>
    %cst_36 = arith.constant dense<0.000000e+00> : vector<2x128xf32>
    %213 = tpu.matmul %212, %7, %cst_36 {dimension_numbers = #tpu.dot_dimension_numbers<[1], [0], [0], [1], [0, 0, 1, 1], [], []>} : vector<2x64xf32>, vector<64x128xf32>, vector<2x128xf32> -> vector<2x128xf32>
    %214 = arith.addf %213, %11 : vector<2x128xf32>
    %215 = arith.negf %214 : vector<2x128xf32>
    %216 = math.exp %215 : vector<2x128xf32>
    %cst_37 = arith.constant 1.000000e+00 : f32
    %217 = vector.broadcast %cst_37 : f32 to vector<2x128xf32>
    %218 = arith.addf %217, %216 : vector<2x128xf32>
    %219 = arith.divf %217, %218 : vector<2x128xf32>
    %220 = math.tanh %214 : vector<2x128xf32>
    %221 = arith.select %20, %220, %219 : vector<2x128xi1>, vector<2x128xf32>
    %222 = vector.extract_strided_slice %221 {offsets = [0, 0], sizes = [2, 32], strides = [1, 1]} : vector<2x128xf32> to vector<2x32xf32>
    %223 = vector.extract_strided_slice %221 {offsets = [0, 32], sizes = [2, 32], strides = [1, 1]} : vector<2x128xf32> to vector<2x32xf32>
    %224 = vector.extract_strided_slice %221 {offsets = [0, 64], sizes = [2, 32], strides = [1, 1]} : vector<2x128xf32> to vector<2x32xf32>
    %225 = vector.extract_strided_slice %221 {offsets = [0, 96], sizes = [2, 32], strides = [1, 1]} : vector<2x128xf32> to vector<2x32xf32>
    %226 = arith.mulf %223, %171 : vector<2x32xf32>
    %227 = arith.mulf %222, %224 : vector<2x32xf32>
    %228 = arith.addf %226, %227 : vector<2x32xf32>
    %229 = math.tanh %228 : vector<2x32xf32>
    %230 = arith.mulf %225, %229 : vector<2x32xf32>
    %231 = tpu.concatenate %230, %192 in 1 : vector<2x32xf32>, vector<2x32xf32> -> vector<2x64xf32>
    %cst_38 = arith.constant dense<0.000000e+00> : vector<2x128xf32>
    %232 = tpu.matmul %231, %8, %cst_38 {dimension_numbers = #tpu.dot_dimension_numbers<[1], [0], [0], [1], [0, 0, 1, 1], [], []>} : vector<2x64xf32>, vector<64x128xf32>, vector<2x128xf32> -> vector<2x128xf32>
    %233 = arith.addf %232, %14 : vector<2x128xf32>
    %234 = arith.negf %233 : vector<2x128xf32>
    %235 = math.exp %234 : vector<2x128xf32>
    %cst_39 = arith.constant 1.000000e+00 : f32
    %236 = vector.broadcast %cst_39 : f32 to vector<2x128xf32>
    %237 = arith.addf %236, %235 : vector<2x128xf32>
    %238 = arith.divf %236, %237 : vector<2x128xf32>
    %239 = math.tanh %233 : vector<2x128xf32>
    %240 = arith.select %20, %239, %238 : vector<2x128xi1>, vector<2x128xf32>
    %241 = vector.extract_strided_slice %240 {offsets = [0, 0], sizes = [2, 32], strides = [1, 1]} : vector<2x128xf32> to vector<2x32xf32>
    %242 = vector.extract_strided_slice %240 {offsets = [0, 32], sizes = [2, 32], strides = [1, 1]} : vector<2x128xf32> to vector<2x32xf32>
    %243 = vector.extract_strided_slice %240 {offsets = [0, 64], sizes = [2, 32], strides = [1, 1]} : vector<2x128xf32> to vector<2x32xf32>
    %244 = vector.extract_strided_slice %240 {offsets = [0, 96], sizes = [2, 32], strides = [1, 1]} : vector<2x128xf32> to vector<2x32xf32>
    %245 = arith.mulf %242, %190 : vector<2x32xf32>
    %246 = arith.mulf %241, %243 : vector<2x32xf32>
    %247 = arith.addf %245, %246 : vector<2x32xf32>
    %248 = math.tanh %247 : vector<2x32xf32>
    %249 = arith.mulf %244, %248 : vector<2x32xf32>
    %250 = vector.extract_strided_slice %5 {offsets = [8, 0], sizes = [2, 128], strides = [1, 1]} : vector<16x128xf32> to vector<2x128xf32>
    %cst_40 = arith.constant dense<0.000000e+00> : vector<2x128xf32>
    %251 = tpu.matmul %211, %6, %cst_40 {dimension_numbers = #tpu.dot_dimension_numbers<[1], [0], [0], [1], [0, 0, 1, 1], [], []>} : vector<2x32xf32>, vector<32x128xf32>, vector<2x128xf32> -> vector<2x128xf32>
    %252 = arith.addf %250, %251 : vector<2x128xf32>
    %253 = arith.negf %252 : vector<2x128xf32>
    %254 = math.exp %253 : vector<2x128xf32>
    %cst_41 = arith.constant 1.000000e+00 : f32
    %255 = vector.broadcast %cst_41 : f32 to vector<2x128xf32>
    %256 = arith.addf %255, %254 : vector<2x128xf32>
    %257 = arith.divf %255, %256 : vector<2x128xf32>
    %258 = math.tanh %252 : vector<2x128xf32>
    %259 = arith.select %20, %258, %257 : vector<2x128xi1>, vector<2x128xf32>
    %260 = vector.extract_strided_slice %259 {offsets = [0, 0], sizes = [2, 32], strides = [1, 1]} : vector<2x128xf32> to vector<2x32xf32>
    %261 = vector.extract_strided_slice %259 {offsets = [0, 32], sizes = [2, 32], strides = [1, 1]} : vector<2x128xf32> to vector<2x32xf32>
    %262 = vector.extract_strided_slice %259 {offsets = [0, 64], sizes = [2, 32], strides = [1, 1]} : vector<2x128xf32> to vector<2x32xf32>
    %263 = vector.extract_strided_slice %259 {offsets = [0, 96], sizes = [2, 32], strides = [1, 1]} : vector<2x128xf32> to vector<2x32xf32>
    %264 = arith.mulf %261, %209 : vector<2x32xf32>
    %265 = arith.mulf %260, %262 : vector<2x32xf32>
    %266 = arith.addf %264, %265 : vector<2x32xf32>
    %267 = math.tanh %266 : vector<2x32xf32>
    %268 = arith.mulf %263, %267 : vector<2x32xf32>
    %269 = tpu.concatenate %268, %230 in 1 : vector<2x32xf32>, vector<2x32xf32> -> vector<2x64xf32>
    %cst_42 = arith.constant dense<0.000000e+00> : vector<2x128xf32>
    %270 = tpu.matmul %269, %7, %cst_42 {dimension_numbers = #tpu.dot_dimension_numbers<[1], [0], [0], [1], [0, 0, 1, 1], [], []>} : vector<2x64xf32>, vector<64x128xf32>, vector<2x128xf32> -> vector<2x128xf32>
    %271 = arith.addf %270, %11 : vector<2x128xf32>
    %272 = arith.negf %271 : vector<2x128xf32>
    %273 = math.exp %272 : vector<2x128xf32>
    %cst_43 = arith.constant 1.000000e+00 : f32
    %274 = vector.broadcast %cst_43 : f32 to vector<2x128xf32>
    %275 = arith.addf %274, %273 : vector<2x128xf32>
    %276 = arith.divf %274, %275 : vector<2x128xf32>
    %277 = math.tanh %271 : vector<2x128xf32>
    %278 = arith.select %20, %277, %276 : vector<2x128xi1>, vector<2x128xf32>
    %279 = vector.extract_strided_slice %278 {offsets = [0, 0], sizes = [2, 32], strides = [1, 1]} : vector<2x128xf32> to vector<2x32xf32>
    %280 = vector.extract_strided_slice %278 {offsets = [0, 32], sizes = [2, 32], strides = [1, 1]} : vector<2x128xf32> to vector<2x32xf32>
    %281 = vector.extract_strided_slice %278 {offsets = [0, 64], sizes = [2, 32], strides = [1, 1]} : vector<2x128xf32> to vector<2x32xf32>
    %282 = vector.extract_strided_slice %278 {offsets = [0, 96], sizes = [2, 32], strides = [1, 1]} : vector<2x128xf32> to vector<2x32xf32>
    %283 = arith.mulf %280, %228 : vector<2x32xf32>
    %284 = arith.mulf %279, %281 : vector<2x32xf32>
    %285 = arith.addf %283, %284 : vector<2x32xf32>
    %286 = math.tanh %285 : vector<2x32xf32>
    %287 = arith.mulf %282, %286 : vector<2x32xf32>
    %288 = tpu.concatenate %287, %249 in 1 : vector<2x32xf32>, vector<2x32xf32> -> vector<2x64xf32>
    %cst_44 = arith.constant dense<0.000000e+00> : vector<2x128xf32>
    %289 = tpu.matmul %288, %8, %cst_44 {dimension_numbers = #tpu.dot_dimension_numbers<[1], [0], [0], [1], [0, 0, 1, 1], [], []>} : vector<2x64xf32>, vector<64x128xf32>, vector<2x128xf32> -> vector<2x128xf32>
    %290 = arith.addf %289, %14 : vector<2x128xf32>
    %291 = arith.negf %290 : vector<2x128xf32>
    %292 = math.exp %291 : vector<2x128xf32>
    %cst_45 = arith.constant 1.000000e+00 : f32
    %293 = vector.broadcast %cst_45 : f32 to vector<2x128xf32>
    %294 = arith.addf %293, %292 : vector<2x128xf32>
    %295 = arith.divf %293, %294 : vector<2x128xf32>
    %296 = math.tanh %290 : vector<2x128xf32>
    %297 = arith.select %20, %296, %295 : vector<2x128xi1>, vector<2x128xf32>
    %298 = vector.extract_strided_slice %297 {offsets = [0, 0], sizes = [2, 32], strides = [1, 1]} : vector<2x128xf32> to vector<2x32xf32>
    %299 = vector.extract_strided_slice %297 {offsets = [0, 32], sizes = [2, 32], strides = [1, 1]} : vector<2x128xf32> to vector<2x32xf32>
    %300 = vector.extract_strided_slice %297 {offsets = [0, 64], sizes = [2, 32], strides = [1, 1]} : vector<2x128xf32> to vector<2x32xf32>
    %301 = vector.extract_strided_slice %297 {offsets = [0, 96], sizes = [2, 32], strides = [1, 1]} : vector<2x128xf32> to vector<2x32xf32>
    %302 = arith.mulf %299, %247 : vector<2x32xf32>
    %303 = arith.mulf %298, %300 : vector<2x32xf32>
    %304 = arith.addf %302, %303 : vector<2x32xf32>
    %305 = math.tanh %304 : vector<2x32xf32>
    %306 = arith.mulf %301, %305 : vector<2x32xf32>
    %307 = vector.extract_strided_slice %5 {offsets = [10, 0], sizes = [2, 128], strides = [1, 1]} : vector<16x128xf32> to vector<2x128xf32>
    %cst_46 = arith.constant dense<0.000000e+00> : vector<2x128xf32>
    %308 = tpu.matmul %268, %6, %cst_46 {dimension_numbers = #tpu.dot_dimension_numbers<[1], [0], [0], [1], [0, 0, 1, 1], [], []>} : vector<2x32xf32>, vector<32x128xf32>, vector<2x128xf32> -> vector<2x128xf32>
    %309 = arith.addf %307, %308 : vector<2x128xf32>
    %310 = arith.negf %309 : vector<2x128xf32>
    %311 = math.exp %310 : vector<2x128xf32>
    %cst_47 = arith.constant 1.000000e+00 : f32
    %312 = vector.broadcast %cst_47 : f32 to vector<2x128xf32>
    %313 = arith.addf %312, %311 : vector<2x128xf32>
    %314 = arith.divf %312, %313 : vector<2x128xf32>
    %315 = math.tanh %309 : vector<2x128xf32>
    %316 = arith.select %20, %315, %314 : vector<2x128xi1>, vector<2x128xf32>
    %317 = vector.extract_strided_slice %316 {offsets = [0, 0], sizes = [2, 32], strides = [1, 1]} : vector<2x128xf32> to vector<2x32xf32>
    %318 = vector.extract_strided_slice %316 {offsets = [0, 32], sizes = [2, 32], strides = [1, 1]} : vector<2x128xf32> to vector<2x32xf32>
    %319 = vector.extract_strided_slice %316 {offsets = [0, 64], sizes = [2, 32], strides = [1, 1]} : vector<2x128xf32> to vector<2x32xf32>
    %320 = vector.extract_strided_slice %316 {offsets = [0, 96], sizes = [2, 32], strides = [1, 1]} : vector<2x128xf32> to vector<2x32xf32>
    %321 = arith.mulf %318, %266 : vector<2x32xf32>
    %322 = arith.mulf %317, %319 : vector<2x32xf32>
    %323 = arith.addf %321, %322 : vector<2x32xf32>
    %324 = math.tanh %323 : vector<2x32xf32>
    %325 = arith.mulf %320, %324 : vector<2x32xf32>
    %326 = tpu.concatenate %325, %287 in 1 : vector<2x32xf32>, vector<2x32xf32> -> vector<2x64xf32>
    %cst_48 = arith.constant dense<0.000000e+00> : vector<2x128xf32>
    %327 = tpu.matmul %326, %7, %cst_48 {dimension_numbers = #tpu.dot_dimension_numbers<[1], [0], [0], [1], [0, 0, 1, 1], [], []>} : vector<2x64xf32>, vector<64x128xf32>, vector<2x128xf32> -> vector<2x128xf32>
    %328 = arith.addf %327, %11 : vector<2x128xf32>
    %329 = arith.negf %328 : vector<2x128xf32>
    %330 = math.exp %329 : vector<2x128xf32>
    %cst_49 = arith.constant 1.000000e+00 : f32
    %331 = vector.broadcast %cst_49 : f32 to vector<2x128xf32>
    %332 = arith.addf %331, %330 : vector<2x128xf32>
    %333 = arith.divf %331, %332 : vector<2x128xf32>
    %334 = math.tanh %328 : vector<2x128xf32>
    %335 = arith.select %20, %334, %333 : vector<2x128xi1>, vector<2x128xf32>
    %336 = vector.extract_strided_slice %335 {offsets = [0, 0], sizes = [2, 32], strides = [1, 1]} : vector<2x128xf32> to vector<2x32xf32>
    %337 = vector.extract_strided_slice %335 {offsets = [0, 32], sizes = [2, 32], strides = [1, 1]} : vector<2x128xf32> to vector<2x32xf32>
    %338 = vector.extract_strided_slice %335 {offsets = [0, 64], sizes = [2, 32], strides = [1, 1]} : vector<2x128xf32> to vector<2x32xf32>
    %339 = vector.extract_strided_slice %335 {offsets = [0, 96], sizes = [2, 32], strides = [1, 1]} : vector<2x128xf32> to vector<2x32xf32>
    %340 = arith.mulf %337, %285 : vector<2x32xf32>
    %341 = arith.mulf %336, %338 : vector<2x32xf32>
    %342 = arith.addf %340, %341 : vector<2x32xf32>
    %343 = math.tanh %342 : vector<2x32xf32>
    %344 = arith.mulf %339, %343 : vector<2x32xf32>
    %345 = tpu.concatenate %344, %306 in 1 : vector<2x32xf32>, vector<2x32xf32> -> vector<2x64xf32>
    %cst_50 = arith.constant dense<0.000000e+00> : vector<2x128xf32>
    %346 = tpu.matmul %345, %8, %cst_50 {dimension_numbers = #tpu.dot_dimension_numbers<[1], [0], [0], [1], [0, 0, 1, 1], [], []>} : vector<2x64xf32>, vector<64x128xf32>, vector<2x128xf32> -> vector<2x128xf32>
    %347 = arith.addf %346, %14 : vector<2x128xf32>
    %348 = arith.negf %347 : vector<2x128xf32>
    %349 = math.exp %348 : vector<2x128xf32>
    %cst_51 = arith.constant 1.000000e+00 : f32
    %350 = vector.broadcast %cst_51 : f32 to vector<2x128xf32>
    %351 = arith.addf %350, %349 : vector<2x128xf32>
    %352 = arith.divf %350, %351 : vector<2x128xf32>
    %353 = math.tanh %347 : vector<2x128xf32>
    %354 = arith.select %20, %353, %352 : vector<2x128xi1>, vector<2x128xf32>
    %355 = vector.extract_strided_slice %354 {offsets = [0, 0], sizes = [2, 32], strides = [1, 1]} : vector<2x128xf32> to vector<2x32xf32>
    %356 = vector.extract_strided_slice %354 {offsets = [0, 32], sizes = [2, 32], strides = [1, 1]} : vector<2x128xf32> to vector<2x32xf32>
    %357 = vector.extract_strided_slice %354 {offsets = [0, 64], sizes = [2, 32], strides = [1, 1]} : vector<2x128xf32> to vector<2x32xf32>
    %358 = vector.extract_strided_slice %354 {offsets = [0, 96], sizes = [2, 32], strides = [1, 1]} : vector<2x128xf32> to vector<2x32xf32>
    %359 = arith.mulf %356, %304 : vector<2x32xf32>
    %360 = arith.mulf %355, %357 : vector<2x32xf32>
    %361 = arith.addf %359, %360 : vector<2x32xf32>
    %362 = math.tanh %361 : vector<2x32xf32>
    %363 = arith.mulf %358, %362 : vector<2x32xf32>
    %364 = vector.extract_strided_slice %5 {offsets = [12, 0], sizes = [2, 128], strides = [1, 1]} : vector<16x128xf32> to vector<2x128xf32>
    %cst_52 = arith.constant dense<0.000000e+00> : vector<2x128xf32>
    %365 = tpu.matmul %325, %6, %cst_52 {dimension_numbers = #tpu.dot_dimension_numbers<[1], [0], [0], [1], [0, 0, 1, 1], [], []>} : vector<2x32xf32>, vector<32x128xf32>, vector<2x128xf32> -> vector<2x128xf32>
    %366 = arith.addf %364, %365 : vector<2x128xf32>
    %367 = arith.negf %366 : vector<2x128xf32>
    %368 = math.exp %367 : vector<2x128xf32>
    %cst_53 = arith.constant 1.000000e+00 : f32
    %369 = vector.broadcast %cst_53 : f32 to vector<2x128xf32>
    %370 = arith.addf %369, %368 : vector<2x128xf32>
    %371 = arith.divf %369, %370 : vector<2x128xf32>
    %372 = math.tanh %366 : vector<2x128xf32>
    %373 = arith.select %20, %372, %371 : vector<2x128xi1>, vector<2x128xf32>
    %374 = vector.extract_strided_slice %373 {offsets = [0, 0], sizes = [2, 32], strides = [1, 1]} : vector<2x128xf32> to vector<2x32xf32>
    %375 = vector.extract_strided_slice %373 {offsets = [0, 32], sizes = [2, 32], strides = [1, 1]} : vector<2x128xf32> to vector<2x32xf32>
    %376 = vector.extract_strided_slice %373 {offsets = [0, 64], sizes = [2, 32], strides = [1, 1]} : vector<2x128xf32> to vector<2x32xf32>
    %377 = vector.extract_strided_slice %373 {offsets = [0, 96], sizes = [2, 32], strides = [1, 1]} : vector<2x128xf32> to vector<2x32xf32>
    %378 = arith.mulf %375, %323 : vector<2x32xf32>
    %379 = arith.mulf %374, %376 : vector<2x32xf32>
    %380 = arith.addf %378, %379 : vector<2x32xf32>
    %381 = math.tanh %380 : vector<2x32xf32>
    %382 = arith.mulf %377, %381 : vector<2x32xf32>
    %383 = tpu.concatenate %382, %344 in 1 : vector<2x32xf32>, vector<2x32xf32> -> vector<2x64xf32>
    %cst_54 = arith.constant dense<0.000000e+00> : vector<2x128xf32>
    %384 = tpu.matmul %383, %7, %cst_54 {dimension_numbers = #tpu.dot_dimension_numbers<[1], [0], [0], [1], [0, 0, 1, 1], [], []>} : vector<2x64xf32>, vector<64x128xf32>, vector<2x128xf32> -> vector<2x128xf32>
    %385 = arith.addf %384, %11 : vector<2x128xf32>
    %386 = arith.negf %385 : vector<2x128xf32>
    %387 = math.exp %386 : vector<2x128xf32>
    %cst_55 = arith.constant 1.000000e+00 : f32
    %388 = vector.broadcast %cst_55 : f32 to vector<2x128xf32>
    %389 = arith.addf %388, %387 : vector<2x128xf32>
    %390 = arith.divf %388, %389 : vector<2x128xf32>
    %391 = math.tanh %385 : vector<2x128xf32>
    %392 = arith.select %20, %391, %390 : vector<2x128xi1>, vector<2x128xf32>
    %393 = vector.extract_strided_slice %392 {offsets = [0, 0], sizes = [2, 32], strides = [1, 1]} : vector<2x128xf32> to vector<2x32xf32>
    %394 = vector.extract_strided_slice %392 {offsets = [0, 32], sizes = [2, 32], strides = [1, 1]} : vector<2x128xf32> to vector<2x32xf32>
    %395 = vector.extract_strided_slice %392 {offsets = [0, 64], sizes = [2, 32], strides = [1, 1]} : vector<2x128xf32> to vector<2x32xf32>
    %396 = vector.extract_strided_slice %392 {offsets = [0, 96], sizes = [2, 32], strides = [1, 1]} : vector<2x128xf32> to vector<2x32xf32>
    %397 = arith.mulf %394, %342 : vector<2x32xf32>
    %398 = arith.mulf %393, %395 : vector<2x32xf32>
    %399 = arith.addf %397, %398 : vector<2x32xf32>
    %400 = math.tanh %399 : vector<2x32xf32>
    %401 = arith.mulf %396, %400 : vector<2x32xf32>
    %402 = tpu.concatenate %401, %363 in 1 : vector<2x32xf32>, vector<2x32xf32> -> vector<2x64xf32>
    %cst_56 = arith.constant dense<0.000000e+00> : vector<2x128xf32>
    %403 = tpu.matmul %402, %8, %cst_56 {dimension_numbers = #tpu.dot_dimension_numbers<[1], [0], [0], [1], [0, 0, 1, 1], [], []>} : vector<2x64xf32>, vector<64x128xf32>, vector<2x128xf32> -> vector<2x128xf32>
    %404 = arith.addf %403, %14 : vector<2x128xf32>
    %405 = arith.negf %404 : vector<2x128xf32>
    %406 = math.exp %405 : vector<2x128xf32>
    %cst_57 = arith.constant 1.000000e+00 : f32
    %407 = vector.broadcast %cst_57 : f32 to vector<2x128xf32>
    %408 = arith.addf %407, %406 : vector<2x128xf32>
    %409 = arith.divf %407, %408 : vector<2x128xf32>
    %410 = math.tanh %404 : vector<2x128xf32>
    %411 = arith.select %20, %410, %409 : vector<2x128xi1>, vector<2x128xf32>
    %412 = vector.extract_strided_slice %411 {offsets = [0, 0], sizes = [2, 32], strides = [1, 1]} : vector<2x128xf32> to vector<2x32xf32>
    %413 = vector.extract_strided_slice %411 {offsets = [0, 32], sizes = [2, 32], strides = [1, 1]} : vector<2x128xf32> to vector<2x32xf32>
    %414 = vector.extract_strided_slice %411 {offsets = [0, 64], sizes = [2, 32], strides = [1, 1]} : vector<2x128xf32> to vector<2x32xf32>
    %415 = vector.extract_strided_slice %411 {offsets = [0, 96], sizes = [2, 32], strides = [1, 1]} : vector<2x128xf32> to vector<2x32xf32>
    %416 = arith.mulf %413, %361 : vector<2x32xf32>
    %417 = arith.mulf %412, %414 : vector<2x32xf32>
    %418 = arith.addf %416, %417 : vector<2x32xf32>
    %419 = math.tanh %418 : vector<2x32xf32>
    %420 = arith.mulf %415, %419 : vector<2x32xf32>
    %421 = vector.extract_strided_slice %5 {offsets = [14, 0], sizes = [2, 128], strides = [1, 1]} : vector<16x128xf32> to vector<2x128xf32>
    %cst_58 = arith.constant dense<0.000000e+00> : vector<2x128xf32>
    %422 = tpu.matmul %382, %6, %cst_58 {dimension_numbers = #tpu.dot_dimension_numbers<[1], [0], [0], [1], [0, 0, 1, 1], [], []>} : vector<2x32xf32>, vector<32x128xf32>, vector<2x128xf32> -> vector<2x128xf32>
    %423 = arith.addf %421, %422 : vector<2x128xf32>
    %424 = arith.negf %423 : vector<2x128xf32>
    %425 = math.exp %424 : vector<2x128xf32>
    %cst_59 = arith.constant 1.000000e+00 : f32
    %426 = vector.broadcast %cst_59 : f32 to vector<2x128xf32>
    %427 = arith.addf %426, %425 : vector<2x128xf32>
    %428 = arith.divf %426, %427 : vector<2x128xf32>
    %429 = math.tanh %423 : vector<2x128xf32>
    %430 = arith.select %20, %429, %428 : vector<2x128xi1>, vector<2x128xf32>
    %431 = vector.extract_strided_slice %430 {offsets = [0, 0], sizes = [2, 32], strides = [1, 1]} : vector<2x128xf32> to vector<2x32xf32>
    %432 = vector.extract_strided_slice %430 {offsets = [0, 32], sizes = [2, 32], strides = [1, 1]} : vector<2x128xf32> to vector<2x32xf32>
    %433 = vector.extract_strided_slice %430 {offsets = [0, 64], sizes = [2, 32], strides = [1, 1]} : vector<2x128xf32> to vector<2x32xf32>
    %434 = vector.extract_strided_slice %430 {offsets = [0, 96], sizes = [2, 32], strides = [1, 1]} : vector<2x128xf32> to vector<2x32xf32>
    %435 = arith.mulf %432, %380 : vector<2x32xf32>
    %436 = arith.mulf %431, %433 : vector<2x32xf32>
    %437 = arith.addf %435, %436 : vector<2x32xf32>
    %438 = math.tanh %437 : vector<2x32xf32>
    %439 = arith.mulf %434, %438 : vector<2x32xf32>
    %440 = tpu.concatenate %439, %401 in 1 : vector<2x32xf32>, vector<2x32xf32> -> vector<2x64xf32>
    %cst_60 = arith.constant dense<0.000000e+00> : vector<2x128xf32>
    %441 = tpu.matmul %440, %7, %cst_60 {dimension_numbers = #tpu.dot_dimension_numbers<[1], [0], [0], [1], [0, 0, 1, 1], [], []>} : vector<2x64xf32>, vector<64x128xf32>, vector<2x128xf32> -> vector<2x128xf32>
    %442 = arith.addf %441, %11 : vector<2x128xf32>
    %443 = arith.negf %442 : vector<2x128xf32>
    %444 = math.exp %443 : vector<2x128xf32>
    %cst_61 = arith.constant 1.000000e+00 : f32
    %445 = vector.broadcast %cst_61 : f32 to vector<2x128xf32>
    %446 = arith.addf %445, %444 : vector<2x128xf32>
    %447 = arith.divf %445, %446 : vector<2x128xf32>
    %448 = math.tanh %442 : vector<2x128xf32>
    %449 = arith.select %20, %448, %447 : vector<2x128xi1>, vector<2x128xf32>
    %450 = vector.extract_strided_slice %449 {offsets = [0, 0], sizes = [2, 32], strides = [1, 1]} : vector<2x128xf32> to vector<2x32xf32>
    %451 = vector.extract_strided_slice %449 {offsets = [0, 32], sizes = [2, 32], strides = [1, 1]} : vector<2x128xf32> to vector<2x32xf32>
    %452 = vector.extract_strided_slice %449 {offsets = [0, 64], sizes = [2, 32], strides = [1, 1]} : vector<2x128xf32> to vector<2x32xf32>
    %453 = vector.extract_strided_slice %449 {offsets = [0, 96], sizes = [2, 32], strides = [1, 1]} : vector<2x128xf32> to vector<2x32xf32>
    %454 = arith.mulf %451, %399 : vector<2x32xf32>
    %455 = arith.mulf %450, %452 : vector<2x32xf32>
    %456 = arith.addf %454, %455 : vector<2x32xf32>
    %457 = math.tanh %456 : vector<2x32xf32>
    %458 = arith.mulf %453, %457 : vector<2x32xf32>
    %459 = tpu.concatenate %458, %420 in 1 : vector<2x32xf32>, vector<2x32xf32> -> vector<2x64xf32>
    %cst_62 = arith.constant dense<0.000000e+00> : vector<2x128xf32>
    %460 = tpu.matmul %459, %8, %cst_62 {dimension_numbers = #tpu.dot_dimension_numbers<[1], [0], [0], [1], [0, 0, 1, 1], [], []>} : vector<2x64xf32>, vector<64x128xf32>, vector<2x128xf32> -> vector<2x128xf32>
    %461 = arith.addf %460, %14 : vector<2x128xf32>
    %462 = arith.negf %461 : vector<2x128xf32>
    %463 = math.exp %462 : vector<2x128xf32>
    %cst_63 = arith.constant 1.000000e+00 : f32
    %464 = vector.broadcast %cst_63 : f32 to vector<2x128xf32>
    %465 = arith.addf %464, %463 : vector<2x128xf32>
    %466 = arith.divf %464, %465 : vector<2x128xf32>
    %467 = math.tanh %461 : vector<2x128xf32>
    %468 = arith.select %20, %467, %466 : vector<2x128xi1>, vector<2x128xf32>
    %469 = vector.extract_strided_slice %468 {offsets = [0, 0], sizes = [2, 32], strides = [1, 1]} : vector<2x128xf32> to vector<2x32xf32>
    %470 = vector.extract_strided_slice %468 {offsets = [0, 32], sizes = [2, 32], strides = [1, 1]} : vector<2x128xf32> to vector<2x32xf32>
    %471 = vector.extract_strided_slice %468 {offsets = [0, 64], sizes = [2, 32], strides = [1, 1]} : vector<2x128xf32> to vector<2x32xf32>
    %472 = vector.extract_strided_slice %468 {offsets = [0, 96], sizes = [2, 32], strides = [1, 1]} : vector<2x128xf32> to vector<2x32xf32>
    %473 = arith.mulf %470, %418 : vector<2x32xf32>
    %474 = arith.mulf %469, %471 : vector<2x32xf32>
    %475 = arith.addf %473, %474 : vector<2x32xf32>
    %476 = math.tanh %475 : vector<2x32xf32>
    %477 = arith.mulf %472, %476 : vector<2x32xf32>
    %cst_64 = arith.constant 0.000000e+00 : f32
    %478 = vector.broadcast %cst_64 : f32 to vector<2x32xf32>
    %479 = arith.maximumf %477, %478 : vector<2x32xf32>
    %c0_65 = arith.constant 0 : index
    %c0_66 = arith.constant 0 : index
    %480 = vector.load %arg8[%c0_65, %c0_66] : memref<32x1xf32, #tpu.memory_space<vmem>>, vector<32x1xf32>
    %cst_67 = arith.constant dense<0.000000e+00> : vector<2x1xf32>
    %481 = tpu.matmul %479, %480, %cst_67 {dimension_numbers = #tpu.dot_dimension_numbers<[1], [0], [0], [1], [0, 0, 1, 1], [], []>} : vector<2x32xf32>, vector<32x1xf32>, vector<2x1xf32> -> vector<2x1xf32>
    %c0_68 = arith.constant 0 : index
    %c0_69 = arith.constant 0 : index
    %482 = vector.load %arg9[%c0_68, %c0_69] : memref<1x1xf32, #tpu.memory_space<vmem>>, vector<1x1xf32>
    %483 = vector.broadcast %482 : vector<1x1xf32> to vector<2x1xf32>
    %484 = arith.addf %481, %483 : vector<2x1xf32>
    %c0_70 = arith.constant 0 : index
    %c0_71 = arith.constant 0 : index
    %485 = vector.load %arg10[%c0_70, %c0_71] : memref<2x1xf32, #tpu.memory_space<vmem>>, vector<2x1xf32>
    tpu.vector_store %arg10[%c0_70, %c0_71], %484 {strides = array<i32>} : memref<2x1xf32, #tpu.memory_space<vmem>>, vector<2x1xf32>,
    return
  }
}

</mosaic_0001>

<llo_original>
// kernel: tpu_custom_call.1
$region0: #{tpu_custom_call.1}
  #allocation0 [shape = 'u32[]', space=smem, size = 0x4, offset = 0x4, fixed_abs, tag = 'smem constant byte address 0x4 - core index']
  #allocation1 [shape = 'u32[144,128]{1,0:T(1,128)}', space=vmem, size = 0x12000, scoped, tag = 'internal scratch']
  #allocation2 [shape = 'f32[1,1]{1,0:T(1,128)S(1)}', space=vmem, size = 0x200, scoped, tag = 'scoped memory for tpu_custom_call.1']
  %s0 = inlined_call_operand.vmem [shape: f32[16,4], index: 0, kind: input, shape index: {}]
  %s1 = inlined_call_operand.hbm [shape: f32[4,128], index: 1, kind: input, shape index: {}]
  %s2 = inlined_call_operand.hbm [shape: f32[32,128], index: 2, kind: input, shape index: {}]
  %s3 = inlined_call_operand.vmem [shape: f32[1,128], index: 3, kind: input, shape index: {}]
  %s4 = inlined_call_operand.hbm [shape: f32[64,128], index: 4, kind: input, shape index: {}]
  %s5 = inlined_call_operand.hbm [shape: f32[1,128], index: 5, kind: input, shape index: {}]
  %s6 = inlined_call_operand.vmem [shape: f32[64,128], index: 6, kind: input, shape index: {}]
  %s7 = inlined_call_operand.vmem [shape: f32[1,128], index: 7, kind: input, shape index: {}]
  %s8 = inlined_call_operand.vmem [shape: f32[32,1], index: 8, kind: input, shape index: {}]
  %s9 = inlined_call_operand.<no memory space> [shape: f32[1,1], index: 9, kind: input, shape index: {}]
  %s10 = inlined_call_operand.vmem [shape: f32[2,1], index: 10, kind: output, shape index: {}]
  %s11 = sld [smem:[#allocation0]]
  $region66: #{tpu_custom_call.1} parent=0
    _
  %s13 = ssub.s32 1, %s11
  %s14 = scalar_select 0, %s13, %s11
  %v15 = vstv %s9
  %16 = vst [vmem:[#allocation2] sm:$0x1] %v15
  $region1: #{tpu_custom_call.1} parent=0
    #allocation3 [shape = 'u8[2048]{0}', space=vmem, size = 0x800, scoped, tag = 'input window, operand 1, single buffered']
    #allocation4 [shape = 's32[1]{0}', space=sflag, size = 0x4, scoped, tag = 'scoped memory for tpu_custom_call.1']
    #allocation5 [shape = 'u8[16384]{0}', space=vmem, size = 0x4000, scoped, tag = 'input window, operand 2, single buffered']
    #allocation6 [shape = 's32[1]{0}', space=sflag, size = 0x4, scoped, tag = 'scoped memory for tpu_custom_call.1']
    #allocation7 [shape = 'u8[32768]{0}', space=vmem, size = 0x8000, scoped, tag = 'input window, operand 4, single buffered']
    #allocation8 [shape = 'u8[512]{0}', space=vmem, size = 0x400, scoped, tag = 'input window, operand 5, single buffered']
    #allocation9 [shape = 's32[1]{0}', space=sflag, size = 0x4, scoped, tag = 'scoped memory for tpu_custom_call.1']
    %17 = vsyncpa [#allocation4], 0
    %18 = vsyncpa [#allocation6], 0
    %19 = vsyncpa [#allocation9], 0
    // Predicated region
    $region2: #{tpu_custom_call.1} parent=1 // pred_check
      _
    $region3: #{tpu_custom_call.1} parent=1 // pred_check_branch
      %21 = sbr.rel (0) target = $region5
    $region4: #{tpu_custom_call.1} parent=1 // pred_region
      _
    $region5: #{tpu_custom_call.1} parent=1 // pred_fallthru
      _
    // Predicated region
    $region6: #{tpu_custom_call.1} parent=1 // pred_check
      _
    $region7: #{tpu_custom_call.1} parent=1 // pred_check_branch
      %23 = sbr.rel (0) target = $region9
    $region8: #{tpu_custom_call.1} parent=1 // pred_region
      %s25 = ssub.s32 64, 64
      %26 = vsyncadd [#allocation4], %s25
      %s28 = sshll.u32 [#allocation3], 4
      %s29 = int_to_ptr.vmem [resolvable:$true] %s28
      %31 = dma.hbm_to_vmem [thread:$0]  %s1, 64, %s29, [#allocation4]
    $region9: #{tpu_custom_call.1} parent=1 // pred_fallthru
      _
    // Predicated region
    $region10: #{tpu_custom_call.1} parent=1 // pred_check
      _
    $region11: #{tpu_custom_call.1} parent=1 // pred_check_branch
      %33 = sbr.rel (0) target = $region13
    $region12: #{tpu_custom_call.1} parent=1 // pred_region
      %s35 = ssub.s32 512, 512
      %36 = vsyncadd [#allocation6], %s35
      %s37 = sshll.u32 [#allocation5], 4
      %s38 = int_to_ptr.vmem [resolvable:$true] %s37
      %43 = dma.hbm_to_vmem [thread:$0]  %s2, 512, %s38, [#allocation6], 128, 128, 8
    $region13: #{tpu_custom_call.1} parent=1 // pred_fallthru
      _
    // Predicated region
    $region14: #{tpu_custom_call.1} parent=1 // pred_check
      _
    $region15: #{tpu_custom_call.1} parent=1 // pred_check_branch
      %45 = sbr.rel (0) target = $region17
    $region16: #{tpu_custom_call.1} parent=1 // pred_region
      _
    $region17: #{tpu_custom_call.1} parent=1 // pred_fallthru
      _
    // Predicated region
    $region18: #{tpu_custom_call.1} parent=1 // pred_check
      _
    $region19: #{tpu_custom_call.1} parent=1 // pred_check_branch
      %47 = sbr.rel (0) target = $region21
    $region20: #{tpu_custom_call.1} parent=1 // pred_region
      %s49 = ssub.s32 1024, 1024
      %50 = vsyncadd [#allocation6], %s49
      %s51 = sshll.u32 [#allocation7], 4
      %s52 = int_to_ptr.vmem [resolvable:$true] %s51
      %57 = dma.hbm_to_vmem [thread:$0]  %s4, 1024, %s52, [#allocation6], 128, 128, 8
    $region21: #{tpu_custom_call.1} parent=1 // pred_fallthru
      _
    // Predicated region
    $region22: #{tpu_custom_call.1} parent=1 // pred_check
      _
    $region23: #{tpu_custom_call.1} parent=1 // pred_check_branch
      %59 = sbr.rel (0) target = $region25
    $region24: #{tpu_custom_call.1} parent=1 // pred_region
      %s61 = ssub.s32 16, 16
      %62 = vsyncadd [#allocation9], %s61
      %s64 = sshll.u32 [#allocation8], 4
      %s65 = int_to_ptr.vmem [resolvable:$true] %s64
      %67 = dma.hbm_to_vmem [thread:$0]  %s5, 16, %s65, [#allocation9]
    $region25: #{tpu_custom_call.1} parent=1 // pred_fallthru
      _
    // Predicated region
    $region26: #{tpu_custom_call.1} parent=1 // pred_check
      _
    $region27: #{tpu_custom_call.1} parent=1 // pred_check_branch
      %69 = sbr.rel (0) target = $region29
    $region28: #{tpu_custom_call.1} parent=1 // pred_region
      _
    $region29: #{tpu_custom_call.1} parent=1 // pred_fallthru
      _
    // Predicated region
    $region30: #{tpu_custom_call.1} parent=1 // pred_check
      _
    $region31: #{tpu_custom_call.1} parent=1 // pred_check_branch
      %71 = sbr.rel (0) target = $region33
    $region32: #{tpu_custom_call.1} parent=1 // pred_region
      _
    $region33: #{tpu_custom_call.1} parent=1 // pred_fallthru
      _
    // Predicated region
    $region34: #{tpu_custom_call.1} parent=1 // pred_check
      _
    $region35: #{tpu_custom_call.1} parent=1 // pred_check_branch
      %73 = sbr.rel (0) target = $region37
    $region36: #{tpu_custom_call.1} parent=1 // pred_region
      _
    $region37: #{tpu_custom_call.1} parent=1 // pred_fallthru
      _
    // Predicated region
    $region38: #{tpu_custom_call.1} parent=1 // pred_check
      _
    $region39: #{tpu_custom_call.1} parent=1 // pred_check_branch
      %75 = sbr.rel (0) target = $region41
    $region40: #{tpu_custom_call.1} parent=1 // pred_region
      _
    $region41: #{tpu_custom_call.1} parent=1 // pred_fallthru
      _
    // Predicated region
    $region42: #{tpu_custom_call.1} parent=1 // pred_check
      _
    $region43: #{tpu_custom_call.1} parent=1 // pred_check_branch
      %77 = sbr.rel (0) target = $region45
    $region44: #{tpu_custom_call.1} parent=1 // pred_region
      %78 = dma.done [#allocation4], 64
    $region45: #{tpu_custom_call.1} parent=1 // pred_fallthru
      _
    // Predicated region
    $region46: #{tpu_custom_call.1} parent=1 // pred_check
      _
    $region47: #{tpu_custom_call.1} parent=1 // pred_check_branch
      %80 = sbr.rel (0) target = $region49
    $region48: #{tpu_custom_call.1} parent=1 // pred_region
      %81 = dma.done [#allocation6], 512
    $region49: #{tpu_custom_call.1} parent=1 // pred_fallthru
      _
    // Predicated region
    $region50: #{tpu_custom_call.1} parent=1 // pred_check
      _
    $region51: #{tpu_custom_call.1} parent=1 // pred_check_branch
      %83 = sbr.rel (0) target = $region53
    $region52: #{tpu_custom_call.1} parent=1 // pred_region
      %84 = dma.done [#allocation6], 1024
    $region53: #{tpu_custom_call.1} parent=1 // pred_fallthru
      _
    // Predicated region
    $region54: #{tpu_custom_call.1} parent=1 // pred_check
      _
    $region55: #{tpu_custom_call.1} parent=1 // pred_check_branch
      %86 = sbr.rel (0) target = $region57
    $region56: #{tpu_custom_call.1} parent=1 // pred_region
      %87 = dma.done [#allocation9], 16
    $region57: #{tpu_custom_call.1} parent=1 // pred_fallthru
      _
    %v88 = vld [vmem:[%s0] sm:$0xff]
    %v89 = vld [vmem:[%s0 + $0x8] sm:$0xff]
    %v90 = vld [vmem:[#allocation3] sm:$0xf]
    %v91 = vld [vmem:[%s3] sm:$0x1]
    %v93 = vlaneseq
    %v94 = vshrl.u32 %v93, 7
    %v95 = vsub.s32 0, %v94
    %v96 = vrot.slane %v91, %v95
    %vm98 = vcmask 31744
    %v100 = vsel %vm98, %v88, 0
    %v103 = vsel %vm98, %v89, 0
    %vm105 = vcmask 1043456
    %v107 = vsel %vm105, %v90, 0
    %109 = vmatprep.subr.mxu0 0.0
    %110 = vmatpush1.msra.mxu0 0.0
    %111 = vmatprep.subr.mxu0 0.0
    %112 = vmatpush1.msra.mxu0 0.0
    %113 = vmatprep.subr.mxu0 0.0
    %114 = vmatpush1.msra.mxu0 0.0
    %115 = vmatprep.subr.mxu0 0.0
    %116 = vmatpush1.msra.mxu0 0.0
    %117 = vmatprep.subr.mxu0 0.0
    %118 = vmatpush1.msra.mxu0 0.0
    %119 = vmatprep.subr.mxu0 0.0
    %120 = vmatpush1.msra.mxu0 0.0
    %121 = vmatprep.subr.mxu0 0.0
    %122 = vmatpush1.msra.mxu0 0.0
    %123 = vmatprep.subr.mxu0 0.0
    %124 = vmatpush1.msra.mxu0 0.0
    %125 = vmatprep.subr.mxu0 0.0
    %126 = vmatpush1.msra.mxu0 0.0
    %127 = vmatprep.subr.mxu0 0.0
    %128 = vmatpush1.msra.mxu0 0.0
    %129 = vmatprep.subr.mxu0 0.0
    %130 = vmatpush1.msra.mxu0 0.0
    %131 = vmatprep.subr.mxu0 0.0
    %132 = vmatpush1.msra.mxu0 0.0
    %133 = vmatprep.subr.mxu0 0.0
    %134 = vmatpush1.msra.mxu0 0.0
    %135 = vmatprep.subr.mxu0 0.0
    %136 = vmatpush1.msra.mxu0 0.0
    %137 = vmatprep.subr.mxu0 0.0
    %138 = vmatpush1.msra.mxu0 0.0
    %139 = vmatprep.subr.mxu0 0.0
    %140 = vmatpush1.msra.mxu0 %v107
    %141 = vmatprep.subr.mxu0 0.0
    %142 = vmatpush2.msra.mxu0 0.0
    %143 = vmatprep.subr.mxu0 0.0
    %144 = vmatpush2.msra.mxu0 0.0
    %145 = vmatprep.subr.mxu0 0.0
    %146 = vmatpush2.msra.mxu0 0.0
    %147 = vmatprep.subr.mxu0 0.0
    %148 = vmatpush2.msra.mxu0 0.0
    %149 = vmatprep.subr.mxu0 0.0
    %150 = vmatpush2.msra.mxu0 0.0
    %151 = vmatprep.subr.mxu0 0.0
    %152 = vmatpush2.msra.mxu0 0.0
    %153 = vmatprep.subr.mxu0 0.0
    %154 = vmatpush2.msra.mxu0 0.0
    %155 = vmatprep.subr.mxu0 0.0
    %156 = vmatpush2.msra.mxu0 0.0
    %157 = vmatprep.subr.mxu0 0.0
    %158 = vmatpush2.msra.mxu0 0.0
    %159 = vmatprep.subr.mxu0 0.0
    %160 = vmatpush2.msra.mxu0 0.0
    %161 = vmatprep.subr.mxu0 0.0
    %162 = vmatpush2.msra.mxu0 0.0
    %163 = vmatprep.subr.mxu0 0.0
    %164 = vmatpush2.msra.mxu0 0.0
    %165 = vmatprep.subr.mxu0 0.0
    %166 = vmatpush2.msra.mxu0 0.0
    %167 = vmatprep.subr.mxu0 0.0
    %168 = vmatpush2.msra.mxu0 0.0
    %169 = vmatprep.subr.mxu0 0.0
    %170 = vmatpush2.msra.mxu0 0.0
    %171 = vmatprep.subr.mxu0 0.0
    %172 = vmatpush2.msra.mxu0 0.0
    %173 = vmatprep.mubr.f32.mxu0 0.0
    %174 = vmatmul.mubr.f32.gmra.mxu0 %v100
    %v175 = vpop.f32.mrf.mxu0
    %v176 = vadd.f32 %v96, %v175
    %v177 = vpop.f32.mrf.mxu0
    %178 = vmatprep.mubr.f32.mxu0 0.0
    %179 = vmatmul.mubr.f32.gmra.mxu0 %v103
    %v180 = vpop.f32.mrf.mxu0
    %v181 = vadd.f32 %v96, %v180
    %v182 = vpop.f32.mrf.mxu0
    %183 = vdwg.mxu0
    %v184 = vld [vmem:[#allocation5] sm:$0xff]
    %v185 = vld [vmem:[#allocation5 + $0x8] sm:$0xff]
    %v186 = vld [vmem:[#allocation5 + $0x10] sm:$0xff]
    %v187 = vld [vmem:[#allocation5 + $0x18] sm:$0xff]
    %v188 = vld [vmem:[#allocation7] sm:$0xff]
    %v189 = vld [vmem:[#allocation7 + $0x8] sm:$0xff]
    %v190 = vld [vmem:[#allocation7 + $0x10] sm:$0xff]
    %v191 = vld [vmem:[#allocation7 + $0x18] sm:$0xff]
    %v192 = vld [vmem:[#allocation7 + $0x20] sm:$0xff]
    %v193 = vld [vmem:[#allocation7 + $0x28] sm:$0xff]
    %v194 = vld [vmem:[#allocation7 + $0x30] sm:$0xff]
    %v195 = vld [vmem:[#allocation7 + $0x38] sm:$0xff]
    %v196 = vld [vmem:[%s6] sm:$0xff]
    %v197 = vld [vmem:[%s6 + $0x8] sm:$0xff]
    %v198 = vld [vmem:[%s6 + $0x10] sm:$0xff]
    %v199 = vld [vmem:[%s6 + $0x18] sm:$0xff]
    %v200 = vld [vmem:[%s6 + $0x20] sm:$0xff]
    %v201 = vld [vmem:[%s6 + $0x28] sm:$0xff]
    %v202 = vld [vmem:[%s6 + $0x30] sm:$0xff]
    %v203 = vld [vmem:[%s6 + $0x38] sm:$0xff]
    %v204 = vld [vmem:[#allocation8] sm:$0x1]
    %v206 = vlaneseq
    %v207 = vshrl.u32 %v206, 7
    %v208 = vsub.s32 0, %v207
    %v209 = vrot.slane %v204, %v208
    %v211 = vld [vmem:[%s7] sm:$0x1]
    %v213 = vlaneseq
    %v214 = vshrl.u32 %v213, 7
    %v215 = vsub.s32 0, %v214
    %v216 = vrot.slane %v211, %v215
    %v218 = vlaneseq
    %v219 = vand.u32 %v218, 127
    %vm220 = vcmp.ge.s32.totalorder %v219, 64
    %vm221 = vcmp.lt.s32.totalorder %v219, 96
    %vm222 = vmand %vm220, %vm221
    %vm223 = vcmask 261120
    %v225 = vsel %vm223, 0.0, 0
    %227 = vmatprep.subr.mxu0 0.0
    %228 = vmatpush1.msra.mxu0 0.0
    %229 = vmatprep.subr.mxu0 0.0
    %230 = vmatpush1.msra.mxu0 0.0
    %231 = vmatprep.subr.mxu0 0.0
    %232 = vmatpush1.msra.mxu0 0.0
    %233 = vmatprep.subr.mxu0 0.0
    %234 = vmatpush1.msra.mxu0 0.0
    %235 = vmatprep.subr.mxu0 0.0
    %236 = vmatpush1.msra.mxu0 0.0
    %237 = vmatprep.subr.mxu0 0.0
    %238 = vmatpush1.msra.mxu0 0.0
    %239 = vmatprep.subr.mxu0 0.0
    %240 = vmatpush1.msra.mxu0 0.0
    %241 = vmatprep.subr.mxu0 0.0
    %242 = vmatpush1.msra.mxu0 0.0
    %243 = vmatprep.subr.mxu0 0.0
    %244 = vmatpush1.msra.mxu0 0.0
    %245 = vmatprep.subr.mxu0 0.0
    %246 = vmatpush1.msra.mxu0 0.0
    %247 = vmatprep.subr.mxu0 0.0
    %248 = vmatpush1.msra.mxu0 0.0
    %249 = vmatprep.subr.mxu0 0.0
    %250 = vmatpush1.msra.mxu0 0.0
    %251 = vmatprep.subr.mxu0 0.0
    %252 = vmatpush1.msra.mxu0 %v187
    %253 = vmatprep.subr.mxu0 0.0
    %254 = vmatpush1.msra.mxu0 %v186
    %255 = vmatprep.subr.mxu0 0.0
    %256 = vmatpush1.msra.mxu0 %v185
    %257 = vmatprep.subr.mxu0 0.0
    %258 = vmatpush1.msra.mxu0 %v184
    %259 = vmatprep.subr.mxu0 0.0
    %260 = vmatpush2.msra.mxu0 0.0
    %261 = vmatprep.subr.mxu0 0.0
    %262 = vmatpush2.msra.mxu0 0.0
    %263 = vmatprep.subr.mxu0 0.0
    %264 = vmatpush2.msra.mxu0 0.0
    %265 = vmatprep.subr.mxu0 0.0
    %266 = vmatpush2.msra.mxu0 0.0
    %267 = vmatprep.subr.mxu0 0.0
    %268 = vmatpush2.msra.mxu0 0.0
    %269 = vmatprep.subr.mxu0 0.0
    %270 = vmatpush2.msra.mxu0 0.0
    %271 = vmatprep.subr.mxu0 0.0
    %272 = vmatpush2.msra.mxu0 0.0
    %273 = vmatprep.subr.mxu0 0.0
    %274 = vmatpush2.msra.mxu0 0.0
    %275 = vmatprep.subr.mxu0 0.0
    %276 = vmatpush2.msra.mxu0 0.0
    %277 = vmatprep.subr.mxu0 0.0
    %278 = vmatpush2.msra.mxu0 0.0
    %279 = vmatprep.subr.mxu0 0.0
    %280 = vmatpush2.msra.mxu0 0.0
    %281 = vmatprep.subr.mxu0 0.0
    %282 = vmatpush2.msra.mxu0 0.0
    %283 = vmatprep.subr.mxu0 0.0
    %284 = vmatpush2.msra.mxu0 0.0
    %285 = vmatprep.subr.mxu0 0.0
    %286 = vmatpush2.msra.mxu0 0.0
    %287 = vmatprep.subr.mxu0 0.0
    %288 = vmatpush2.msra.mxu0 0.0
    %289 = vmatprep.subr.mxu0 0.0
    %290 = vmatpush2.msra.mxu0 0.0
    %291 = vmatprep.mubr.f32.mxu0 0.0
    %292 = vmatmul.mubr.f32.gmra.mxu0 %v225
    %v293 = vpop.f32.mrf.mxu0
    %v294 = vadd.f32 0.0, %v293
    %v295 = vpop.f32.mrf.mxu0
    %296 = vdwg.mxu0
    %v297 = vadd.f32 %v176, %v294
    %v298 = vxor.u32 %v297, 2147483648
    %v299 = vmul.f32 %v298, 1.442695
    %v300 = vpow.pop %v299
    %v301 = vadd.f32 %v300, 1.0
    %v302 = vrcp.pop %v301
    %v303 = vmul.f32 1.0, %v302
    %v304 = vtanh.pop %v297
    %v305 = vsel %vm222, %v304, %v303
    %v306 = vmul.f32 %v305, 0.0
    %308 = vrot.lane.b32.xlu0 %v305, 64
    %v309 = vpop.permute.xlu0 %308
    %v311 = vmul.f32 %v305, %v309
    %313 = vrot.lane.b32.xlu0 %v311, 32
    %v314 = vpop.permute.xlu0 %313
    %v316 = vadd.f32 %v306, %v314
    %v317 = vtanh.pop %v316
    %319 = vrot.lane.b32.xlu0 %v317, 64
    %v320 = vpop.permute.xlu0 %319
    %v322 = vmul.f32 %v305, %v320
    %324 = vrot.lane.b32.xlu0 %v322, 32
    %v325 = vpop.permute.xlu0 %324
    %v327 = vsel %vm223, %v325, 0.0
    %vm328 = vcmask 523264
    %v330 = vsel %vm328, %v327, 0
    %332 = vmatprep.subr.mxu0 0.0
    %333 = vmatpush1.msra.mxu0 0.0
    %334 = vmatprep.subr.mxu0 0.0
    %335 = vmatpush1.msra.mxu0 0.0
    %336 = vmatprep.subr.mxu0 0.0
    %337 = vmatpush1.msra.mxu0 0.0
    %338 = vmatprep.subr.mxu0 0.0
    %339 = vmatpush1.msra.mxu0 0.0
    %340 = vmatprep.subr.mxu0 0.0
    %341 = vmatpush1.msra.mxu0 0.0
    %342 = vmatprep.subr.mxu0 0.0
    %343 = vmatpush1.msra.mxu0 0.0
    %344 = vmatprep.subr.mxu0 0.0
    %345 = vmatpush1.msra.mxu0 0.0
    %346 = vmatprep.subr.mxu0 0.0
    %347 = vmatpush1.msra.mxu0 0.0
    %348 = vmatprep.subr.mxu0 0.0
    %349 = vmatpush1.msra.mxu0 %v195
    %350 = vmatprep.subr.mxu0 0.0
    %351 = vmatpush1.msra.mxu0 %v194
    %352 = vmatprep.subr.mxu0 0.0
    %353 = vmatpush1.msra.mxu0 %v193
    %354 = vmatprep.subr.mxu0 0.0
    %355 = vmatpush1.msra.mxu0 %v192
    %356 = vmatprep.subr.mxu0 0.0
    %357 = vmatpush1.msra.mxu0 %v191
    %358 = vmatprep.subr.mxu0 0.0
    %359 = vmatpush1.msra.mxu0 %v190
    %360 = vmatprep.subr.mxu0 0.0
    %361 = vmatpush1.msra.mxu0 %v189
    %362 = vmatprep.subr.mxu0 0.0
    %363 = vmatpush1.msra.mxu0 %v188
    %364 = vmatprep.subr.mxu0 0.0
    %365 = vmatpush2.msra.mxu0 0.0
    %366 = vmatprep.subr.mxu0 0.0
    %367 = vmatpush2.msra.mxu0 0.0
    %368 = vmatprep.subr.mxu0 0.0
    %369 = vmatpush2.msra.mxu0 0.0
    %370 = vmatprep.subr.mxu0 0.0
    %371 = vmatpush2.msra.mxu0 0.0
    %372 = vmatprep.subr.mxu0 0.0
    %373 = vmatpush2.msra.mxu0 0.0
    %374 = vmatprep.subr.mxu0 0.0
    %375 = vmatpush2.msra.mxu0 0.0
    %376 = vmatprep.subr.mxu0 0.0
    %377 = vmatpush2.msra.mxu0 0.0
    %378 = vmatprep.subr.mxu0 0.0
    %379 = vmatpush2.msra.mxu0 0.0
    %380 = vmatprep.subr.mxu0 0.0
    %381 = vmatpush2.msra.mxu0 0.0
    %382 = vmatprep.subr.mxu0 0.0
    %383 = vmatpush2.msra.mxu0 0.0
    %384 = vmatprep.subr.mxu0 0.0
    %385 = vmatpush2.msra.mxu0 0.0
    %386 = vmatprep.subr.mxu0 0.0
    %387 = vmatpush2.msra.mxu0 0.0
    %388 = vmatprep.subr.mxu0 0.0
    %389 = vmatpush2.msra.mxu0 0.0
    %390 = vmatprep.subr.mxu0 0.0
    %391 = vmatpush2.msra.mxu0 0.0
    %392 = vmatprep.subr.mxu0 0.0
    %393 = vmatpush2.msra.mxu0 0.0
    %394 = vmatprep.subr.mxu0 0.0
    %395 = vmatpush2.msra.mxu0 0.0
    %396 = vmatprep.mubr.f32.mxu0 0.0
    %397 = vmatmul.mubr.f32.gmra.mxu0 %v330
    %v398 = vpop.f32.mrf.mxu0
    %v399 = vadd.f32 %v209, %v398
    %v400 = vpop.f32.mrf.mxu0
    %401 = vdwg.mxu0
    %v402 = vxor.u32 %v399, 2147483648
    %v403 = vmul.f32 %v402, 1.442695
    %v404 = vpow.pop %v403
    %v405 = vadd.f32 %v404, 1.0
    %v406 = vrcp.pop %v405
    %v407 = vmul.f32 1.0, %v406
    %v408 = vtanh.pop %v399
    %v409 = vsel %vm222, %v408, %v407
    %v410 = vmul.f32 %v409, 0.0
    %412 = vrot.lane.b32.xlu0 %v409, 64
    %v413 = vpop.permute.xlu0 %412
    %v415 = vmul.f32 %v409, %v413
    %417 = vrot.lane.b32.xlu0 %v415, 32
    %v418 = vpop.permute.xlu0 %417
    %v420 = vadd.f32 %v410, %v418
    %v421 = vtanh.pop %v420
    %423 = vrot.lane.b32.xlu0 %v421, 64
    %v424 = vpop.permute.xlu0 %423
    %v426 = vmul.f32 %v409, %v424
    %428 = vrot.lane.b32.xlu0 %v426, 32
    %v429 = vpop.permute.xlu0 %428
    %v431 = vsel %vm223, %v429, 0.0
    %v433 = vsel %vm328, %v431, 0
    %435 = vmatprep.subr.mxu0 0.0
    %436 = vmatpush1.msra.mxu0 0.0
    %437 = vmatprep.subr.mxu0 0.0
    %438 = vmatpush1.msra.mxu0 0.0
    %439 = vmatprep.subr.mxu0 0.0
    %440 = vmatpush1.msra.mxu0 0.0
    %441 = vmatprep.subr.mxu0 0.0
    %442 = vmatpush1.msra.mxu0 0.0
    %443 = vmatprep.subr.mxu0 0.0
    %444 = vmatpush1.msra.mxu0 0.0
    %445 = vmatprep.subr.mxu0 0.0
    %446 = vmatpush1.msra.mxu0 0.0
    %447 = vmatprep.subr.mxu0 0.0
    %448 = vmatpush1.msra.mxu0 0.0
    %449 = vmatprep.subr.mxu0 0.0
    %450 = vmatpush1.msra.mxu0 0.0
    %451 = vmatprep.subr.mxu0 0.0
    %452 = vmatpush1.msra.mxu0 %v203
    %453 = vmatprep.subr.mxu0 0.0
    %454 = vmatpush1.msra.mxu0 %v202
    %455 = vmatprep.subr.mxu0 0.0
    %456 = vmatpush1.msra.mxu0 %v201
    %457 = vmatprep.subr.mxu0 0.0
    %458 = vmatpush1.msra.mxu0 %v200
    %459 = vmatprep.subr.mxu0 0.0
    %460 = vmatpush1.msra.mxu0 %v199
    %461 = vmatprep.subr.mxu0 0.0
    %462 = vmatpush1.msra.mxu0 %v198
    %463 = vmatprep.subr.mxu0 0.0
    %464 = vmatpush1.msra.mxu0 %v197
    %465 = vmatprep.subr.mxu0 0.0
    %466 = vmatpush1.msra.mxu0 %v196
    %467 = vmatprep.subr.mxu0 0.0
    %468 = vmatpush2.msra.mxu0 0.0
    %469 = vmatprep.subr.mxu0 0.0
    %470 = vmatpush2.msra.mxu0 0.0
    %471 = vmatprep.subr.mxu0 0.0
    %472 = vmatpush2.msra.mxu0 0.0
    %473 = vmatprep.subr.mxu0 0.0
    %474 = vmatpush2.msra.mxu0 0.0
    %475 = vmatprep.subr.mxu0 0.0
    %476 = vmatpush2.msra.mxu0 0.0
    %477 = vmatprep.subr.mxu0 0.0
    %478 = vmatpush2.msra.mxu0 0.0
    %479 = vmatprep.subr.mxu0 0.0
    %480 = vmatpush2.msra.mxu0 0.0
    %481 = vmatprep.subr.mxu0 0.0
    %482 = vmatpush2.msra.mxu0 0.0
    %483 = vmatprep.subr.mxu0 0.0
    %484 = vmatpush2.msra.mxu0 0.0
    %485 = vmatprep.subr.mxu0 0.0
    %486 = vmatpush2.msra.mxu0 0.0
    %487 = vmatprep.subr.mxu0 0.0
    %488 = vmatpush2.msra.mxu0 0.0
    %489 = vmatprep.subr.mxu0 0.0
    %490 = vmatpush2.msra.mxu0 0.0
    %491 = vmatprep.subr.mxu0 0.0
    %492 = vmatpush2.msra.mxu0 0.0
    %493 = vmatprep.subr.mxu0 0.0
    %494 = vmatpush2.msra.mxu0 0.0
    %495 = vmatprep.subr.mxu0 0.0
    %496 = vmatpush2.msra.mxu0 0.0
    %497 = vmatprep.subr.mxu0 0.0
    %498 = vmatpush2.msra.mxu0 0.0
    %499 = vmatprep.mubr.f32.mxu0 0.0
    %500 = vmatmul.mubr.f32.gmra.mxu0 %v433
    %v501 = vpop.f32.mrf.mxu0
    %v502 = vadd.f32 %v216, %v501
    %v503 = vpop.f32.mrf.mxu0
    %504 = vdwg.mxu0
    %v505 = vxor.u32 %v502, 2147483648
    %v506 = vmul.f32 %v505, 1.442695
    %v507 = vpow.pop %v506
    %v508 = vadd.f32 %v507, 1.0
    %v509 = vrcp.pop %v508
    %v510 = vmul.f32 1.0, %v509
    %v511 = vtanh.pop %v502
    %v512 = vsel %vm222, %v511, %v510
    %v513 = vmul.f32 %v512, 0.0
    %515 = vrot.lane.b32.xlu0 %v512, 64
    %v516 = vpop.permute.xlu0 %515
    %v518 = vmul.f32 %v512, %v516
    %520 = vrot.lane.b32.xlu0 %v518, 32
    %v521 = vpop.permute.xlu0 %520
    %v523 = vadd.f32 %v513, %v521
    %v524 = vtanh.pop %v523
    %526 = vrot.lane.b32.xlu0 %v524, 64
    %v527 = vpop.permute.xlu0 %526
    %v529 = vmul.f32 %v512, %v527
    %v530 = vsel %vm223, %v325, 0
    %532 = vmatprep.subr.mxu0 0.0
    %533 = vmatpush1.msra.mxu0 0.0
    %534 = vmatprep.subr.mxu0 0.0
    %535 = vmatpush1.msra.mxu0 0.0
    %536 = vmatprep.subr.mxu0 0.0
    %537 = vmatpush1.msra.mxu0 0.0
    %538 = vmatprep.subr.mxu0 0.0
    %539 = vmatpush1.msra.mxu0 0.0
    %540 = vmatprep.subr.mxu0 0.0
    %541 = vmatpush1.msra.mxu0 0.0
    %542 = vmatprep.subr.mxu0 0.0
    %543 = vmatpush1.msra.mxu0 0.0
    %544 = vmatprep.subr.mxu0 0.0
    %545 = vmatpush1.msra.mxu0 0.0
    %546 = vmatprep.subr.mxu0 0.0
    %547 = vmatpush1.msra.mxu0 0.0
    %548 = vmatprep.subr.mxu0 0.0
    %549 = vmatpush1.msra.mxu0 0.0
    %550 = vmatprep.subr.mxu0 0.0
    %551 = vmatpush1.msra.mxu0 0.0
    %552 = vmatprep.subr.mxu0 0.0
    %553 = vmatpush1.msra.mxu0 0.0
    %554 = vmatprep.subr.mxu0 0.0
    %555 = vmatpush1.msra.mxu0 0.0
    %556 = vmatprep.subr.mxu0 0.0
    %557 = vmatpush1.msra.mxu0 %v187
    %558 = vmatprep.subr.mxu0 0.0
    %559 = vmatpush1.msra.mxu0 %v186
    %560 = vmatprep.subr.mxu0 0.0
    %561 = vmatpush1.msra.mxu0 %v185
    %562 = vmatprep.subr.mxu0 0.0
    %563 = vmatpush1.msra.mxu0 %v184
    %564 = vmatprep.subr.mxu0 0.0
    %565 = vmatpush2.msra.mxu0 0.0
    %566 = vmatprep.subr.mxu0 0.0
    %567 = vmatpush2.msra.mxu0 0.0
    %568 = vmatprep.subr.mxu0 0.0
    %569 = vmatpush2.msra.mxu0 0.0
    %570 = vmatprep.subr.mxu0 0.0
    %571 = vmatpush2.msra.mxu0 0.0
    %572 = vmatprep.subr.mxu0 0.0
    %573 = vmatpush2.msra.mxu0 0.0
    %574 = vmatprep.subr.mxu0 0.0
    %575 = vmatpush2.msra.mxu0 0.0
    %576 = vmatprep.subr.mxu0 0.0
    %577 = vmatpush2.msra.mxu0 0.0
    %578 = vmatprep.subr.mxu0 0.0
    %579 = vmatpush2.msra.mxu0 0.0
    %580 = vmatprep.subr.mxu0 0.0
    %581 = vmatpush2.msra.mxu0 0.0
    %582 = vmatprep.subr.mxu0 0.0
    %583 = vmatpush2.msra.mxu0 0.0
    %584 = vmatprep.subr.mxu0 0.0
    %585 = vmatpush2.msra.mxu0 0.0
    %586 = vmatprep.subr.mxu0 0.0
    %587 = vmatpush2.msra.mxu0 0.0
    %588 = vmatprep.subr.mxu0 0.0
    %589 = vmatpush2.msra.mxu0 0.0
    %590 = vmatprep.subr.mxu0 0.0
    %591 = vmatpush2.msra.mxu0 0.0
    %592 = vmatprep.subr.mxu0 0.0
    %593 = vmatpush2.msra.mxu0 0.0
    %594 = vmatprep.subr.mxu0 0.0
    %595 = vmatpush2.msra.mxu0 0.0
    %596 = vmatprep.mubr.f32.mxu0 0.0
    %597 = vmatmul.mubr.f32.gmra.mxu0 %v530
    %v598 = vpop.f32.mrf.mxu0
    %v599 = vadd.f32 0.0, %v598
    %v600 = vpop.f32.mrf.mxu0
    %601 = vdwg.mxu0
    %v603 = vrot.slane %v599, 6
    %v605 = vadd.f32 %v176, %v603
    %v606 = vxor.u32 %v605, 2147483648
    %v607 = vmul.f32 %v606, 1.442695
    %v608 = vpow.pop %v607
    %v609 = vadd.f32 %v608, 1.0
    %v610 = vrcp.pop %v609
    %v611 = vmul.f32 1.0, %v610
    %v612 = vtanh.pop %v605
    %v613 = vsel %vm222, %v612, %v611
    %v615 = vrot.slane %v316, 6
    %v617 = vmul.f32 %v613, %v615
    %619 = vrot.lane.b32.xlu0 %v613, 64
    %v620 = vpop.permute.xlu0 %619
    %v622 = vmul.f32 %v613, %v620
    %624 = vrot.lane.b32.xlu0 %v622, 32
    %v625 = vpop.permute.xlu0 %624
    %v627 = vadd.f32 %v617, %v625
    %v628 = vtanh.pop %v627
    %630 = vrot.lane.b32.xlu0 %v628, 64
    %v631 = vpop.permute.xlu0 %630
    %v633 = vmul.f32 %v613, %v631
    %635 = vrot.lane.b32.xlu0 %v633, 32
    %v636 = vpop.permute.xlu0 %635
    %v638 = vrot.slane %v426, 6
    %639 = vrot.lane.b32.xlu0 %v638, 64
    %v640 = vpop.permute.xlu0 %639
    %v642 = vsel %vm223, %v636, %v640
    %v644 = vrot.slane %v642, 2
    %v645 = vsel %vm328, %v644, 0
    %647 = vmatprep.subr.mxu0 0.0
    %648 = vmatpush1.msra.mxu0 0.0
    %649 = vmatprep.subr.mxu0 0.0
    %650 = vmatpush1.msra.mxu0 0.0
    %651 = vmatprep.subr.mxu0 0.0
    %652 = vmatpush1.msra.mxu0 0.0
    %653 = vmatprep.subr.mxu0 0.0
    %654 = vmatpush1.msra.mxu0 0.0
    %655 = vmatprep.subr.mxu0 0.0
    %656 = vmatpush1.msra.mxu0 0.0
    %657 = vmatprep.subr.mxu0 0.0
    %658 = vmatpush1.msra.mxu0 0.0
    %659 = vmatprep.subr.mxu0 0.0
    %660 = vmatpush1.msra.mxu0 0.0
    %661 = vmatprep.subr.mxu0 0.0
    %662 = vmatpush1.msra.mxu0 0.0
    %663 = vmatprep.subr.mxu0 0.0
    %664 = vmatpush1.msra.mxu0 %v195
    %665 = vmatprep.subr.mxu0 0.0
    %666 = vmatpush1.msra.mxu0 %v194
    %667 = vmatprep.subr.mxu0 0.0
    %668 = vmatpush1.msra.mxu0 %v193
    %669 = vmatprep.subr.mxu0 0.0
    %670 = vmatpush1.msra.mxu0 %v192
    %671 = vmatprep.subr.mxu0 0.0
    %672 = vmatpush1.msra.mxu0 %v191
    %673 = vmatprep.subr.mxu0 0.0
    %674 = vmatpush1.msra.mxu0 %v190
    %675 = vmatprep.subr.mxu0 0.0
    %676 = vmatpush1.msra.mxu0 %v189
    %677 = vmatprep.subr.mxu0 0.0
    %678 = vmatpush1.msra.mxu0 %v188
    %679 = vmatprep.subr.mxu0 0.0
    %680 = vmatpush2.msra.mxu0 0.0
    %681 = vmatprep.subr.mxu0 0.0
    %682 = vmatpush2.msra.mxu0 0.0
    %683 = vmatprep.subr.mxu0 0.0
    %684 = vmatpush2.msra.mxu0 0.0
    %685 = vmatprep.subr.mxu0 0.0
    %686 = vmatpush2.msra.mxu0 0.0
    %687 = vmatprep.subr.mxu0 0.0
    %688 = vmatpush2.msra.mxu0 0.0
    %689 = vmatprep.subr.mxu0 0.0
    %690 = vmatpush2.msra.mxu0 0.0
    %691 = vmatprep.subr.mxu0 0.0
    %692 = vmatpush2.msra.mxu0 0.0
    %693 = vmatprep.subr.mxu0 0.0
    %694 = vmatpush2.msra.mxu0 0.0
    %695 = vmatprep.subr.mxu0 0.0
    %696 = vmatpush2.msra.mxu0 0.0
    %697 = vmatprep.subr.mxu0 0.0
    %698 = vmatpush2.msra.mxu0 0.0
    %699 = vmatprep.subr.mxu0 0.0
    %700 = vmatpush2.msra.mxu0 0.0
    %701 = vmatprep.subr.mxu0 0.0
    %702 = vmatpush2.msra.mxu0 0.0
    %703 = vmatprep.subr.mxu0 0.0
    %704 = vmatpush2.msra.mxu0 0.0
    %705 = vmatprep.subr.mxu0 0.0
    %706 = vmatpush2.msra.mxu0 0.0
    %707 = vmatprep.subr.mxu0 0.0
    %708 = vmatpush2.msra.mxu0 0.0
    %709 = vmatprep.subr.mxu0 0.0
    %710 = vmatpush2.msra.mxu0 0.0
    %711 = vmatprep.mubr.f32.mxu0 0.0
    %712 = vmatmul.mubr.f32.gmra.mxu0 %v645
    %v713 = vpop.f32.mrf.mxu0
    %v714 = vadd.f32 %v209, %v713
    %v715 = vpop.f32.mrf.mxu0
    %716 = vdwg.mxu0
    %v717 = vxor.u32 %v714, 2147483648
    %v718 = vmul.f32 %v717, 1.442695
    %v719 = vpow.pop %v718
    %v720 = vadd.f32 %v719, 1.0
    %v721 = vrcp.pop %v720
    %v722 = vmul.f32 1.0, %v721
    %v723 = vtanh.pop %v714
    %v724 = vsel %vm222, %v723, %v722
    %v725 = vmul.f32 %v724, %v420
    %727 = vrot.lane.b32.xlu0 %v724, 64
    %v728 = vpop.permute.xlu0 %727
    %v730 = vmul.f32 %v724, %v728
    %732 = vrot.lane.b32.xlu0 %v730, 32
    %v733 = vpop.permute.xlu0 %732
    %v735 = vadd.f32 %v725, %v733
    %v736 = vtanh.pop %v735
    %738 = vrot.lane.b32.xlu0 %v736, 64
    %v739 = vpop.permute.xlu0 %738
    %v741 = vmul.f32 %v724, %v739
    %743 = vrot.lane.b32.xlu0 %v741, 32
    %v744 = vpop.permute.xlu0 %743
    %747 = vrot.lane.b32.xlu0 %v529, 64
    %v748 = vpop.permute.xlu0 %747
    %v750 = vsel %vm223, %v744, %v748
    %v752 = vsel %vm328, %v750, 0
    %754 = vmatprep.subr.mxu0 0.0
    %755 = vmatpush1.msra.mxu0 0.0
    %756 = vmatprep.subr.mxu0 0.0
    %757 = vmatpush1.msra.mxu0 0.0
    %758 = vmatprep.subr.mxu0 0.0
    %759 = vmatpush1.msra.mxu0 0.0
    %760 = vmatprep.subr.mxu0 0.0
    %761 = vmatpush1.msra.mxu0 0.0
    %762 = vmatprep.subr.mxu0 0.0
    %763 = vmatpush1.msra.mxu0 0.0
    %764 = vmatprep.subr.mxu0 0.0
    %765 = vmatpush1.msra.mxu0 0.0
    %766 = vmatprep.subr.mxu0 0.0
    %767 = vmatpush1.msra.mxu0 0.0
    %768 = vmatprep.subr.mxu0 0.0
    %769 = vmatpush1.msra.mxu0 0.0
    %770 = vmatprep.subr.mxu0 0.0
    %771 = vmatpush1.msra.mxu0 %v203
    %772 = vmatprep.subr.mxu0 0.0
    %773 = vmatpush1.msra.mxu0 %v202
    %774 = vmatprep.subr.mxu0 0.0
    %775 = vmatpush1.msra.mxu0 %v201
    %776 = vmatprep.subr.mxu0 0.0
    %777 = vmatpush1.msra.mxu0 %v200
    %778 = vmatprep.subr.mxu0 0.0
    %779 = vmatpush1.msra.mxu0 %v199
    %780 = vmatprep.subr.mxu0 0.0
    %781 = vmatpush1.msra.mxu0 %v198
    %782 = vmatprep.subr.mxu0 0.0
    %783 = vmatpush1.msra.mxu0 %v197
    %784 = vmatprep.subr.mxu0 0.0
    %785 = vmatpush1.msra.mxu0 %v196
    %786 = vmatprep.subr.mxu0 0.0
    %787 = vmatpush2.msra.mxu0 0.0
    %788 = vmatprep.subr.mxu0 0.0
    %789 = vmatpush2.msra.mxu0 0.0
    %790 = vmatprep.subr.mxu0 0.0
    %791 = vmatpush2.msra.mxu0 0.0
    %792 = vmatprep.subr.mxu0 0.0
    %793 = vmatpush2.msra.mxu0 0.0
    %794 = vmatprep.subr.mxu0 0.0
    %795 = vmatpush2.msra.mxu0 0.0
    %796 = vmatprep.subr.mxu0 0.0
    %797 = vmatpush2.msra.mxu0 0.0
    %798 = vmatprep.subr.mxu0 0.0
    %799 = vmatpush2.msra.mxu0 0.0
    %800 = vmatprep.subr.mxu0 0.0
    %801 = vmatpush2.msra.mxu0 0.0
    %802 = vmatprep.subr.mxu0 0.0
    %803 = vmatpush2.msra.mxu0 0.0
    %804 = vmatprep.subr.mxu0 0.0
    %805 = vmatpush2.msra.mxu0 0.0
    %806 = vmatprep.subr.mxu0 0.0
    %807 = vmatpush2.msra.mxu0 0.0
    %808 = vmatprep.subr.mxu0 0.0
    %809 = vmatpush2.msra.mxu0 0.0
    %810 = vmatprep.subr.mxu0 0.0
    %811 = vmatpush2.msra.mxu0 0.0
    %812 = vmatprep.subr.mxu0 0.0
    %813 = vmatpush2.msra.mxu0 0.0
    %814 = vmatprep.subr.mxu0 0.0
    %815 = vmatpush2.msra.mxu0 0.0
    %816 = vmatprep.subr.mxu0 0.0
    %817 = vmatpush2.msra.mxu0 0.0
    %818 = vmatprep.mubr.f32.mxu0 0.0
    %819 = vmatmul.mubr.f32.gmra.mxu0 %v752
    %v820 = vpop.f32.mrf.mxu0
    %v821 = vadd.f32 %v216, %v820
    %v822 = vpop.f32.mrf.mxu0
    %823 = vdwg.mxu0
    %v824 = vxor.u32 %v821, 2147483648
    %v825 = vmul.f32 %v824, 1.442695
    %v826 = vpow.pop %v825
    %v827 = vadd.f32 %v826, 1.0
    %v828 = vrcp.pop %v827
    %v829 = vmul.f32 1.0, %v828
    %v830 = vtanh.pop %v821
    %v831 = vsel %vm222, %v830, %v829
    %v832 = vmul.f32 %v831, %v523
    %834 = vrot.lane.b32.xlu0 %v831, 64
    %v835 = vpop.permute.xlu0 %834
    %v837 = vmul.f32 %v831, %v835
    %839 = vrot.lane.b32.xlu0 %v837, 32
    %v840 = vpop.permute.xlu0 %839
    %v842 = vadd.f32 %v832, %v840
    %v843 = vtanh.pop %v842
    %845 = vrot.lane.b32.xlu0 %v843, 64
    %v846 = vpop.permute.xlu0 %845
    %v848 = vmul.f32 %v831, %v846
    %v849 = vrot.slane %v633, 2
    %850 = vrot.lane.b32.xlu0 %v849, 32
    %v851 = vpop.permute.xlu0 %850
    %v852 = vsel %vm223, %v851, 0
    %854 = vmatprep.subr.mxu0 0.0
    %855 = vmatpush1.msra.mxu0 0.0
    %856 = vmatprep.subr.mxu0 0.0
    %857 = vmatpush1.msra.mxu0 0.0
    %858 = vmatprep.subr.mxu0 0.0
    %859 = vmatpush1.msra.mxu0 0.0
    %860 = vmatprep.subr.mxu0 0.0
    %861 = vmatpush1.msra.mxu0 0.0
    %862 = vmatprep.subr.mxu0 0.0
    %863 = vmatpush1.msra.mxu0 0.0
    %864 = vmatprep.subr.mxu0 0.0
    %865 = vmatpush1.msra.mxu0 0.0
    %866 = vmatprep.subr.mxu0 0.0
    %867 = vmatpush1.msra.mxu0 0.0
    %868 = vmatprep.subr.mxu0 0.0
    %869 = vmatpush1.msra.mxu0 0.0
    %870 = vmatprep.subr.mxu0 0.0
    %871 = vmatpush1.msra.mxu0 0.0
    %872 = vmatprep.subr.mxu0 0.0
    %873 = vmatpush1.msra.mxu0 0.0
    %874 = vmatprep.subr.mxu0 0.0
    %875 = vmatpush1.msra.mxu0 0.0
    %876 = vmatprep.subr.mxu0 0.0
    %877 = vmatpush1.msra.mxu0 0.0
    %878 = vmatprep.subr.mxu0 0.0
    %879 = vmatpush1.msra.mxu0 %v187
    %880 = vmatprep.subr.mxu0 0.0
    %881 = vmatpush1.msra.mxu0 %v186
    %882 = vmatprep.subr.mxu0 0.0
    %883 = vmatpush1.msra.mxu0 %v185
    %884 = vmatprep.subr.mxu0 0.0
    %885 = vmatpush1.msra.mxu0 %v184
    %886 = vmatprep.subr.mxu0 0.0
    %887 = vmatpush2.msra.mxu0 0.0
    %888 = vmatprep.subr.mxu0 0.0
    %889 = vmatpush2.msra.mxu0 0.0
    %890 = vmatprep.subr.mxu0 0.0
    %891 = vmatpush2.msra.mxu0 0.0
    %892 = vmatprep.subr.mxu0 0.0
    %893 = vmatpush2.msra.mxu0 0.0
    %894 = vmatprep.subr.mxu0 0.0
    %895 = vmatpush2.msra.mxu0 0.0
    %896 = vmatprep.subr.mxu0 0.0
    %897 = vmatpush2.msra.mxu0 0.0
    %898 = vmatprep.subr.mxu0 0.0
    %899 = vmatpush2.msra.mxu0 0.0
    %900 = vmatprep.subr.mxu0 0.0
    %901 = vmatpush2.msra.mxu0 0.0
    %902 = vmatprep.subr.mxu0 0.0
    %903 = vmatpush2.msra.mxu0 0.0
    %904 = vmatprep.subr.mxu0 0.0
    %905 = vmatpush2.msra.mxu0 0.0
    %906 = vmatprep.subr.mxu0 0.0
    %907 = vmatpush2.msra.mxu0 0.0
    %908 = vmatprep.subr.mxu0 0.0
    %909 = vmatpush2.msra.mxu0 0.0
    %910 = vmatprep.subr.mxu0 0.0
    %911 = vmatpush2.msra.mxu0 0.0
    %912 = vmatprep.subr.mxu0 0.0
    %913 = vmatpush2.msra.mxu0 0.0
    %914 = vmatprep.subr.mxu0 0.0
    %915 = vmatpush2.msra.mxu0 0.0
    %916 = vmatprep.subr.mxu0 0.0
    %917 = vmatpush2.msra.mxu0 0.0
    %918 = vmatprep.mubr.f32.mxu0 0.0
    %919 = vmatmul.mubr.f32.gmra.mxu0 %v852
    %v920 = vpop.f32.mrf.mxu0
    %v921 = vadd.f32 0.0, %v920
    %v922 = vpop.f32.mrf.mxu0
    %923 = vdwg.mxu0
    %v925 = vrot.slane %v921, 4
    %v927 = vadd.f32 %v176, %v925
    %v928 = vxor.u32 %v927, 2147483648
    %v929 = vmul.f32 %v928, 1.442695
    %v930 = vpow.pop %v929
    %v931 = vadd.f32 %v930, 1.0
    %v932 = vrcp.pop %v931
    %v933 = vmul.f32 1.0, %v932
    %v934 = vtanh.pop %v927
    %v935 = vsel %vm222, %v934, %v933
    %v937 = vrot.slane %v627, 6
    %v939 = vmul.f32 %v935, %v937
    %941 = vrot.lane.b32.xlu0 %v935, 64
    %v942 = vpop.permute.xlu0 %941
    %v944 = vmul.f32 %v935, %v942
    %946 = vrot.lane.b32.xlu0 %v944, 32
    %v947 = vpop.permute.xlu0 %946
    %v949 = vadd.f32 %v939, %v947
    %v950 = vtanh.pop %v949
    %952 = vrot.lane.b32.xlu0 %v950, 64
    %v953 = vpop.permute.xlu0 %952
    %v955 = vmul.f32 %v935, %v953
    %957 = vrot.lane.b32.xlu0 %v955, 32
    %v958 = vpop.permute.xlu0 %957
    %v960 = vrot.slane %v741, 4
    %961 = vrot.lane.b32.xlu0 %v960, 64
    %v962 = vpop.permute.xlu0 %961
    %v964 = vsel %vm223, %v958, %v962
    %v966 = vrot.slane %v964, 4
    %v967 = vsel %vm328, %v966, 0
    %969 = vmatprep.subr.mxu0 0.0
    %970 = vmatpush1.msra.mxu0 0.0
    %971 = vmatprep.subr.mxu0 0.0
    %972 = vmatpush1.msra.mxu0 0.0
    %973 = vmatprep.subr.mxu0 0.0
    %974 = vmatpush1.msra.mxu0 0.0
    %975 = vmatprep.subr.mxu0 0.0
    %976 = vmatpush1.msra.mxu0 0.0
    %977 = vmatprep.subr.mxu0 0.0
    %978 = vmatpush1.msra.mxu0 0.0
    %979 = vmatprep.subr.mxu0 0.0
    %980 = vmatpush1.msra.mxu0 0.0
    %981 = vmatprep.subr.mxu0 0.0
    %982 = vmatpush1.msra.mxu0 0.0
    %983 = vmatprep.subr.mxu0 0.0
    %984 = vmatpush1.msra.mxu0 0.0
    %985 = vmatprep.subr.mxu0 0.0
    %986 = vmatpush1.msra.mxu0 %v195
    %987 = vmatprep.subr.mxu0 0.0
    %988 = vmatpush1.msra.mxu0 %v194
    %989 = vmatprep.subr.mxu0 0.0
    %990 = vmatpush1.msra.mxu0 %v193
    %991 = vmatprep.subr.mxu0 0.0
    %992 = vmatpush1.msra.mxu0 %v192
    %993 = vmatprep.subr.mxu0 0.0
    %994 = vmatpush1.msra.mxu0 %v191
    %995 = vmatprep.subr.mxu0 0.0
    %996 = vmatpush1.msra.mxu0 %v190
    %997 = vmatprep.subr.mxu0 0.0
    %998 = vmatpush1.msra.mxu0 %v189
    %999 = vmatprep.subr.mxu0 0.0
    %1000 = vmatpush1.msra.mxu0 %v188
    %1001 = vmatprep.subr.mxu0 0.0
    %1002 = vmatpush2.msra.mxu0 0.0
    %1003 = vmatprep.subr.mxu0 0.0
    %1004 = vmatpush2.msra.mxu0 0.0
    %1005 = vmatprep.subr.mxu0 0.0
    %1006 = vmatpush2.msra.mxu0 0.0
    %1007 = vmatprep.subr.mxu0 0.0
    %1008 = vmatpush2.msra.mxu0 0.0
    %1009 = vmatprep.subr.mxu0 0.0
    %1010 = vmatpush2.msra.mxu0 0.0
    %1011 = vmatprep.subr.mxu0 0.0
    %1012 = vmatpush2.msra.mxu0 0.0
    %1013 = vmatprep.subr.mxu0 0.0
    %1014 = vmatpush2.msra.mxu0 0.0
    %1015 = vmatprep.subr.mxu0 0.0
    %1016 = vmatpush2.msra.mxu0 0.0
    %1017 = vmatprep.subr.mxu0 0.0
    %1018 = vmatpush2.msra.mxu0 0.0
    %1019 = vmatprep.subr.mxu0 0.0
    %1020 = vmatpush2.msra.mxu0 0.0
    %1021 = vmatprep.subr.mxu0 0.0
    %1022 = vmatpush2.msra.mxu0 0.0
    %1023 = vmatprep.subr.mxu0 0.0
    %1024 = vmatpush2.msra.mxu0 0.0
    %1025 = vmatprep.subr.mxu0 0.0
    %1026 = vmatpush2.msra.mxu0 0.0
    %1027 = vmatprep.subr.mxu0 0.0
    %1028 = vmatpush2.msra.mxu0 0.0
    %1029 = vmatprep.subr.mxu0 0.0
    %1030 = vmatpush2.msra.mxu0 0.0
    %1031 = vmatprep.subr.mxu0 0.0
    %1032 = vmatpush2.msra.mxu0 0.0
    %1033 = vmatprep.mubr.f32.mxu0 0.0
    %1034 = vmatmul.mubr.f32.gmra.mxu0 %v967
    %v1035 = vpop.f32.mrf.mxu0
    %v1036 = vadd.f32 %v209, %v1035
    %v1037 = vpop.f32.mrf.mxu0
    %1038 = vdwg.mxu0
    %v1039 = vxor.u32 %v1036, 2147483648
    %v1040 = vmul.f32 %v1039, 1.442695
    %v1041 = vpow.pop %v1040
    %v1042 = vadd.f32 %v1041, 1.0
    %v1043 = vrcp.pop %v1042
    %v1044 = vmul.f32 1.0, %v1043
    %v1045 = vtanh.pop %v1036
    %v1046 = vsel %vm222, %v1045, %v1044
    %v1047 = vmul.f32 %v1046, %v735
    %1049 = vrot.lane.b32.xlu0 %v1046, 64
    %v1050 = vpop.permute.xlu0 %1049
    %v1052 = vmul.f32 %v1046, %v1050
    %1054 = vrot.lane.b32.xlu0 %v1052, 32
    %v1055 = vpop.permute.xlu0 %1054
    %v1057 = vadd.f32 %v1047, %v1055
    %v1058 = vtanh.pop %v1057
    %1060 = vrot.lane.b32.xlu0 %v1058, 64
    %v1061 = vpop.permute.xlu0 %1060
    %v1063 = vmul.f32 %v1046, %v1061
    %1065 = vrot.lane.b32.xlu0 %v1063, 32
    %v1066 = vpop.permute.xlu0 %1065
    %1069 = vrot.lane.b32.xlu0 %v848, 64
    %v1070 = vpop.permute.xlu0 %1069
    %v1072 = vsel %vm223, %v1066, %v1070
    %v1074 = vsel %vm328, %v1072, 0
    %1076 = vmatprep.subr.mxu0 0.0
    %1077 = vmatpush1.msra.mxu0 0.0
    %1078 = vmatprep.subr.mxu0 0.0
    %1079 = vmatpush1.msra.mxu0 0.0
    %1080 = vmatprep.subr.mxu0 0.0
    %1081 = vmatpush1.msra.mxu0 0.0
    %1082 = vmatprep.subr.mxu0 0.0
    %1083 = vmatpush1.msra.mxu0 0.0
    %1084 = vmatprep.subr.mxu0 0.0
    %1085 = vmatpush1.msra.mxu0 0.0
    %1086 = vmatprep.subr.mxu0 0.0
    %1087 = vmatpush1.msra.mxu0 0.0
    %1088 = vmatprep.subr.mxu0 0.0
    %1089 = vmatpush1.msra.mxu0 0.0
    %1090 = vmatprep.subr.mxu0 0.0
    %1091 = vmatpush1.msra.mxu0 0.0
    %1092 = vmatprep.subr.mxu0 0.0
    %1093 = vmatpush1.msra.mxu0 %v203
    %1094 = vmatprep.subr.mxu0 0.0
    %1095 = vmatpush1.msra.mxu0 %v202
    %1096 = vmatprep.subr.mxu0 0.0
    %1097 = vmatpush1.msra.mxu0 %v201
    %1098 = vmatprep.subr.mxu0 0.0
    %1099 = vmatpush1.msra.mxu0 %v200
    %1100 = vmatprep.subr.mxu0 0.0
    %1101 = vmatpush1.msra.mxu0 %v199
    %1102 = vmatprep.subr.mxu0 0.0
    %1103 = vmatpush1.msra.mxu0 %v198
    %1104 = vmatprep.subr.mxu0 0.0
    %1105 = vmatpush1.msra.mxu0 %v197
    %1106 = vmatprep.subr.mxu0 0.0
    %1107 = vmatpush1.msra.mxu0 %v196
    %1108 = vmatprep.subr.mxu0 0.0
    %1109 = vmatpush2.msra.mxu0 0.0
    %1110 = vmatprep.subr.mxu0 0.0
    %1111 = vmatpush2.msra.mxu0 0.0
    %1112 = vmatprep.subr.mxu0 0.0
    %1113 = vmatpush2.msra.mxu0 0.0
    %1114 = vmatprep.subr.mxu0 0.0
    %1115 = vmatpush2.msra.mxu0 0.0
    %1116 = vmatprep.subr.mxu0 0.0
    %1117 = vmatpush2.msra.mxu0 0.0
    %1118 = vmatprep.subr.mxu0 0.0
    %1119 = vmatpush2.msra.mxu0 0.0
    %1120 = vmatprep.subr.mxu0 0.0
    %1121 = vmatpush2.msra.mxu0 0.0
    %1122 = vmatprep.subr.mxu0 0.0
    %1123 = vmatpush2.msra.mxu0 0.0
    %1124 = vmatprep.subr.mxu0 0.0
    %1125 = vmatpush2.msra.mxu0 0.0
    %1126 = vmatprep.subr.mxu0 0.0
    %1127 = vmatpush2.msra.mxu0 0.0
    %1128 = vmatprep.subr.mxu0 0.0
    %1129 = vmatpush2.msra.mxu0 0.0
    %1130 = vmatprep.subr.mxu0 0.0
    %1131 = vmatpush2.msra.mxu0 0.0
    %1132 = vmatprep.subr.mxu0 0.0
    %1133 = vmatpush2.msra.mxu0 0.0
    %1134 = vmatprep.subr.mxu0 0.0
    %1135 = vmatpush2.msra.mxu0 0.0
    %1136 = vmatprep.subr.mxu0 0.0
    %1137 = vmatpush2.msra.mxu0 0.0
    %1138 = vmatprep.subr.mxu0 0.0
    %1139 = vmatpush2.msra.mxu0 0.0
    %1140 = vmatprep.mubr.f32.mxu0 0.0
    %1141 = vmatmul.mubr.f32.gmra.mxu0 %v1074
    %v1142 = vpop.f32.mrf.mxu0
    %v1143 = vadd.f32 %v216, %v1142
    %v1144 = vpop.f32.mrf.mxu0
    %1145 = vdwg.mxu0
    %v1146 = vxor.u32 %v1143, 2147483648
    %v1147 = vmul.f32 %v1146, 1.442695
    %v1148 = vpow.pop %v1147
    %v1149 = vadd.f32 %v1148, 1.0
    %v1150 = vrcp.pop %v1149
    %v1151 = vmul.f32 1.0, %v1150
    %v1152 = vtanh.pop %v1143
    %v1153 = vsel %vm222, %v1152, %v1151
    %v1154 = vmul.f32 %v1153, %v842
    %1156 = vrot.lane.b32.xlu0 %v1153, 64
    %v1157 = vpop.permute.xlu0 %1156
    %v1159 = vmul.f32 %v1153, %v1157
    %1161 = vrot.lane.b32.xlu0 %v1159, 32
    %v1162 = vpop.permute.xlu0 %1161
    %v1164 = vadd.f32 %v1154, %v1162
    %v1165 = vtanh.pop %v1164
    %1167 = vrot.lane.b32.xlu0 %v1165, 64
    %v1168 = vpop.permute.xlu0 %1167
    %v1170 = vmul.f32 %v1153, %v1168
    %v1171 = vrot.slane %v955, 4
    %1172 = vrot.lane.b32.xlu0 %v1171, 32
    %v1173 = vpop.permute.xlu0 %1172
    %v1174 = vsel %vm223, %v1173, 0
    %1176 = vmatprep.subr.mxu0 0.0
    %1177 = vmatpush1.msra.mxu0 0.0
    %1178 = vmatprep.subr.mxu0 0.0
    %1179 = vmatpush1.msra.mxu0 0.0
    %1180 = vmatprep.subr.mxu0 0.0
    %1181 = vmatpush1.msra.mxu0 0.0
    %1182 = vmatprep.subr.mxu0 0.0
    %1183 = vmatpush1.msra.mxu0 0.0
    %1184 = vmatprep.subr.mxu0 0.0
    %1185 = vmatpush1.msra.mxu0 0.0
    %1186 = vmatprep.subr.mxu0 0.0
    %1187 = vmatpush1.msra.mxu0 0.0
    %1188 = vmatprep.subr.mxu0 0.0
    %1189 = vmatpush1.msra.mxu0 0.0
    %1190 = vmatprep.subr.mxu0 0.0
    %1191 = vmatpush1.msra.mxu0 0.0
    %1192 = vmatprep.subr.mxu0 0.0
    %1193 = vmatpush1.msra.mxu0 0.0
    %1194 = vmatprep.subr.mxu0 0.0
    %1195 = vmatpush1.msra.mxu0 0.0
    %1196 = vmatprep.subr.mxu0 0.0
    %1197 = vmatpush1.msra.mxu0 0.0
    %1198 = vmatprep.subr.mxu0 0.0
    %1199 = vmatpush1.msra.mxu0 0.0
    %1200 = vmatprep.subr.mxu0 0.0
    %1201 = vmatpush1.msra.mxu0 %v187
    %1202 = vmatprep.subr.mxu0 0.0
    %1203 = vmatpush1.msra.mxu0 %v186
    %1204 = vmatprep.subr.mxu0 0.0
    %1205 = vmatpush1.msra.mxu0 %v185
    %1206 = vmatprep.subr.mxu0 0.0
    %1207 = vmatpush1.msra.mxu0 %v184
    %1208 = vmatprep.subr.mxu0 0.0
    %1209 = vmatpush2.msra.mxu0 0.0
    %1210 = vmatprep.subr.mxu0 0.0
    %1211 = vmatpush2.msra.mxu0 0.0
    %1212 = vmatprep.subr.mxu0 0.0
    %1213 = vmatpush2.msra.mxu0 0.0
    %1214 = vmatprep.subr.mxu0 0.0
    %1215 = vmatpush2.msra.mxu0 0.0
    %1216 = vmatprep.subr.mxu0 0.0
    %1217 = vmatpush2.msra.mxu0 0.0
    %1218 = vmatprep.subr.mxu0 0.0
    %1219 = vmatpush2.msra.mxu0 0.0
    %1220 = vmatprep.subr.mxu0 0.0
    %1221 = vmatpush2.msra.mxu0 0.0
    %1222 = vmatprep.subr.mxu0 0.0
    %1223 = vmatpush2.msra.mxu0 0.0
    %1224 = vmatprep.subr.mxu0 0.0
    %1225 = vmatpush2.msra.mxu0 0.0
    %1226 = vmatprep.subr.mxu0 0.0
    %1227 = vmatpush2.msra.mxu0 0.0
    %1228 = vmatprep.subr.mxu0 0.0
    %1229 = vmatpush2.msra.mxu0 0.0
    %1230 = vmatprep.subr.mxu0 0.0
    %1231 = vmatpush2.msra.mxu0 0.0
    %1232 = vmatprep.subr.mxu0 0.0
    %1233 = vmatpush2.msra.mxu0 0.0
    %1234 = vmatprep.subr.mxu0 0.0
    %1235 = vmatpush2.msra.mxu0 0.0
    %1236 = vmatprep.subr.mxu0 0.0
    %1237 = vmatpush2.msra.mxu0 0.0
    %1238 = vmatprep.subr.mxu0 0.0
    %1239 = vmatpush2.msra.mxu0 0.0
    %1240 = vmatprep.mubr.f32.mxu0 0.0
    %1241 = vmatmul.mubr.f32.gmra.mxu0 %v1174
    %v1242 = vpop.f32.mrf.mxu0
    %v1243 = vadd.f32 0.0, %v1242
    %v1244 = vpop.f32.mrf.mxu0
    %1245 = vdwg.mxu0
    %v1247 = vrot.slane %v1243, 2
    %v1249 = vadd.f32 %v176, %v1247
    %v1250 = vxor.u32 %v1249, 2147483648
    %v1251 = vmul.f32 %v1250, 1.442695
    %v1252 = vpow.pop %v1251
    %v1253 = vadd.f32 %v1252, 1.0
    %v1254 = vrcp.pop %v1253
    %v1255 = vmul.f32 1.0, %v1254
    %v1256 = vtanh.pop %v1249
    %v1257 = vsel %vm222, %v1256, %v1255
    %v1259 = vrot.slane %v949, 6
    %v1261 = vmul.f32 %v1257, %v1259
    %1263 = vrot.lane.b32.xlu0 %v1257, 64
    %v1264 = vpop.permute.xlu0 %1263
    %v1266 = vmul.f32 %v1257, %v1264
    %1268 = vrot.lane.b32.xlu0 %v1266, 32
    %v1269 = vpop.permute.xlu0 %1268
    %v1271 = vadd.f32 %v1261, %v1269
    %v1272 = vtanh.pop %v1271
    %1274 = vrot.lane.b32.xlu0 %v1272, 64
    %v1275 = vpop.permute.xlu0 %1274
    %v1277 = vmul.f32 %v1257, %v1275
    %1279 = vrot.lane.b32.xlu0 %v1277, 32
    %v1280 = vpop.permute.xlu0 %1279
    %v1282 = vrot.slane %v1063, 2
    %1283 = vrot.lane.b32.xlu0 %v1282, 64
    %v1284 = vpop.permute.xlu0 %1283
    %v1286 = vsel %vm223, %v1280, %v1284
    %v1288 = vrot.slane %v1286, 6
    %v1289 = vsel %vm328, %v1288, 0
    %1291 = vmatprep.subr.mxu0 0.0
    %1292 = vmatpush1.msra.mxu0 0.0
    %1293 = vmatprep.subr.mxu0 0.0
    %1294 = vmatpush1.msra.mxu0 0.0
    %1295 = vmatprep.subr.mxu0 0.0
    %1296 = vmatpush1.msra.mxu0 0.0
    %1297 = vmatprep.subr.mxu0 0.0
    %1298 = vmatpush1.msra.mxu0 0.0
    %1299 = vmatprep.subr.mxu0 0.0
    %1300 = vmatpush1.msra.mxu0 0.0
    %1301 = vmatprep.subr.mxu0 0.0
    %1302 = vmatpush1.msra.mxu0 0.0
    %1303 = vmatprep.subr.mxu0 0.0
    %1304 = vmatpush1.msra.mxu0 0.0
    %1305 = vmatprep.subr.mxu0 0.0
    %1306 = vmatpush1.msra.mxu0 0.0
    %1307 = vmatprep.subr.mxu0 0.0
    %1308 = vmatpush1.msra.mxu0 %v195
    %1309 = vmatprep.subr.mxu0 0.0
    %1310 = vmatpush1.msra.mxu0 %v194
    %1311 = vmatprep.subr.mxu0 0.0
    %1312 = vmatpush1.msra.mxu0 %v193
    %1313 = vmatprep.subr.mxu0 0.0
    %1314 = vmatpush1.msra.mxu0 %v192
    %1315 = vmatprep.subr.mxu0 0.0
    %1316 = vmatpush1.msra.mxu0 %v191
    %1317 = vmatprep.subr.mxu0 0.0
    %1318 = vmatpush1.msra.mxu0 %v190
    %1319 = vmatprep.subr.mxu0 0.0
    %1320 = vmatpush1.msra.mxu0 %v189
    %1321 = vmatprep.subr.mxu0 0.0
    %1322 = vmatpush1.msra.mxu0 %v188
    %1323 = vmatprep.subr.mxu0 0.0
    %1324 = vmatpush2.msra.mxu0 0.0
    %1325 = vmatprep.subr.mxu0 0.0
    %1326 = vmatpush2.msra.mxu0 0.0
    %1327 = vmatprep.subr.mxu0 0.0
    %1328 = vmatpush2.msra.mxu0 0.0
    %1329 = vmatprep.subr.mxu0 0.0
    %1330 = vmatpush2.msra.mxu0 0.0
    %1331 = vmatprep.subr.mxu0 0.0
    %1332 = vmatpush2.msra.mxu0 0.0
    %1333 = vmatprep.subr.mxu0 0.0
    %1334 = vmatpush2.msra.mxu0 0.0
    %1335 = vmatprep.subr.mxu0 0.0
    %1336 = vmatpush2.msra.mxu0 0.0
    %1337 = vmatprep.subr.mxu0 0.0
    %1338 = vmatpush2.msra.mxu0 0.0
    %1339 = vmatprep.subr.mxu0 0.0
    %1340 = vmatpush2.msra.mxu0 0.0
    %1341 = vmatprep.subr.mxu0 0.0
    %1342 = vmatpush2.msra.mxu0 0.0
    %1343 = vmatprep.subr.mxu0 0.0
    %1344 = vmatpush2.msra.mxu0 0.0
    %1345 = vmatprep.subr.mxu0 0.0
    %1346 = vmatpush2.msra.mxu0 0.0
    %1347 = vmatprep.subr.mxu0 0.0
    %1348 = vmatpush2.msra.mxu0 0.0
    %1349 = vmatprep.subr.mxu0 0.0
    %1350 = vmatpush2.msra.mxu0 0.0
    %1351 = vmatprep.subr.mxu0 0.0
    %1352 = vmatpush2.msra.mxu0 0.0
    %1353 = vmatprep.subr.mxu0 0.0
    %1354 = vmatpush2.msra.mxu0 0.0
    %1355 = vmatprep.mubr.f32.mxu0 0.0
    %1356 = vmatmul.mubr.f32.gmra.mxu0 %v1289
    %v1357 = vpop.f32.mrf.mxu0
    %v1358 = vadd.f32 %v209, %v1357
    %v1359 = vpop.f32.mrf.mxu0
    %1360 = vdwg.mxu0
    %v1361 = vxor.u32 %v1358, 2147483648
    %v1362 = vmul.f32 %v1361, 1.442695
    %v1363 = vpow.pop %v1362
    %v1364 = vadd.f32 %v1363, 1.0
    %v1365 = vrcp.pop %v1364
    %v1366 = vmul.f32 1.0, %v1365
    %v1367 = vtanh.pop %v1358
    %v1368 = vsel %vm222, %v1367, %v1366
    %v1369 = vmul.f32 %v1368, %v1057
    %1371 = vrot.lane.b32.xlu0 %v1368, 64
    %v1372 = vpop.permute.xlu0 %1371
    %v1374 = vmul.f32 %v1368, %v1372
    %1376 = vrot.lane.b32.xlu0 %v1374, 32
    %v1377 = vpop.permute.xlu0 %1376
    %v1379 = vadd.f32 %v1369, %v1377
    %v1380 = vtanh.pop %v1379
    %1382 = vrot.lane.b32.xlu0 %v1380, 64
    %v1383 = vpop.permute.xlu0 %1382
    %v1385 = vmul.f32 %v1368, %v1383
    %1387 = vrot.lane.b32.xlu0 %v1385, 32
    %v1388 = vpop.permute.xlu0 %1387
    %1391 = vrot.lane.b32.xlu0 %v1170, 64
    %v1392 = vpop.permute.xlu0 %1391
    %v1394 = vsel %vm223, %v1388, %v1392
    %v1396 = vsel %vm328, %v1394, 0
    %1398 = vmatprep.subr.mxu0 0.0
    %1399 = vmatpush1.msra.mxu0 0.0
    %1400 = vmatprep.subr.mxu0 0.0
    %1401 = vmatpush1.msra.mxu0 0.0
    %1402 = vmatprep.subr.mxu0 0.0
    %1403 = vmatpush1.msra.mxu0 0.0
    %1404 = vmatprep.subr.mxu0 0.0
    %1405 = vmatpush1.msra.mxu0 0.0
    %1406 = vmatprep.subr.mxu0 0.0
    %1407 = vmatpush1.msra.mxu0 0.0
    %1408 = vmatprep.subr.mxu0 0.0
    %1409 = vmatpush1.msra.mxu0 0.0
    %1410 = vmatprep.subr.mxu0 0.0
    %1411 = vmatpush1.msra.mxu0 0.0
    %1412 = vmatprep.subr.mxu0 0.0
    %1413 = vmatpush1.msra.mxu0 0.0
    %1414 = vmatprep.subr.mxu0 0.0
    %1415 = vmatpush1.msra.mxu0 %v203
    %1416 = vmatprep.subr.mxu0 0.0
    %1417 = vmatpush1.msra.mxu0 %v202
    %1418 = vmatprep.subr.mxu0 0.0
    %1419 = vmatpush1.msra.mxu0 %v201
    %1420 = vmatprep.subr.mxu0 0.0
    %1421 = vmatpush1.msra.mxu0 %v200
    %1422 = vmatprep.subr.mxu0 0.0
    %1423 = vmatpush1.msra.mxu0 %v199
    %1424 = vmatprep.subr.mxu0 0.0
    %1425 = vmatpush1.msra.mxu0 %v198
    %1426 = vmatprep.subr.mxu0 0.0
    %1427 = vmatpush1.msra.mxu0 %v197
    %1428 = vmatprep.subr.mxu0 0.0
    %1429 = vmatpush1.msra.mxu0 %v196
    %1430 = vmatprep.subr.mxu0 0.0
    %1431 = vmatpush2.msra.mxu0 0.0
    %1432 = vmatprep.subr.mxu0 0.0
    %1433 = vmatpush2.msra.mxu0 0.0
    %1434 = vmatprep.subr.mxu0 0.0
    %1435 = vmatpush2.msra.mxu0 0.0
    %1436 = vmatprep.subr.mxu0 0.0
    %1437 = vmatpush2.msra.mxu0 0.0
    %1438 = vmatprep.subr.mxu0 0.0
    %1439 = vmatpush2.msra.mxu0 0.0
    %1440 = vmatprep.subr.mxu0 0.0
    %1441 = vmatpush2.msra.mxu0 0.0
    %1442 = vmatprep.subr.mxu0 0.0
    %1443 = vmatpush2.msra.mxu0 0.0
    %1444 = vmatprep.subr.mxu0 0.0
    %1445 = vmatpush2.msra.mxu0 0.0
    %1446 = vmatprep.subr.mxu0 0.0
    %1447 = vmatpush2.msra.mxu0 0.0
    %1448 = vmatprep.subr.mxu0 0.0
    %1449 = vmatpush2.msra.mxu0 0.0
    %1450 = vmatprep.subr.mxu0 0.0
    %1451 = vmatpush2.msra.mxu0 0.0
    %1452 = vmatprep.subr.mxu0 0.0
    %1453 = vmatpush2.msra.mxu0 0.0
    %1454 = vmatprep.subr.mxu0 0.0
    %1455 = vmatpush2.msra.mxu0 0.0
    %1456 = vmatprep.subr.mxu0 0.0
    %1457 = vmatpush2.msra.mxu0 0.0
    %1458 = vmatprep.subr.mxu0 0.0
    %1459 = vmatpush2.msra.mxu0 0.0
    %1460 = vmatprep.subr.mxu0 0.0
    %1461 = vmatpush2.msra.mxu0 0.0
    %1462 = vmatprep.mubr.f32.mxu0 0.0
    %1463 = vmatmul.mubr.f32.gmra.mxu0 %v1396
    %v1464 = vpop.f32.mrf.mxu0
    %v1465 = vadd.f32 %v216, %v1464
    %v1466 = vpop.f32.mrf.mxu0
    %1467 = vdwg.mxu0
    %v1468 = vxor.u32 %v1465, 2147483648
    %v1469 = vmul.f32 %v1468, 1.442695
    %v1470 = vpow.pop %v1469
    %v1471 = vadd.f32 %v1470, 1.0
    %v1472 = vrcp.pop %v1471
    %v1473 = vmul.f32 1.0, %v1472
    %v1474 = vtanh.pop %v1465
    %v1475 = vsel %vm222, %v1474, %v1473
    %v1476 = vmul.f32 %v1475, %v1164
    %1478 = vrot.lane.b32.xlu0 %v1475, 64
    %v1479 = vpop.permute.xlu0 %1478
    %v1481 = vmul.f32 %v1475, %v1479
    %1483 = vrot.lane.b32.xlu0 %v1481, 32
    %v1484 = vpop.permute.xlu0 %1483
    %v1486 = vadd.f32 %v1476, %v1484
    %v1487 = vtanh.pop %v1486
    %1489 = vrot.lane.b32.xlu0 %v1487, 64
    %v1490 = vpop.permute.xlu0 %1489
    %v1492 = vmul.f32 %v1475, %v1490
    %v1493 = vrot.slane %v1277, 6
    %1494 = vrot.lane.b32.xlu0 %v1493, 32
    %v1495 = vpop.permute.xlu0 %1494
    %v1496 = vsel %vm223, %v1495, 0
    %1498 = vmatprep.subr.mxu0 0.0
    %1499 = vmatpush1.msra.mxu0 0.0
    %1500 = vmatprep.subr.mxu0 0.0
    %1501 = vmatpush1.msra.mxu0 0.0
    %1502 = vmatprep.subr.mxu0 0.0
    %1503 = vmatpush1.msra.mxu0 0.0
    %1504 = vmatprep.subr.mxu0 0.0
    %1505 = vmatpush1.msra.mxu0 0.0
    %1506 = vmatprep.subr.mxu0 0.0
    %1507 = vmatpush1.msra.mxu0 0.0
    %1508 = vmatprep.subr.mxu0 0.0
    %1509 = vmatpush1.msra.mxu0 0.0
    %1510 = vmatprep.subr.mxu0 0.0
    %1511 = vmatpush1.msra.mxu0 0.0
    %1512 = vmatprep.subr.mxu0 0.0
    %1513 = vmatpush1.msra.mxu0 0.0
    %1514 = vmatprep.subr.mxu0 0.0
    %1515 = vmatpush1.msra.mxu0 0.0
    %1516 = vmatprep.subr.mxu0 0.0
    %1517 = vmatpush1.msra.mxu0 0.0
    %1518 = vmatprep.subr.mxu0 0.0
    %1519 = vmatpush1.msra.mxu0 0.0
    %1520 = vmatprep.subr.mxu0 0.0
    %1521 = vmatpush1.msra.mxu0 0.0
    %1522 = vmatprep.subr.mxu0 0.0
    %1523 = vmatpush1.msra.mxu0 %v187
    %1524 = vmatprep.subr.mxu0 0.0
    %1525 = vmatpush1.msra.mxu0 %v186
    %1526 = vmatprep.subr.mxu0 0.0
    %1527 = vmatpush1.msra.mxu0 %v185
    %1528 = vmatprep.subr.mxu0 0.0
    %1529 = vmatpush1.msra.mxu0 %v184
    %1530 = vmatprep.subr.mxu0 0.0
    %1531 = vmatpush2.msra.mxu0 0.0
    %1532 = vmatprep.subr.mxu0 0.0
    %1533 = vmatpush2.msra.mxu0 0.0
    %1534 = vmatprep.subr.mxu0 0.0
    %1535 = vmatpush2.msra.mxu0 0.0
    %1536 = vmatprep.subr.mxu0 0.0
    %1537 = vmatpush2.msra.mxu0 0.0
    %1538 = vmatprep.subr.mxu0 0.0
    %1539 = vmatpush2.msra.mxu0 0.0
    %1540 = vmatprep.subr.mxu0 0.0
    %1541 = vmatpush2.msra.mxu0 0.0
    %1542 = vmatprep.subr.mxu0 0.0
    %1543 = vmatpush2.msra.mxu0 0.0
    %1544 = vmatprep.subr.mxu0 0.0
    %1545 = vmatpush2.msra.mxu0 0.0
    %1546 = vmatprep.subr.mxu0 0.0
    %1547 = vmatpush2.msra.mxu0 0.0
    %1548 = vmatprep.subr.mxu0 0.0
    %1549 = vmatpush2.msra.mxu0 0.0
    %1550 = vmatprep.subr.mxu0 0.0
    %1551 = vmatpush2.msra.mxu0 0.0
    %1552 = vmatprep.subr.mxu0 0.0
    %1553 = vmatpush2.msra.mxu0 0.0
    %1554 = vmatprep.subr.mxu0 0.0
    %1555 = vmatpush2.msra.mxu0 0.0
    %1556 = vmatprep.subr.mxu0 0.0
    %1557 = vmatpush2.msra.mxu0 0.0
    %1558 = vmatprep.subr.mxu0 0.0
    %1559 = vmatpush2.msra.mxu0 0.0
    %1560 = vmatprep.subr.mxu0 0.0
    %1561 = vmatpush2.msra.mxu0 0.0
    %1562 = vmatprep.mubr.f32.mxu0 0.0
    %1563 = vmatmul.mubr.f32.gmra.mxu0 %v1496
    %v1564 = vpop.f32.mrf.mxu0
    %v1565 = vadd.f32 0.0, %v1564
    %v1566 = vpop.f32.mrf.mxu0
    %1567 = vdwg.mxu0
    %v1568 = vadd.f32 %v181, %v1565
    %v1569 = vxor.u32 %v1568, 2147483648
    %v1570 = vmul.f32 %v1569, 1.442695
    %v1571 = vpow.pop %v1570
    %v1572 = vadd.f32 %v1571, 1.0
    %v1573 = vrcp.pop %v1572
    %v1574 = vmul.f32 1.0, %v1573
    %v1575 = vtanh.pop %v1568
    %v1576 = vsel %vm222, %v1575, %v1574
    %v1578 = vrot.slane %v1271, 6
    %v1580 = vmul.f32 %v1576, %v1578
    %1582 = vrot.lane.b32.xlu0 %v1576, 64
    %v1583 = vpop.permute.xlu0 %1582
    %v1585 = vmul.f32 %v1576, %v1583
    %1587 = vrot.lane.b32.xlu0 %v1585, 32
    %v1588 = vpop.permute.xlu0 %1587
    %v1590 = vadd.f32 %v1580, %v1588
    %v1591 = vtanh.pop %v1590
    %1593 = vrot.lane.b32.xlu0 %v1591, 64
    %v1594 = vpop.permute.xlu0 %1593
    %v1596 = vmul.f32 %v1576, %v1594
    %1598 = vrot.lane.b32.xlu0 %v1596, 32
    %v1599 = vpop.permute.xlu0 %1598
    %1601 = vrot.lane.b32.xlu0 %v1385, 64
    %v1602 = vpop.permute.xlu0 %1601
    %v1604 = vsel %vm223, %v1599, %v1602
    %v1606 = vsel %vm328, %v1604, 0
    %1608 = vmatprep.subr.mxu0 0.0
    %1609 = vmatpush1.msra.mxu0 0.0
    %1610 = vmatprep.subr.mxu0 0.0
    %1611 = vmatpush1.msra.mxu0 0.0
    %1612 = vmatprep.subr.mxu0 0.0
    %1613 = vmatpush1.msra.mxu0 0.0
    %1614 = vmatprep.subr.mxu0 0.0
    %1615 = vmatpush1.msra.mxu0 0.0
    %1616 = vmatprep.subr.mxu0 0.0
    %1617 = vmatpush1.msra.mxu0 0.0
    %1618 = vmatprep.subr.mxu0 0.0
    %1619 = vmatpush1.msra.mxu0 0.0
    %1620 = vmatprep.subr.mxu0 0.0
    %1621 = vmatpush1.msra.mxu0 0.0
    %1622 = vmatprep.subr.mxu0 0.0
    %1623 = vmatpush1.msra.mxu0 0.0
    %1624 = vmatprep.subr.mxu0 0.0
    %1625 = vmatpush1.msra.mxu0 %v195
    %1626 = vmatprep.subr.mxu0 0.0
    %1627 = vmatpush1.msra.mxu0 %v194
    %1628 = vmatprep.subr.mxu0 0.0
    %1629 = vmatpush1.msra.mxu0 %v193
    %1630 = vmatprep.subr.mxu0 0.0
    %1631 = vmatpush1.msra.mxu0 %v192
    %1632 = vmatprep.subr.mxu0 0.0
    %1633 = vmatpush1.msra.mxu0 %v191
    %1634 = vmatprep.subr.mxu0 0.0
    %1635 = vmatpush1.msra.mxu0 %v190
    %1636 = vmatprep.subr.mxu0 0.0
    %1637 = vmatpush1.msra.mxu0 %v189
    %1638 = vmatprep.subr.mxu0 0.0
    %1639 = vmatpush1.msra.mxu0 %v188
    %1640 = vmatprep.subr.mxu0 0.0
    %1641 = vmatpush2.msra.mxu0 0.0
    %1642 = vmatprep.subr.mxu0 0.0
    %1643 = vmatpush2.msra.mxu0 0.0
    %1644 = vmatprep.subr.mxu0 0.0
    %1645 = vmatpush2.msra.mxu0 0.0
    %1646 = vmatprep.subr.mxu0 0.0
    %1647 = vmatpush2.msra.mxu0 0.0
    %1648 = vmatprep.subr.mxu0 0.0
    %1649 = vmatpush2.msra.mxu0 0.0
    %1650 = vmatprep.subr.mxu0 0.0
    %1651 = vmatpush2.msra.mxu0 0.0
    %1652 = vmatprep.subr.mxu0 0.0
    %1653 = vmatpush2.msra.mxu0 0.0
    %1654 = vmatprep.subr.mxu0 0.0
    %1655 = vmatpush2.msra.mxu0 0.0
    %1656 = vmatprep.subr.mxu0 0.0
    %1657 = vmatpush2.msra.mxu0 0.0
    %1658 = vmatprep.subr.mxu0 0.0
    %1659 = vmatpush2.msra.mxu0 0.0
    %1660 = vmatprep.subr.mxu0 0.0
    %1661 = vmatpush2.msra.mxu0 0.0
    %1662 = vmatprep.subr.mxu0 0.0
    %1663 = vmatpush2.msra.mxu0 0.0
    %1664 = vmatprep.subr.mxu0 0.0
    %1665 = vmatpush2.msra.mxu0 0.0
    %1666 = vmatprep.subr.mxu0 0.0
    %1667 = vmatpush2.msra.mxu0 0.0
    %1668 = vmatprep.subr.mxu0 0.0
    %1669 = vmatpush2.msra.mxu0 0.0
    %1670 = vmatprep.subr.mxu0 0.0
    %1671 = vmatpush2.msra.mxu0 0.0
    %1672 = vmatprep.mubr.f32.mxu0 0.0
    %1673 = vmatmul.mubr.f32.gmra.mxu0 %v1606
    %v1674 = vpop.f32.mrf.mxu0
    %v1675 = vadd.f32 %v209, %v1674
    %v1676 = vpop.f32.mrf.mxu0
    %1677 = vdwg.mxu0
    %v1678 = vxor.u32 %v1675, 2147483648
    %v1679 = vmul.f32 %v1678, 1.442695
    %v1680 = vpow.pop %v1679
    %v1681 = vadd.f32 %v1680, 1.0
    %v1682 = vrcp.pop %v1681
    %v1683 = vmul.f32 1.0, %v1682
    %v1684 = vtanh.pop %v1675
    %v1685 = vsel %vm222, %v1684, %v1683
    %v1686 = vmul.f32 %v1685, %v1379
    %1688 = vrot.lane.b32.xlu0 %v1685, 64
    %v1689 = vpop.permute.xlu0 %1688
    %v1691 = vmul.f32 %v1685, %v1689
    %1693 = vrot.lane.b32.xlu0 %v1691, 32
    %v1694 = vpop.permute.xlu0 %1693
    %v1696 = vadd.f32 %v1686, %v1694
    %v1697 = vtanh.pop %v1696
    %1699 = vrot.lane.b32.xlu0 %v1697, 64
    %v1700 = vpop.permute.xlu0 %1699
    %v1702 = vmul.f32 %v1685, %v1700
    %1704 = vrot.lane.b32.xlu0 %v1702, 32
    %v1705 = vpop.permute.xlu0 %1704
    %1708 = vrot.lane.b32.xlu0 %v1492, 64
    %v1709 = vpop.permute.xlu0 %1708
    %v1711 = vsel %vm223, %v1705, %v1709
    %v1713 = vsel %vm328, %v1711, 0
    %1715 = vmatprep.subr.mxu0 0.0
    %1716 = vmatpush1.msra.mxu0 0.0
    %1717 = vmatprep.subr.mxu0 0.0
    %1718 = vmatpush1.msra.mxu0 0.0
    %1719 = vmatprep.subr.mxu0 0.0
    %1720 = vmatpush1.msra.mxu0 0.0
    %1721 = vmatprep.subr.mxu0 0.0
    %1722 = vmatpush1.msra.mxu0 0.0
    %1723 = vmatprep.subr.mxu0 0.0
    %1724 = vmatpush1.msra.mxu0 0.0
    %1725 = vmatprep.subr.mxu0 0.0
    %1726 = vmatpush1.msra.mxu0 0.0
    %1727 = vmatprep.subr.mxu0 0.0
    %1728 = vmatpush1.msra.mxu0 0.0
    %1729 = vmatprep.subr.mxu0 0.0
    %1730 = vmatpush1.msra.mxu0 0.0
    %1731 = vmatprep.subr.mxu0 0.0
    %1732 = vmatpush1.msra.mxu0 %v203
    %1733 = vmatprep.subr.mxu0 0.0
    %1734 = vmatpush1.msra.mxu0 %v202
    %1735 = vmatprep.subr.mxu0 0.0
    %1736 = vmatpush1.msra.mxu0 %v201
    %1737 = vmatprep.subr.mxu0 0.0
    %1738 = vmatpush1.msra.mxu0 %v200
    %1739 = vmatprep.subr.mxu0 0.0
    %1740 = vmatpush1.msra.mxu0 %v199
    %1741 = vmatprep.subr.mxu0 0.0
    %1742 = vmatpush1.msra.mxu0 %v198
    %1743 = vmatprep.subr.mxu0 0.0
    %1744 = vmatpush1.msra.mxu0 %v197
    %1745 = vmatprep.subr.mxu0 0.0
    %1746 = vmatpush1.msra.mxu0 %v196
    %1747 = vmatprep.subr.mxu0 0.0
    %1748 = vmatpush2.msra.mxu0 0.0
    %1749 = vmatprep.subr.mxu0 0.0
    %1750 = vmatpush2.msra.mxu0 0.0
    %1751 = vmatprep.subr.mxu0 0.0
    %1752 = vmatpush2.msra.mxu0 0.0
    %1753 = vmatprep.subr.mxu0 0.0
    %1754 = vmatpush2.msra.mxu0 0.0
    %1755 = vmatprep.subr.mxu0 0.0
    %1756 = vmatpush2.msra.mxu0 0.0
    %1757 = vmatprep.subr.mxu0 0.0
    %1758 = vmatpush2.msra.mxu0 0.0
    %1759 = vmatprep.subr.mxu0 0.0
    %1760 = vmatpush2.msra.mxu0 0.0
    %1761 = vmatprep.subr.mxu0 0.0
    %1762 = vmatpush2.msra.mxu0 0.0
    %1763 = vmatprep.subr.mxu0 0.0
    %1764 = vmatpush2.msra.mxu0 0.0
    %1765 = vmatprep.subr.mxu0 0.0
    %1766 = vmatpush2.msra.mxu0 0.0
    %1767 = vmatprep.subr.mxu0 0.0
    %1768 = vmatpush2.msra.mxu0 0.0
    %1769 = vmatprep.subr.mxu0 0.0
    %1770 = vmatpush2.msra.mxu0 0.0
    %1771 = vmatprep.subr.mxu0 0.0
    %1772 = vmatpush2.msra.mxu0 0.0
    %1773 = vmatprep.subr.mxu0 0.0
    %1774 = vmatpush2.msra.mxu0 0.0
    %1775 = vmatprep.subr.mxu0 0.0
    %1776 = vmatpush2.msra.mxu0 0.0
    %1777 = vmatprep.subr.mxu0 0.0
    %1778 = vmatpush2.msra.mxu0 0.0
    %1779 = vmatprep.mubr.f32.mxu0 0.0
    %1780 = vmatmul.mubr.f32.gmra.mxu0 %v1713
    %v1781 = vpop.f32.mrf.mxu0
    %v1782 = vadd.f32 %v216, %v1781
    %v1783 = vpop.f32.mrf.mxu0
    %1784 = vdwg.mxu0
    %v1785 = vxor.u32 %v1782, 2147483648
    %v1786 = vmul.f32 %v1785, 1.442695
    %v1787 = vpow.pop %v1786
    %v1788 = vadd.f32 %v1787, 1.0
    %v1789 = vrcp.pop %v1788
    %v1790 = vmul.f32 1.0, %v1789
    %v1791 = vtanh.pop %v1782
    %v1792 = vsel %vm222, %v1791, %v1790
    %v1793 = vmul.f32 %v1792, %v1486
    %1795 = vrot.lane.b32.xlu0 %v1792, 64
    %v1796 = vpop.permute.xlu0 %1795
    %v1798 = vmul.f32 %v1792, %v1796
    %1800 = vrot.lane.b32.xlu0 %v1798, 32
    %v1801 = vpop.permute.xlu0 %1800
    %v1803 = vadd.f32 %v1793, %v1801
    %v1804 = vtanh.pop %v1803
    %1806 = vrot.lane.b32.xlu0 %v1804, 64
    %v1807 = vpop.permute.xlu0 %1806
    %v1809 = vmul.f32 %v1792, %v1807
    %v1810 = vsel %vm223, %v1599, 0
    %1812 = vmatprep.subr.mxu0 0.0
    %1813 = vmatpush1.msra.mxu0 0.0
    %1814 = vmatprep.subr.mxu0 0.0
    %1815 = vmatpush1.msra.mxu0 0.0
    %1816 = vmatprep.subr.mxu0 0.0
    %1817 = vmatpush1.msra.mxu0 0.0
    %1818 = vmatprep.subr.mxu0 0.0
    %1819 = vmatpush1.msra.mxu0 0.0
    %1820 = vmatprep.subr.mxu0 0.0
    %1821 = vmatpush1.msra.mxu0 0.0
    %1822 = vmatprep.subr.mxu0 0.0
    %1823 = vmatpush1.msra.mxu0 0.0
    %1824 = vmatprep.subr.mxu0 0.0
    %1825 = vmatpush1.msra.mxu0 0.0
    %1826 = vmatprep.subr.mxu0 0.0
    %1827 = vmatpush1.msra.mxu0 0.0
    %1828 = vmatprep.subr.mxu0 0.0
    %1829 = vmatpush1.msra.mxu0 0.0
    %1830 = vmatprep.subr.mxu0 0.0
    %1831 = vmatpush1.msra.mxu0 0.0
    %1832 = vmatprep.subr.mxu0 0.0
    %1833 = vmatpush1.msra.mxu0 0.0
    %1834 = vmatprep.subr.mxu0 0.0
    %1835 = vmatpush1.msra.mxu0 0.0
    %1836 = vmatprep.subr.mxu0 0.0
    %1837 = vmatpush1.msra.mxu0 %v187
    %1838 = vmatprep.subr.mxu0 0.0
    %1839 = vmatpush1.msra.mxu0 %v186
    %1840 = vmatprep.subr.mxu0 0.0
    %1841 = vmatpush1.msra.mxu0 %v185
    %1842 = vmatprep.subr.mxu0 0.0
    %1843 = vmatpush1.msra.mxu0 %v184
    %1844 = vmatprep.subr.mxu0 0.0
    %1845 = vmatpush2.msra.mxu0 0.0
    %1846 = vmatprep.subr.mxu0 0.0
    %1847 = vmatpush2.msra.mxu0 0.0
    %1848 = vmatprep.subr.mxu0 0.0
    %1849 = vmatpush2.msra.mxu0 0.0
    %1850 = vmatprep.subr.mxu0 0.0
    %1851 = vmatpush2.msra.mxu0 0.0
    %1852 = vmatprep.subr.mxu0 0.0
    %1853 = vmatpush2.msra.mxu0 0.0
    %1854 = vmatprep.subr.mxu0 0.0
    %1855 = vmatpush2.msra.mxu0 0.0
    %1856 = vmatprep.subr.mxu0 0.0
    %1857 = vmatpush2.msra.mxu0 0.0
    %1858 = vmatprep.subr.mxu0 0.0
    %1859 = vmatpush2.msra.mxu0 0.0
    %1860 = vmatprep.subr.mxu0 0.0
    %1861 = vmatpush2.msra.mxu0 0.0
    %1862 = vmatprep.subr.mxu0 0.0
    %1863 = vmatpush2.msra.mxu0 0.0
    %1864 = vmatprep.subr.mxu0 0.0
    %1865 = vmatpush2.msra.mxu0 0.0
    %1866 = vmatprep.subr.mxu0 0.0
    %1867 = vmatpush2.msra.mxu0 0.0
    %1868 = vmatprep.subr.mxu0 0.0
    %1869 = vmatpush2.msra.mxu0 0.0
    %1870 = vmatprep.subr.mxu0 0.0
    %1871 = vmatpush2.msra.mxu0 0.0
    %1872 = vmatprep.subr.mxu0 0.0
    %1873 = vmatpush2.msra.mxu0 0.0
    %1874 = vmatprep.subr.mxu0 0.0
    %1875 = vmatpush2.msra.mxu0 0.0
    %1876 = vmatprep.mubr.f32.mxu0 0.0
    %1877 = vmatmul.mubr.f32.gmra.mxu0 %v1810
    %v1878 = vpop.f32.mrf.mxu0
    %v1879 = vadd.f32 0.0, %v1878
    %v1880 = vpop.f32.mrf.mxu0
    %1881 = vdwg.mxu0
    %v1883 = vrot.slane %v1879, 6
    %v1885 = vadd.f32 %v181, %v1883
    %v1886 = vxor.u32 %v1885, 2147483648
    %v1887 = vmul.f32 %v1886, 1.442695
    %v1888 = vpow.pop %v1887
    %v1889 = vadd.f32 %v1888, 1.0
    %v1890 = vrcp.pop %v1889
    %v1891 = vmul.f32 1.0, %v1890
    %v1892 = vtanh.pop %v1885
    %v1893 = vsel %vm222, %v1892, %v1891
    %v1895 = vrot.slane %v1590, 6
    %v1897 = vmul.f32 %v1893, %v1895
    %1899 = vrot.lane.b32.xlu0 %v1893, 64
    %v1900 = vpop.permute.xlu0 %1899
    %v1902 = vmul.f32 %v1893, %v1900
    %1904 = vrot.lane.b32.xlu0 %v1902, 32
    %v1905 = vpop.permute.xlu0 %1904
    %v1907 = vadd.f32 %v1897, %v1905
    %v1908 = vtanh.pop %v1907
    %1910 = vrot.lane.b32.xlu0 %v1908, 64
    %v1911 = vpop.permute.xlu0 %1910
    %v1913 = vmul.f32 %v1893, %v1911
    %1915 = vrot.lane.b32.xlu0 %v1913, 32
    %v1916 = vpop.permute.xlu0 %1915
    %v1918 = vrot.slane %v1702, 6
    %1919 = vrot.lane.b32.xlu0 %v1918, 64
    %v1920 = vpop.permute.xlu0 %1919
    %v1922 = vsel %vm223, %v1916, %v1920
    %v1924 = vrot.slane %v1922, 2
    %v1925 = vsel %vm328, %v1924, 0
    %1927 = vmatprep.subr.mxu0 0.0
    %1928 = vmatpush1.msra.mxu0 0.0
    %1929 = vmatprep.subr.mxu0 0.0
    %1930 = vmatpush1.msra.mxu0 0.0
    %1931 = vmatprep.subr.mxu0 0.0
    %1932 = vmatpush1.msra.mxu0 0.0
    %1933 = vmatprep.subr.mxu0 0.0
    %1934 = vmatpush1.msra.mxu0 0.0
    %1935 = vmatprep.subr.mxu0 0.0
    %1936 = vmatpush1.msra.mxu0 0.0
    %1937 = vmatprep.subr.mxu0 0.0
    %1938 = vmatpush1.msra.mxu0 0.0
    %1939 = vmatprep.subr.mxu0 0.0
    %1940 = vmatpush1.msra.mxu0 0.0
    %1941 = vmatprep.subr.mxu0 0.0
    %1942 = vmatpush1.msra.mxu0 0.0
    %1943 = vmatprep.subr.mxu0 0.0
    %1944 = vmatpush1.msra.mxu0 %v195
    %1945 = vmatprep.subr.mxu0 0.0
    %1946 = vmatpush1.msra.mxu0 %v194
    %1947 = vmatprep.subr.mxu0 0.0
    %1948 = vmatpush1.msra.mxu0 %v193
    %1949 = vmatprep.subr.mxu0 0.0
    %1950 = vmatpush1.msra.mxu0 %v192
    %1951 = vmatprep.subr.mxu0 0.0
    %1952 = vmatpush1.msra.mxu0 %v191
    %1953 = vmatprep.subr.mxu0 0.0
    %1954 = vmatpush1.msra.mxu0 %v190
    %1955 = vmatprep.subr.mxu0 0.0
    %1956 = vmatpush1.msra.mxu0 %v189
    %1957 = vmatprep.subr.mxu0 0.0
    %1958 = vmatpush1.msra.mxu0 %v188
    %1959 = vmatprep.subr.mxu0 0.0
    %1960 = vmatpush2.msra.mxu0 0.0
    %1961 = vmatprep.subr.mxu0 0.0
    %1962 = vmatpush2.msra.mxu0 0.0
    %1963 = vmatprep.subr.mxu0 0.0
    %1964 = vmatpush2.msra.mxu0 0.0
    %1965 = vmatprep.subr.mxu0 0.0
    %1966 = vmatpush2.msra.mxu0 0.0
    %1967 = vmatprep.subr.mxu0 0.0
    %1968 = vmatpush2.msra.mxu0 0.0
    %1969 = vmatprep.subr.mxu0 0.0
    %1970 = vmatpush2.msra.mxu0 0.0
    %1971 = vmatprep.subr.mxu0 0.0
    %1972 = vmatpush2.msra.mxu0 0.0
    %1973 = vmatprep.subr.mxu0 0.0
    %1974 = vmatpush2.msra.mxu0 0.0
    %1975 = vmatprep.subr.mxu0 0.0
    %1976 = vmatpush2.msra.mxu0 0.0
    %1977 = vmatprep.subr.mxu0 0.0
    %1978 = vmatpush2.msra.mxu0 0.0
    %1979 = vmatprep.subr.mxu0 0.0
    %1980 = vmatpush2.msra.mxu0 0.0
    %1981 = vmatprep.subr.mxu0 0.0
    %1982 = vmatpush2.msra.mxu0 0.0
    %1983 = vmatprep.subr.mxu0 0.0
    %1984 = vmatpush2.msra.mxu0 0.0
    %1985 = vmatprep.subr.mxu0 0.0
    %1986 = vmatpush2.msra.mxu0 0.0
    %1987 = vmatprep.subr.mxu0 0.0
    %1988 = vmatpush2.msra.mxu0 0.0
    %1989 = vmatprep.subr.mxu0 0.0
    %1990 = vmatpush2.msra.mxu0 0.0
    %1991 = vmatprep.mubr.f32.mxu0 0.0
    %1992 = vmatmul.mubr.f32.gmra.mxu0 %v1925
    %v1993 = vpop.f32.mrf.mxu0
    %v1994 = vadd.f32 %v209, %v1993
    %v1995 = vpop.f32.mrf.mxu0
    %1996 = vdwg.mxu0
    %v1997 = vxor.u32 %v1994, 2147483648
    %v1998 = vmul.f32 %v1997, 1.442695
    %v1999 = vpow.pop %v1998
    %v2000 = vadd.f32 %v1999, 1.0
    %v2001 = vrcp.pop %v2000
    %v2002 = vmul.f32 1.0, %v2001
    %v2003 = vtanh.pop %v1994
    %v2004 = vsel %vm222, %v2003, %v2002
    %v2005 = vmul.f32 %v2004, %v1696
    %2007 = vrot.lane.b32.xlu0 %v2004, 64
    %v2008 = vpop.permute.xlu0 %2007
    %v2010 = vmul.f32 %v2004, %v2008
    %2012 = vrot.lane.b32.xlu0 %v2010, 32
    %v2013 = vpop.permute.xlu0 %2012
    %v2015 = vadd.f32 %v2005, %v2013
    %v2016 = vtanh.pop %v2015
    %2018 = vrot.lane.b32.xlu0 %v2016, 64
    %v2019 = vpop.permute.xlu0 %2018
    %v2021 = vmul.f32 %v2004, %v2019
    %2023 = vrot.lane.b32.xlu0 %v2021, 32
    %v2024 = vpop.permute.xlu0 %2023
    %2027 = vrot.lane.b32.xlu0 %v1809, 64
    %v2028 = vpop.permute.xlu0 %2027
    %v2030 = vsel %vm223, %v2024, %v2028
    %v2032 = vsel %vm328, %v2030, 0
    %2034 = vmatprep.subr.mxu0 0.0
    %2035 = vmatpush1.msra.mxu0 0.0
    %2036 = vmatprep.subr.mxu0 0.0
    %2037 = vmatpush1.msra.mxu0 0.0
    %2038 = vmatprep.subr.mxu0 0.0
    %2039 = vmatpush1.msra.mxu0 0.0
    %2040 = vmatprep.subr.mxu0 0.0
    %2041 = vmatpush1.msra.mxu0 0.0
    %2042 = vmatprep.subr.mxu0 0.0
    %2043 = vmatpush1.msra.mxu0 0.0
    %2044 = vmatprep.subr.mxu0 0.0
    %2045 = vmatpush1.msra.mxu0 0.0
    %2046 = vmatprep.subr.mxu0 0.0
    %2047 = vmatpush1.msra.mxu0 0.0
    %2048 = vmatprep.subr.mxu0 0.0
    %2049 = vmatpush1.msra.mxu0 0.0
    %2050 = vmatprep.subr.mxu0 0.0
    %2051 = vmatpush1.msra.mxu0 %v203
    %2052 = vmatprep.subr.mxu0 0.0
    %2053 = vmatpush1.msra.mxu0 %v202
    %2054 = vmatprep.subr.mxu0 0.0
    %2055 = vmatpush1.msra.mxu0 %v201
    %2056 = vmatprep.subr.mxu0 0.0
    %2057 = vmatpush1.msra.mxu0 %v200
    %2058 = vmatprep.subr.mxu0 0.0
    %2059 = vmatpush1.msra.mxu0 %v199
    %2060 = vmatprep.subr.mxu0 0.0
    %2061 = vmatpush1.msra.mxu0 %v198
    %2062 = vmatprep.subr.mxu0 0.0
    %2063 = vmatpush1.msra.mxu0 %v197
    %2064 = vmatprep.subr.mxu0 0.0
    %2065 = vmatpush1.msra.mxu0 %v196
    %2066 = vmatprep.subr.mxu0 0.0
    %2067 = vmatpush2.msra.mxu0 0.0
    %2068 = vmatprep.subr.mxu0 0.0
    %2069 = vmatpush2.msra.mxu0 0.0
    %2070 = vmatprep.subr.mxu0 0.0
    %2071 = vmatpush2.msra.mxu0 0.0
    %2072 = vmatprep.subr.mxu0 0.0
    %2073 = vmatpush2.msra.mxu0 0.0
    %2074 = vmatprep.subr.mxu0 0.0
    %2075 = vmatpush2.msra.mxu0 0.0
    %2076 = vmatprep.subr.mxu0 0.0
    %2077 = vmatpush2.msra.mxu0 0.0
    %2078 = vmatprep.subr.mxu0 0.0
    %2079 = vmatpush2.msra.mxu0 0.0
    %2080 = vmatprep.subr.mxu0 0.0
    %2081 = vmatpush2.msra.mxu0 0.0
    %2082 = vmatprep.subr.mxu0 0.0
    %2083 = vmatpush2.msra.mxu0 0.0
    %2084 = vmatprep.subr.mxu0 0.0
    %2085 = vmatpush2.msra.mxu0 0.0
    %2086 = vmatprep.subr.mxu0 0.0
    %2087 = vmatpush2.msra.mxu0 0.0
    %2088 = vmatprep.subr.mxu0 0.0
    %2089 = vmatpush2.msra.mxu0 0.0
    %2090 = vmatprep.subr.mxu0 0.0
    %2091 = vmatpush2.msra.mxu0 0.0
    %2092 = vmatprep.subr.mxu0 0.0
    %2093 = vmatpush2.msra.mxu0 0.0
    %2094 = vmatprep.subr.mxu0 0.0
    %2095 = vmatpush2.msra.mxu0 0.0
    %2096 = vmatprep.subr.mxu0 0.0
    %2097 = vmatpush2.msra.mxu0 0.0
    %2098 = vmatprep.mubr.f32.mxu0 0.0
    %2099 = vmatmul.mubr.f32.gmra.mxu0 %v2032
    %v2100 = vpop.f32.mrf.mxu0
    %v2101 = vadd.f32 %v216, %v2100
    %v2102 = vpop.f32.mrf.mxu0
    %2103 = vdwg.mxu0
    %v2104 = vxor.u32 %v2101, 2147483648
    %v2105 = vmul.f32 %v2104, 1.442695
    %v2106 = vpow.pop %v2105
    %v2107 = vadd.f32 %v2106, 1.0
    %v2108 = vrcp.pop %v2107
    %v2109 = vmul.f32 1.0, %v2108
    %v2110 = vtanh.pop %v2101
    %v2111 = vsel %vm222, %v2110, %v2109
    %v2112 = vmul.f32 %v2111, %v1803
    %2114 = vrot.lane.b32.xlu0 %v2111, 64
    %v2115 = vpop.permute.xlu0 %2114
    %v2117 = vmul.f32 %v2111, %v2115
    %2119 = vrot.lane.b32.xlu0 %v2117, 32
    %v2120 = vpop.permute.xlu0 %2119
    %v2122 = vadd.f32 %v2112, %v2120
    %v2123 = vtanh.pop %v2122
    %2125 = vrot.lane.b32.xlu0 %v2123, 64
    %v2126 = vpop.permute.xlu0 %2125
    %v2128 = vmul.f32 %v2111, %v2126
    %v2129 = vrot.slane %v1913, 2
    %2130 = vrot.lane.b32.xlu0 %v2129, 32
    %v2131 = vpop.permute.xlu0 %2130
    %v2132 = vsel %vm223, %v2131, 0
    %2134 = vmatprep.subr.mxu0 0.0
    %2135 = vmatpush1.msra.mxu0 0.0
    %2136 = vmatprep.subr.mxu0 0.0
    %2137 = vmatpush1.msra.mxu0 0.0
    %2138 = vmatprep.subr.mxu0 0.0
    %2139 = vmatpush1.msra.mxu0 0.0
    %2140 = vmatprep.subr.mxu0 0.0
    %2141 = vmatpush1.msra.mxu0 0.0
    %2142 = vmatprep.subr.mxu0 0.0
    %2143 = vmatpush1.msra.mxu0 0.0
    %2144 = vmatprep.subr.mxu0 0.0
    %2145 = vmatpush1.msra.mxu0 0.0
    %2146 = vmatprep.subr.mxu0 0.0
    %2147 = vmatpush1.msra.mxu0 0.0
    %2148 = vmatprep.subr.mxu0 0.0
    %2149 = vmatpush1.msra.mxu0 0.0
    %2150 = vmatprep.subr.mxu0 0.0
    %2151 = vmatpush1.msra.mxu0 0.0
    %2152 = vmatprep.subr.mxu0 0.0
    %2153 = vmatpush1.msra.mxu0 0.0
    %2154 = vmatprep.subr.mxu0 0.0
    %2155 = vmatpush1.msra.mxu0 0.0
    %2156 = vmatprep.subr.mxu0 0.0
    %2157 = vmatpush1.msra.mxu0 0.0
    %2158 = vmatprep.subr.mxu0 0.0
    %2159 = vmatpush1.msra.mxu0 %v187
    %2160 = vmatprep.subr.mxu0 0.0
    %2161 = vmatpush1.msra.mxu0 %v186
    %2162 = vmatprep.subr.mxu0 0.0
    %2163 = vmatpush1.msra.mxu0 %v185
    %2164 = vmatprep.subr.mxu0 0.0
    %2165 = vmatpush1.msra.mxu0 %v184
    %2166 = vmatprep.subr.mxu0 0.0
    %2167 = vmatpush2.msra.mxu0 0.0
    %2168 = vmatprep.subr.mxu0 0.0
    %2169 = vmatpush2.msra.mxu0 0.0
    %2170 = vmatprep.subr.mxu0 0.0
    %2171 = vmatpush2.msra.mxu0 0.0
    %2172 = vmatprep.subr.mxu0 0.0
    %2173 = vmatpush2.msra.mxu0 0.0
    %2174 = vmatprep.subr.mxu0 0.0
    %2175 = vmatpush2.msra.mxu0 0.0
    %2176 = vmatprep.subr.mxu0 0.0
    %2177 = vmatpush2.msra.mxu0 0.0
    %2178 = vmatprep.subr.mxu0 0.0
    %2179 = vmatpush2.msra.mxu0 0.0
    %2180 = vmatprep.subr.mxu0 0.0
    %2181 = vmatpush2.msra.mxu0 0.0
    %2182 = vmatprep.subr.mxu0 0.0
    %2183 = vmatpush2.msra.mxu0 0.0
    %2184 = vmatprep.subr.mxu0 0.0
    %2185 = vmatpush2.msra.mxu0 0.0
    %2186 = vmatprep.subr.mxu0 0.0
    %2187 = vmatpush2.msra.mxu0 0.0
    %2188 = vmatprep.subr.mxu0 0.0
    %2189 = vmatpush2.msra.mxu0 0.0
    %2190 = vmatprep.subr.mxu0 0.0
    %2191 = vmatpush2.msra.mxu0 0.0
    %2192 = vmatprep.subr.mxu0 0.0
    %2193 = vmatpush2.msra.mxu0 0.0
    %2194 = vmatprep.subr.mxu0 0.0
    %2195 = vmatpush2.msra.mxu0 0.0
    %2196 = vmatprep.subr.mxu0 0.0
    %2197 = vmatpush2.msra.mxu0 0.0
    %2198 = vmatprep.mubr.f32.mxu0 0.0
    %2199 = vmatmul.mubr.f32.gmra.mxu0 %v2132
    %v2200 = vpop.f32.mrf.mxu0
    %v2201 = vadd.f32 0.0, %v2200
    %v2202 = vpop.f32.mrf.mxu0
    %2203 = vdwg.mxu0
    %v2205 = vrot.slane %v2201, 4
    %v2207 = vadd.f32 %v181, %v2205
    %v2208 = vxor.u32 %v2207, 2147483648
    %v2209 = vmul.f32 %v2208, 1.442695
    %v2210 = vpow.pop %v2209
    %v2211 = vadd.f32 %v2210, 1.0
    %v2212 = vrcp.pop %v2211
    %v2213 = vmul.f32 1.0, %v2212
    %v2214 = vtanh.pop %v2207
    %v2215 = vsel %vm222, %v2214, %v2213
    %v2217 = vrot.slane %v1907, 6
    %v2219 = vmul.f32 %v2215, %v2217
    %2221 = vrot.lane.b32.xlu0 %v2215, 64
    %v2222 = vpop.permute.xlu0 %2221
    %v2224 = vmul.f32 %v2215, %v2222
    %2226 = vrot.lane.b32.xlu0 %v2224, 32
    %v2227 = vpop.permute.xlu0 %2226
    %v2229 = vadd.f32 %v2219, %v2227
    %v2230 = vtanh.pop %v2229
    %2232 = vrot.lane.b32.xlu0 %v2230, 64
    %v2233 = vpop.permute.xlu0 %2232
    %v2235 = vmul.f32 %v2215, %v2233
    %2237 = vrot.lane.b32.xlu0 %v2235, 32
    %v2238 = vpop.permute.xlu0 %2237
    %v2240 = vrot.slane %v2021, 4
    %2241 = vrot.lane.b32.xlu0 %v2240, 64
    %v2242 = vpop.permute.xlu0 %2241
    %v2244 = vsel %vm223, %v2238, %v2242
    %v2246 = vrot.slane %v2244, 4
    %v2247 = vsel %vm328, %v2246, 0
    %2249 = vmatprep.subr.mxu0 0.0
    %2250 = vmatpush1.msra.mxu0 0.0
    %2251 = vmatprep.subr.mxu0 0.0
    %2252 = vmatpush1.msra.mxu0 0.0
    %2253 = vmatprep.subr.mxu0 0.0
    %2254 = vmatpush1.msra.mxu0 0.0
    %2255 = vmatprep.subr.mxu0 0.0
    %2256 = vmatpush1.msra.mxu0 0.0
    %2257 = vmatprep.subr.mxu0 0.0
    %2258 = vmatpush1.msra.mxu0 0.0
    %2259 = vmatprep.subr.mxu0 0.0
    %2260 = vmatpush1.msra.mxu0 0.0
    %2261 = vmatprep.subr.mxu0 0.0
    %2262 = vmatpush1.msra.mxu0 0.0
    %2263 = vmatprep.subr.mxu0 0.0
    %2264 = vmatpush1.msra.mxu0 0.0
    %2265 = vmatprep.subr.mxu0 0.0
    %2266 = vmatpush1.msra.mxu0 %v195
    %2267 = vmatprep.subr.mxu0 0.0
    %2268 = vmatpush1.msra.mxu0 %v194
    %2269 = vmatprep.subr.mxu0 0.0
    %2270 = vmatpush1.msra.mxu0 %v193
    %2271 = vmatprep.subr.mxu0 0.0
    %2272 = vmatpush1.msra.mxu0 %v192
    %2273 = vmatprep.subr.mxu0 0.0
    %2274 = vmatpush1.msra.mxu0 %v191
    %2275 = vmatprep.subr.mxu0 0.0
    %2276 = vmatpush1.msra.mxu0 %v190
    %2277 = vmatprep.subr.mxu0 0.0
    %2278 = vmatpush1.msra.mxu0 %v189
    %2279 = vmatprep.subr.mxu0 0.0
    %2280 = vmatpush1.msra.mxu0 %v188
    %2281 = vmatprep.subr.mxu0 0.0
    %2282 = vmatpush2.msra.mxu0 0.0
    %2283 = vmatprep.subr.mxu0 0.0
    %2284 = vmatpush2.msra.mxu0 0.0
    %2285 = vmatprep.subr.mxu0 0.0
    %2286 = vmatpush2.msra.mxu0 0.0
    %2287 = vmatprep.subr.mxu0 0.0
    %2288 = vmatpush2.msra.mxu0 0.0
    %2289 = vmatprep.subr.mxu0 0.0
    %2290 = vmatpush2.msra.mxu0 0.0
    %2291 = vmatprep.subr.mxu0 0.0
    %2292 = vmatpush2.msra.mxu0 0.0
    %2293 = vmatprep.subr.mxu0 0.0
    %2294 = vmatpush2.msra.mxu0 0.0
    %2295 = vmatprep.subr.mxu0 0.0
    %2296 = vmatpush2.msra.mxu0 0.0
    %2297 = vmatprep.subr.mxu0 0.0
    %2298 = vmatpush2.msra.mxu0 0.0
    %2299 = vmatprep.subr.mxu0 0.0
    %2300 = vmatpush2.msra.mxu0 0.0
    %2301 = vmatprep.subr.mxu0 0.0
    %2302 = vmatpush2.msra.mxu0 0.0
    %2303 = vmatprep.subr.mxu0 0.0
    %2304 = vmatpush2.msra.mxu0 0.0
    %2305 = vmatprep.subr.mxu0 0.0
    %2306 = vmatpush2.msra.mxu0 0.0
    %2307 = vmatprep.subr.mxu0 0.0
    %2308 = vmatpush2.msra.mxu0 0.0
    %2309 = vmatprep.subr.mxu0 0.0
    %2310 = vmatpush2.msra.mxu0 0.0
    %2311 = vmatprep.subr.mxu0 0.0
    %2312 = vmatpush2.msra.mxu0 0.0
    %2313 = vmatprep.mubr.f32.mxu0 0.0
    %2314 = vmatmul.mubr.f32.gmra.mxu0 %v2247
    %v2315 = vpop.f32.mrf.mxu0
    %v2316 = vadd.f32 %v209, %v2315
    %v2317 = vpop.f32.mrf.mxu0
    %2318 = vdwg.mxu0
    %v2319 = vxor.u32 %v2316, 2147483648
    %v2320 = vmul.f32 %v2319, 1.442695
    %v2321 = vpow.pop %v2320
    %v2322 = vadd.f32 %v2321, 1.0
    %v2323 = vrcp.pop %v2322
    %v2324 = vmul.f32 1.0, %v2323
    %v2325 = vtanh.pop %v2316
    %v2326 = vsel %vm222, %v2325, %v2324
    %v2327 = vmul.f32 %v2326, %v2015
    %2329 = vrot.lane.b32.xlu0 %v2326, 64
    %v2330 = vpop.permute.xlu0 %2329
    %v2332 = vmul.f32 %v2326, %v2330
    %2334 = vrot.lane.b32.xlu0 %v2332, 32
    %v2335 = vpop.permute.xlu0 %2334
    %v2337 = vadd.f32 %v2327, %v2335
    %v2338 = vtanh.pop %v2337
    %2340 = vrot.lane.b32.xlu0 %v2338, 64
    %v2341 = vpop.permute.xlu0 %2340
    %v2343 = vmul.f32 %v2326, %v2341
    %2345 = vrot.lane.b32.xlu0 %v2343, 32
    %v2346 = vpop.permute.xlu0 %2345
    %2349 = vrot.lane.b32.xlu0 %v2128, 64
    %v2350 = vpop.permute.xlu0 %2349
    %v2352 = vsel %vm223, %v2346, %v2350
    %v2354 = vsel %vm328, %v2352, 0
    %2356 = vmatprep.subr.mxu0 0.0
    %2357 = vmatpush1.msra.mxu0 0.0
    %2358 = vmatprep.subr.mxu0 0.0
    %2359 = vmatpush1.msra.mxu0 0.0
    %2360 = vmatprep.subr.mxu0 0.0
    %2361 = vmatpush1.msra.mxu0 0.0
    %2362 = vmatprep.subr.mxu0 0.0
    %2363 = vmatpush1.msra.mxu0 0.0
    %2364 = vmatprep.subr.mxu0 0.0
    %2365 = vmatpush1.msra.mxu0 0.0
    %2366 = vmatprep.subr.mxu0 0.0
    %2367 = vmatpush1.msra.mxu0 0.0
    %2368 = vmatprep.subr.mxu0 0.0
    %2369 = vmatpush1.msra.mxu0 0.0
    %2370 = vmatprep.subr.mxu0 0.0
    %2371 = vmatpush1.msra.mxu0 0.0
    %2372 = vmatprep.subr.mxu0 0.0
    %2373 = vmatpush1.msra.mxu0 %v203
    %2374 = vmatprep.subr.mxu0 0.0
    %2375 = vmatpush1.msra.mxu0 %v202
    %2376 = vmatprep.subr.mxu0 0.0
    %2377 = vmatpush1.msra.mxu0 %v201
    %2378 = vmatprep.subr.mxu0 0.0
    %2379 = vmatpush1.msra.mxu0 %v200
    %2380 = vmatprep.subr.mxu0 0.0
    %2381 = vmatpush1.msra.mxu0 %v199
    %2382 = vmatprep.subr.mxu0 0.0
    %2383 = vmatpush1.msra.mxu0 %v198
    %2384 = vmatprep.subr.mxu0 0.0
    %2385 = vmatpush1.msra.mxu0 %v197
    %2386 = vmatprep.subr.mxu0 0.0
    %2387 = vmatpush1.msra.mxu0 %v196
    %2388 = vmatprep.subr.mxu0 0.0
    %2389 = vmatpush2.msra.mxu0 0.0
    %2390 = vmatprep.subr.mxu0 0.0
    %2391 = vmatpush2.msra.mxu0 0.0
    %2392 = vmatprep.subr.mxu0 0.0
    %2393 = vmatpush2.msra.mxu0 0.0
    %2394 = vmatprep.subr.mxu0 0.0
    %2395 = vmatpush2.msra.mxu0 0.0
    %2396 = vmatprep.subr.mxu0 0.0
    %2397 = vmatpush2.msra.mxu0 0.0
    %2398 = vmatprep.subr.mxu0 0.0
    %2399 = vmatpush2.msra.mxu0 0.0
    %2400 = vmatprep.subr.mxu0 0.0
    %2401 = vmatpush2.msra.mxu0 0.0
    %2402 = vmatprep.subr.mxu0 0.0
    %2403 = vmatpush2.msra.mxu0 0.0
    %2404 = vmatprep.subr.mxu0 0.0
    %2405 = vmatpush2.msra.mxu0 0.0
    %2406 = vmatprep.subr.mxu0 0.0
    %2407 = vmatpush2.msra.mxu0 0.0
    %2408 = vmatprep.subr.mxu0 0.0
    %2409 = vmatpush2.msra.mxu0 0.0
    %2410 = vmatprep.subr.mxu0 0.0
    %2411 = vmatpush2.msra.mxu0 0.0
    %2412 = vmatprep.subr.mxu0 0.0
    %2413 = vmatpush2.msra.mxu0 0.0
    %2414 = vmatprep.subr.mxu0 0.0
    %2415 = vmatpush2.msra.mxu0 0.0
    %2416 = vmatprep.subr.mxu0 0.0
    %2417 = vmatpush2.msra.mxu0 0.0
    %2418 = vmatprep.subr.mxu0 0.0
    %2419 = vmatpush2.msra.mxu0 0.0
    %2420 = vmatprep.mubr.f32.mxu0 0.0
    %2421 = vmatmul.mubr.f32.gmra.mxu0 %v2354
    %v2422 = vpop.f32.mrf.mxu0
    %v2423 = vadd.f32 %v216, %v2422
    %v2424 = vpop.f32.mrf.mxu0
    %2425 = vdwg.mxu0
    %v2426 = vxor.u32 %v2423, 2147483648
    %v2427 = vmul.f32 %v2426, 1.442695
    %v2428 = vpow.pop %v2427
    %v2429 = vadd.f32 %v2428, 1.0
    %v2430 = vrcp.pop %v2429
    %v2431 = vmul.f32 1.0, %v2430
    %v2432 = vtanh.pop %v2423
    %v2433 = vsel %vm222, %v2432, %v2431
    %v2434 = vmul.f32 %v2433, %v2122
    %2436 = vrot.lane.b32.xlu0 %v2433, 64
    %v2437 = vpop.permute.xlu0 %2436
    %v2439 = vmul.f32 %v2433, %v2437
    %2441 = vrot.lane.b32.xlu0 %v2439, 32
    %v2442 = vpop.permute.xlu0 %2441
    %v2444 = vadd.f32 %v2434, %v2442
    %v2445 = vtanh.pop %v2444
    %2447 = vrot.lane.b32.xlu0 %v2445, 64
    %v2448 = vpop.permute.xlu0 %2447
    %v2450 = vmul.f32 %v2433, %v2448
    %v2451 = vrot.slane %v2235, 4
    %2452 = vrot.lane.b32.xlu0 %v2451, 32
    %v2453 = vpop.permute.xlu0 %2452
    %v2454 = vsel %vm223, %v2453, 0
    %2456 = vmatprep.subr.mxu0 0.0
    %2457 = vmatpush1.msra.mxu0 0.0
    %2458 = vmatprep.subr.mxu0 0.0
    %2459 = vmatpush1.msra.mxu0 0.0
    %2460 = vmatprep.subr.mxu0 0.0
    %2461 = vmatpush1.msra.mxu0 0.0
    %2462 = vmatprep.subr.mxu0 0.0
    %2463 = vmatpush1.msra.mxu0 0.0
    %2464 = vmatprep.subr.mxu0 0.0
    %2465 = vmatpush1.msra.mxu0 0.0
    %2466 = vmatprep.subr.mxu0 0.0
    %2467 = vmatpush1.msra.mxu0 0.0
    %2468 = vmatprep.subr.mxu0 0.0
    %2469 = vmatpush1.msra.mxu0 0.0
    %2470 = vmatprep.subr.mxu0 0.0
    %2471 = vmatpush1.msra.mxu0 0.0
    %2472 = vmatprep.subr.mxu0 0.0
    %2473 = vmatpush1.msra.mxu0 0.0
    %2474 = vmatprep.subr.mxu0 0.0
    %2475 = vmatpush1.msra.mxu0 0.0
    %2476 = vmatprep.subr.mxu0 0.0
    %2477 = vmatpush1.msra.mxu0 0.0
    %2478 = vmatprep.subr.mxu0 0.0
    %2479 = vmatpush1.msra.mxu0 0.0
    %2480 = vmatprep.subr.mxu0 0.0
    %2481 = vmatpush1.msra.mxu0 %v187
    %2482 = vmatprep.subr.mxu0 0.0
    %2483 = vmatpush1.msra.mxu0 %v186
    %2484 = vmatprep.subr.mxu0 0.0
    %2485 = vmatpush1.msra.mxu0 %v185
    %2486 = vmatprep.subr.mxu0 0.0
    %2487 = vmatpush1.msra.mxu0 %v184
    %2488 = vmatprep.subr.mxu0 0.0
    %2489 = vmatpush2.msra.mxu0 0.0
    %2490 = vmatprep.subr.mxu0 0.0
    %2491 = vmatpush2.msra.mxu0 0.0
    %2492 = vmatprep.subr.mxu0 0.0
    %2493 = vmatpush2.msra.mxu0 0.0
    %2494 = vmatprep.subr.mxu0 0.0
    %2495 = vmatpush2.msra.mxu0 0.0
    %2496 = vmatprep.subr.mxu0 0.0
    %2497 = vmatpush2.msra.mxu0 0.0
    %2498 = vmatprep.subr.mxu0 0.0
    %2499 = vmatpush2.msra.mxu0 0.0
    %2500 = vmatprep.subr.mxu0 0.0
    %2501 = vmatpush2.msra.mxu0 0.0
    %2502 = vmatprep.subr.mxu0 0.0
    %2503 = vmatpush2.msra.mxu0 0.0
    %2504 = vmatprep.subr.mxu0 0.0
    %2505 = vmatpush2.msra.mxu0 0.0
    %2506 = vmatprep.subr.mxu0 0.0
    %2507 = vmatpush2.msra.mxu0 0.0
    %2508 = vmatprep.subr.mxu0 0.0
    %2509 = vmatpush2.msra.mxu0 0.0
    %2510 = vmatprep.subr.mxu0 0.0
    %2511 = vmatpush2.msra.mxu0 0.0
    %2512 = vmatprep.subr.mxu0 0.0
    %2513 = vmatpush2.msra.mxu0 0.0
    %2514 = vmatprep.subr.mxu0 0.0
    %2515 = vmatpush2.msra.mxu0 0.0
    %2516 = vmatprep.subr.mxu0 0.0
    %2517 = vmatpush2.msra.mxu0 0.0
    %2518 = vmatprep.subr.mxu0 0.0
    %2519 = vmatpush2.msra.mxu0 0.0
    %2520 = vmatprep.mubr.f32.mxu0 0.0
    %2521 = vmatmul.mubr.f32.gmra.mxu0 %v2454
    %v2522 = vpop.f32.mrf.mxu0
    %v2523 = vadd.f32 0.0, %v2522
    %v2524 = vpop.f32.mrf.mxu0
    %2525 = vdwg.mxu0
    %v2527 = vrot.slane %v2523, 2
    %v2529 = vadd.f32 %v181, %v2527
    %v2530 = vxor.u32 %v2529, 2147483648
    %v2531 = vmul.f32 %v2530, 1.442695
    %v2532 = vpow.pop %v2531
    %v2533 = vadd.f32 %v2532, 1.0
    %v2534 = vrcp.pop %v2533
    %v2535 = vmul.f32 1.0, %v2534
    %v2536 = vtanh.pop %v2529
    %v2537 = vsel %vm222, %v2536, %v2535
    %v2539 = vrot.slane %v2229, 6
    %v2541 = vmul.f32 %v2537, %v2539
    %2543 = vrot.lane.b32.xlu0 %v2537, 64
    %v2544 = vpop.permute.xlu0 %2543
    %v2546 = vmul.f32 %v2537, %v2544
    %2548 = vrot.lane.b32.xlu0 %v2546, 32
    %v2549 = vpop.permute.xlu0 %2548
    %v2551 = vadd.f32 %v2541, %v2549
    %v2552 = vtanh.pop %v2551
    %2554 = vrot.lane.b32.xlu0 %v2552, 64
    %v2555 = vpop.permute.xlu0 %2554
    %v2557 = vmul.f32 %v2537, %v2555
    %2559 = vrot.lane.b32.xlu0 %v2557, 32
    %v2560 = vpop.permute.xlu0 %2559
    %v2562 = vrot.slane %v2343, 2
    %2563 = vrot.lane.b32.xlu0 %v2562, 64
    %v2564 = vpop.permute.xlu0 %2563
    %v2566 = vsel %vm223, %v2560, %v2564
    %v2568 = vrot.slane %v2566, 6
    %v2569 = vsel %vm328, %v2568, 0
    %2571 = vmatprep.subr.mxu0 0.0
    %2572 = vmatpush1.msra.mxu0 0.0
    %2573 = vmatprep.subr.mxu0 0.0
    %2574 = vmatpush1.msra.mxu0 0.0
    %2575 = vmatprep.subr.mxu0 0.0
    %2576 = vmatpush1.msra.mxu0 0.0
    %2577 = vmatprep.subr.mxu0 0.0
    %2578 = vmatpush1.msra.mxu0 0.0
    %2579 = vmatprep.subr.mxu0 0.0
    %2580 = vmatpush1.msra.mxu0 0.0
    %2581 = vmatprep.subr.mxu0 0.0
    %2582 = vmatpush1.msra.mxu0 0.0
    %2583 = vmatprep.subr.mxu0 0.0
    %2584 = vmatpush1.msra.mxu0 0.0
    %2585 = vmatprep.subr.mxu0 0.0
    %2586 = vmatpush1.msra.mxu0 0.0
    %2587 = vmatprep.subr.mxu0 0.0
    %2588 = vmatpush1.msra.mxu0 %v195
    %2589 = vmatprep.subr.mxu0 0.0
    %2590 = vmatpush1.msra.mxu0 %v194
    %2591 = vmatprep.subr.mxu0 0.0
    %2592 = vmatpush1.msra.mxu0 %v193
    %2593 = vmatprep.subr.mxu0 0.0
    %2594 = vmatpush1.msra.mxu0 %v192
    %2595 = vmatprep.subr.mxu0 0.0
    %2596 = vmatpush1.msra.mxu0 %v191
    %2597 = vmatprep.subr.mxu0 0.0
    %2598 = vmatpush1.msra.mxu0 %v190
    %2599 = vmatprep.subr.mxu0 0.0
    %2600 = vmatpush1.msra.mxu0 %v189
    %2601 = vmatprep.subr.mxu0 0.0
    %2602 = vmatpush1.msra.mxu0 %v188
    %2603 = vmatprep.subr.mxu0 0.0
    %2604 = vmatpush2.msra.mxu0 0.0
    %2605 = vmatprep.subr.mxu0 0.0
    %2606 = vmatpush2.msra.mxu0 0.0
    %2607 = vmatprep.subr.mxu0 0.0
    %2608 = vmatpush2.msra.mxu0 0.0
    %2609 = vmatprep.subr.mxu0 0.0
    %2610 = vmatpush2.msra.mxu0 0.0
    %2611 = vmatprep.subr.mxu0 0.0
    %2612 = vmatpush2.msra.mxu0 0.0
    %2613 = vmatprep.subr.mxu0 0.0
    %2614 = vmatpush2.msra.mxu0 0.0
    %2615 = vmatprep.subr.mxu0 0.0
    %2616 = vmatpush2.msra.mxu0 0.0
    %2617 = vmatprep.subr.mxu0 0.0
    %2618 = vmatpush2.msra.mxu0 0.0
    %2619 = vmatprep.subr.mxu0 0.0
    %2620 = vmatpush2.msra.mxu0 0.0
    %2621 = vmatprep.subr.mxu0 0.0
    %2622 = vmatpush2.msra.mxu0 0.0
    %2623 = vmatprep.subr.mxu0 0.0
    %2624 = vmatpush2.msra.mxu0 0.0
    %2625 = vmatprep.subr.mxu0 0.0
    %2626 = vmatpush2.msra.mxu0 0.0
    %2627 = vmatprep.subr.mxu0 0.0
    %2628 = vmatpush2.msra.mxu0 0.0
    %2629 = vmatprep.subr.mxu0 0.0
    %2630 = vmatpush2.msra.mxu0 0.0
    %2631 = vmatprep.subr.mxu0 0.0
    %2632 = vmatpush2.msra.mxu0 0.0
    %2633 = vmatprep.subr.mxu0 0.0
    %2634 = vmatpush2.msra.mxu0 0.0
    %2635 = vmatprep.mubr.f32.mxu0 0.0
    %2636 = vmatmul.mubr.f32.gmra.mxu0 %v2569
    %v2637 = vpop.f32.mrf.mxu0
    %v2638 = vadd.f32 %v209, %v2637
    %v2639 = vpop.f32.mrf.mxu0
    %2640 = vdwg.mxu0
    %v2641 = vxor.u32 %v2638, 2147483648
    %v2642 = vmul.f32 %v2641, 1.442695
    %v2643 = vpow.pop %v2642
    %v2644 = vadd.f32 %v2643, 1.0
    %v2645 = vrcp.pop %v2644
    %v2646 = vmul.f32 1.0, %v2645
    %v2647 = vtanh.pop %v2638
    %v2648 = vsel %vm222, %v2647, %v2646
    %v2649 = vmul.f32 %v2648, %v2337
    %2651 = vrot.lane.b32.xlu0 %v2648, 64
    %v2652 = vpop.permute.xlu0 %2651
    %v2654 = vmul.f32 %v2648, %v2652
    %2656 = vrot.lane.b32.xlu0 %v2654, 32
    %v2657 = vpop.permute.xlu0 %2656
    %v2659 = vadd.f32 %v2649, %v2657
    %v2660 = vtanh.pop %v2659
    %2662 = vrot.lane.b32.xlu0 %v2660, 64
    %v2663 = vpop.permute.xlu0 %2662
    %v2665 = vmul.f32 %v2648, %v2663
    %2667 = vrot.lane.b32.xlu0 %v2665, 32
    %v2668 = vpop.permute.xlu0 %2667
    %2671 = vrot.lane.b32.xlu0 %v2450, 64
    %v2672 = vpop.permute.xlu0 %2671
    %v2674 = vsel %vm223, %v2668, %v2672
    %v2676 = vsel %vm328, %v2674, 0
    %2678 = vmatprep.subr.mxu0 0.0
    %2679 = vmatpush1.msra.mxu0 0.0
    %2680 = vmatprep.subr.mxu0 0.0
    %2681 = vmatpush1.msra.mxu0 0.0
    %2682 = vmatprep.subr.mxu0 0.0
    %2683 = vmatpush1.msra.mxu0 0.0
    %2684 = vmatprep.subr.mxu0 0.0
    %2685 = vmatpush1.msra.mxu0 0.0
    %2686 = vmatprep.subr.mxu0 0.0
    %2687 = vmatpush1.msra.mxu0 0.0
    %2688 = vmatprep.subr.mxu0 0.0
    %2689 = vmatpush1.msra.mxu0 0.0
    %2690 = vmatprep.subr.mxu0 0.0
    %2691 = vmatpush1.msra.mxu0 0.0
    %2692 = vmatprep.subr.mxu0 0.0
    %2693 = vmatpush1.msra.mxu0 0.0
    %2694 = vmatprep.subr.mxu0 0.0
    %2695 = vmatpush1.msra.mxu0 %v203
    %2696 = vmatprep.subr.mxu0 0.0
    %2697 = vmatpush1.msra.mxu0 %v202
    %2698 = vmatprep.subr.mxu0 0.0
    %2699 = vmatpush1.msra.mxu0 %v201
    %2700 = vmatprep.subr.mxu0 0.0
    %2701 = vmatpush1.msra.mxu0 %v200
    %2702 = vmatprep.subr.mxu0 0.0
    %2703 = vmatpush1.msra.mxu0 %v199
    %2704 = vmatprep.subr.mxu0 0.0
    %2705 = vmatpush1.msra.mxu0 %v198
    %2706 = vmatprep.subr.mxu0 0.0
    %2707 = vmatpush1.msra.mxu0 %v197
    %2708 = vmatprep.subr.mxu0 0.0
    %2709 = vmatpush1.msra.mxu0 %v196
    %2710 = vmatprep.subr.mxu0 0.0
    %2711 = vmatpush2.msra.mxu0 0.0
    %2712 = vmatprep.subr.mxu0 0.0
    %2713 = vmatpush2.msra.mxu0 0.0
    %2714 = vmatprep.subr.mxu0 0.0
    %2715 = vmatpush2.msra.mxu0 0.0
    %2716 = vmatprep.subr.mxu0 0.0
    %2717 = vmatpush2.msra.mxu0 0.0
    %2718 = vmatprep.subr.mxu0 0.0
    %2719 = vmatpush2.msra.mxu0 0.0
    %2720 = vmatprep.subr.mxu0 0.0
    %2721 = vmatpush2.msra.mxu0 0.0
    %2722 = vmatprep.subr.mxu0 0.0
    %2723 = vmatpush2.msra.mxu0 0.0
    %2724 = vmatprep.subr.mxu0 0.0
    %2725 = vmatpush2.msra.mxu0 0.0
    %2726 = vmatprep.subr.mxu0 0.0
    %2727 = vmatpush2.msra.mxu0 0.0
    %2728 = vmatprep.subr.mxu0 0.0
    %2729 = vmatpush2.msra.mxu0 0.0
    %2730 = vmatprep.subr.mxu0 0.0
    %2731 = vmatpush2.msra.mxu0 0.0
    %2732 = vmatprep.subr.mxu0 0.0
    %2733 = vmatpush2.msra.mxu0 0.0
    %2734 = vmatprep.subr.mxu0 0.0
    %2735 = vmatpush2.msra.mxu0 0.0
    %2736 = vmatprep.subr.mxu0 0.0
    %2737 = vmatpush2.msra.mxu0 0.0
    %2738 = vmatprep.subr.mxu0 0.0
    %2739 = vmatpush2.msra.mxu0 0.0
    %2740 = vmatprep.subr.mxu0 0.0
    %2741 = vmatpush2.msra.mxu0 0.0
    %2742 = vmatprep.mubr.f32.mxu0 0.0
    %2743 = vmatmul.mubr.f32.gmra.mxu0 %v2676
    %v2744 = vpop.f32.mrf.mxu0
    %v2745 = vadd.f32 %v216, %v2744
    %v2746 = vpop.f32.mrf.mxu0
    %2747 = vdwg.mxu0
    %v2748 = vxor.u32 %v2745, 2147483648
    %v2749 = vmul.f32 %v2748, 1.442695
    %v2750 = vpow.pop %v2749
    %v2751 = vadd.f32 %v2750, 1.0
    %v2752 = vrcp.pop %v2751
    %v2753 = vmul.f32 1.0, %v2752
    %v2754 = vtanh.pop %v2745
    %v2755 = vsel %vm222, %v2754, %v2753
    %v2756 = vmul.f32 %v2755, %v2444
    %2758 = vrot.lane.b32.xlu0 %v2755, 64
    %v2759 = vpop.permute.xlu0 %2758
    %v2761 = vmul.f32 %v2755, %v2759
    %2763 = vrot.lane.b32.xlu0 %v2761, 32
    %v2764 = vpop.permute.xlu0 %2763
    %v2766 = vadd.f32 %v2756, %v2764
    %v2767 = vtanh.pop %v2766
    %2769 = vrot.lane.b32.xlu0 %v2767, 64
    %v2770 = vpop.permute.xlu0 %2769
    %v2772 = vmul.f32 %v2755, %v2770
    %v2773 = vmax.f32 %v2772, 0.0
    %v2774 = vld [vmem:[%s8] sm:$0xff]
    %v2775 = vld [vmem:[%s8 + $0x8] sm:$0xff]
    %v2776 = vld [vmem:[%s8 + $0x10] sm:$0xff]
    %v2777 = vld [vmem:[%s8 + $0x18] sm:$0xff]
    %v2778 = vld [vmem:[#allocation2] sm:$0x1]
    %v2780 = vlaneseq
    %v2781 = vshrl.u32 %v2780, 7
    %v2782 = vsub.s32 0, %v2781
    %v2783 = vrot.slane %v2778, %v2782
    %2786 = vrot.lane.b32.xlu0 %v2773, 32
    %v2787 = vpop.permute.xlu0 %2786
    %v2788 = vsel %vm223, %v2787, 0
    %2790 = vmatprep.subr.mxu0 0.0
    %2791 = vmatpush1.msra.mxu0 0.0
    %2792 = vmatprep.subr.mxu0 0.0
    %2793 = vmatpush1.msra.mxu0 0.0
    %2794 = vmatprep.subr.mxu0 0.0
    %2795 = vmatpush1.msra.mxu0 0.0
    %2796 = vmatprep.subr.mxu0 0.0
    %2797 = vmatpush1.msra.mxu0 0.0
    %2798 = vmatprep.subr.mxu0 0.0
    %2799 = vmatpush1.msra.mxu0 0.0
    %2800 = vmatprep.subr.mxu0 0.0
    %2801 = vmatpush1.msra.mxu0 0.0
    %2802 = vmatprep.subr.mxu0 0.0
    %2803 = vmatpush1.msra.mxu0 0.0
    %2804 = vmatprep.subr.mxu0 0.0
    %2805 = vmatpush1.msra.mxu0 0.0
    %2806 = vmatprep.subr.mxu0 0.0
    %2807 = vmatpush1.msra.mxu0 0.0
    %2808 = vmatprep.subr.mxu0 0.0
    %2809 = vmatpush1.msra.mxu0 0.0
    %2810 = vmatprep.subr.mxu0 0.0
    %2811 = vmatpush1.msra.mxu0 0.0
    %2812 = vmatprep.subr.mxu0 0.0
    %2813 = vmatpush1.msra.mxu0 0.0
    %2814 = vmatprep.subr.mxu0 0.0
    %2815 = vmatpush1.msra.mxu0 %v2777
    %2816 = vmatprep.subr.mxu0 0.0
    %2817 = vmatpush1.msra.mxu0 %v2776
    %2818 = vmatprep.subr.mxu0 0.0
    %2819 = vmatpush1.msra.mxu0 %v2775
    %2820 = vmatprep.subr.mxu0 0.0
    %2821 = vmatpush1.msra.mxu0 %v2774
    %2822 = vmatprep.subr.mxu0 0.0
    %2823 = vmatpush2.msra.mxu0 0.0
    %2824 = vmatprep.subr.mxu0 0.0
    %2825 = vmatpush2.msra.mxu0 0.0
    %2826 = vmatprep.subr.mxu0 0.0
    %2827 = vmatpush2.msra.mxu0 0.0
    %2828 = vmatprep.subr.mxu0 0.0
    %2829 = vmatpush2.msra.mxu0 0.0
    %2830 = vmatprep.subr.mxu0 0.0
    %2831 = vmatpush2.msra.mxu0 0.0
    %2832 = vmatprep.subr.mxu0 0.0
    %2833 = vmatpush2.msra.mxu0 0.0
    %2834 = vmatprep.subr.mxu0 0.0
    %2835 = vmatpush2.msra.mxu0 0.0
    %2836 = vmatprep.subr.mxu0 0.0
    %2837 = vmatpush2.msra.mxu0 0.0
    %2838 = vmatprep.subr.mxu0 0.0
    %2839 = vmatpush2.msra.mxu0 0.0
    %2840 = vmatprep.subr.mxu0 0.0
    %2841 = vmatpush2.msra.mxu0 0.0
    %2842 = vmatprep.subr.mxu0 0.0
    %2843 = vmatpush2.msra.mxu0 0.0
    %2844 = vmatprep.subr.mxu0 0.0
    %2845 = vmatpush2.msra.mxu0 0.0
    %2846 = vmatprep.subr.mxu0 0.0
    %2847 = vmatpush2.msra.mxu0 0.0
    %2848 = vmatprep.subr.mxu0 0.0
    %2849 = vmatpush2.msra.mxu0 0.0
    %2850 = vmatprep.subr.mxu0 0.0
    %2851 = vmatpush2.msra.mxu0 0.0
    %2852 = vmatprep.subr.mxu0 0.0
    %2853 = vmatpush2.msra.mxu0 0.0
    %2854 = vmatprep.mubr.f32.mxu0 0.0
    %2855 = vmatmul.mubr.f32.gmra.mxu0 %v2788
    %v2856 = vpop.f32.mrf.mxu0
    %v2857 = vadd.f32 %v2783, %v2856
    %v2858 = vpop.f32.mrf.mxu0
    %2859 = vdwg.mxu0
    %vm2860 = vcmask 1024
    %2861 = vst.msk [vmem:[%s10] sm:$0x3] %vm2860, %v2857
    // Predicated region
    $region58: #{tpu_custom_call.1} parent=1 // pred_check
      _
    $region59: #{tpu_custom_call.1} parent=1 // pred_check_branch
      %2863 = sbr.rel (0) target = $region61
    $region60: #{tpu_custom_call.1} parent=1 // pred_region
      _
    $region61: #{tpu_custom_call.1} parent=1 // pred_fallthru
      _
    // Predicated region
    $region62: #{tpu_custom_call.1} parent=1 // pred_check
      _
    $region63: #{tpu_custom_call.1} parent=1 // pred_check_branch
      %2865 = sbr.rel (0) target = $region65
    $region64: #{tpu_custom_call.1} parent=1 // pred_region
      _
    $region65: #{tpu_custom_call.1} parent=1 // pred_fallthru
      _
    %2866 = vsyncpa [#allocation4], 1
    %2867 = vsyncpa [#allocation6], 1
    %2868 = vsyncpa [#allocation9], 1

</llo_original>
